<compile_context>
chip_gen: v7x
topology: tpu7x:2x2x1
jax: 0.10.0
libtpu: 0.0.40
codegen_flags: <defaults>
</compile_context>

<pallas_src>
import functools
import math

import numpy as np
import jax
import jax.numpy as jnp
from jax.experimental import pallas as pl
from jax.experimental.pallas import tpu as pltpu

NEG_SLOPE = 0.01          # PyTorch LeakyReLU default negative_slope
LANE = 128
SUB = 8


def _lrelu(x):
    return jnp.where(x >= 0, x, NEG_SLOPE * x)


def _round_up(x, n):
    return ((x + n - 1) // n) * n


# ---------------------------------------------------------------------------
# Fused kernel.  One grid step processes a batch tile of B_t samples.
# Layout: features on sublanes, batch on lanes (last dim = B_t, lane-dense).
#   encoder MLP -> (fused enc-L3 + GCNConv1 weight) -> propagate(A_hat)
#   -> GCNConv2 weight (block-diag) -> propagate(A_hat) -> mean pool
#   -> fc1 -> (fused fc2 + cumsum) -> sigmoid
# ---------------------------------------------------------------------------
def fused_kernel(bT_ref, adjT_ref,
                 w1, b1, w2, b2, w3c1, b3c1, bc1, wc2b, bc2,
                 wf1, bf1, wcum, bcum,
                 out_ref, a_scr, b_scr, *, P, H):
    f32 = jnp.float32
    bf16 = jnp.bfloat16
    twoH = 2 * H

    # ---- encoder MLP (bf16 operands, f32 accumulate) -----------------------
    x = bT_ref[...]                                             # (P*m, B_t)
    x = _lrelu(jnp.dot(w1[...], x.astype(bf16),
                       preferred_element_type=f32) + b1[...])   # (P*H, B_t)
    x = _lrelu(jnp.dot(w2[...], x.astype(bf16),
                       preferred_element_type=f32) + b2[...])   # (2*P*H, B_t)

    # ---- fused encoder-L3 + GCNConv1 node-wise weight ----------------------
    # g_pre = blockdiag(Wc1) @ (W3 x + b3) = (C1 W3) x + C1 b3
    a_scr[...] = (jnp.dot(w3c1[...], x.astype(bf16),
                          preferred_element_type=f32) + b3c1[...])

    # adjT[p*P + q, b] = A_hat[b, p, q]; whole tile is just P*P*B_t floats.
    adj = adjT_ref[...]                                         # (P*P, B_t)

    def propagate(src_ref, dst_ref, bias):
        # dst[p] = leaky_relu( sum_q A_hat[:, p, q] * src[q]  + bias )
        # (P*P VPU mul-adds over lane-dense (2H, B_t) sublane blocks;
        #  no dense block adjacency, no MXU work.)
        for p in range(P):
            acc = None
            for q in range(P):
                c = adj[p * P + q:p * P + q + 1, :] * \
                    src_ref[q * twoH:(q + 1) * twoH, :]
                acc = c if acc is None else acc + c
            dst_ref[p * twoH:(p + 1) * twoH, :] = _lrelu(acc + bias)

    # ---- GCNConv1: propagate + bias + leaky_relu ----------------------------
    propagate(a_scr, b_scr, bc1[...])

    # ---- GCNConv2: node-wise weight (block-diag matmul), then propagate ----
    a_scr[...] = jnp.dot(wc2b[...], b_scr[...].astype(bf16),
                         preferred_element_type=f32)
    propagate(a_scr, b_scr, bc2[...])

    # ---- global mean pool over the P nodes (sum of sublane blocks) ---------
    pooled = b_scr[0:twoH, :]
    for p in range(1, P):
        pooled = pooled + b_scr[p * twoH:(p + 1) * twoH, :]
    pooled = pooled * (1.0 / P)                                  # (2H, B_t)

    # ---- fc1, then fused (fc2 + cumsum), kept in f32 (fc2 scale is 1e-7) ---
    f = _lrelu(jnp.dot(wf1[...], pooled, preferred_element_type=f32) + bf1[...])
    cum = jnp.dot(wcum[...], f, preferred_element_type=f32) + bcum[...]
    out_ref[...] = jax.nn.sigmoid(cum)                           # (n_out_pad, B_t)


# ---------------------------------------------------------------------------
# One-time parameter preparation (hoisted out of the per-call path):
# weight casts, block-diagonal GCN weights, encoder-L3/conv1 fusion and the
# fc2+cumsum fusion all happen here, once.
# ---------------------------------------------------------------------------
def prepare_params(params, *, P, m, hidden_dim, hyp_shape):
    f32, bf16 = jnp.float32, jnp.bfloat16
    H = hidden_dim
    hyp_shape = tuple(hyp_shape)
    n_out = math.prod(hyp_shape)
    n_out_pad = _round_up(n_out, SUB)
    tail = n_out // hyp_shape[0]

    def col(v):
        return jnp.asarray(v, f32).reshape(-1, 1)

    eyeP = jnp.eye(P, dtype=f32)
    c1 = jnp.kron(eyeP, jnp.asarray(params["Wc1"], f32))     # (2PH, 4PH)
    c2 = jnp.kron(eyeP, jnp.asarray(params["Wc2"], f32))     # (2PH, 2PH)
    w3 = jnp.asarray(params["W3"], f32)                      # (4PH, 2PH)
    b3 = col(params["b3"])

    # cumsum over hyp_shape[0] as a static 0/1 matrix (numpy -> jit constant),
    # pre-multiplied into fc2 (exact in f32).
    r = np.arange(n_out)
    tmat = np.zeros((n_out_pad, n_out), np.float32)
    tmat[:n_out] = ((r[:, None] % tail == r[None, :] % tail)
                    & (r[None, :] // tail <= r[:, None] // tail))
    tmat = jnp.asarray(tmat)
    wcum = tmat @ jnp.asarray(params["Wf2"], f32)             # (n_out_pad, H)
    bcum = tmat @ col(params["bf2"])                          # (n_out_pad, 1)

    return dict(
        w1=jnp.asarray(params["W1"], bf16),  b1=col(params["b1"]),
        w2=jnp.asarray(params["W2"], bf16),  b2=col(params["b2"]),
        w3c1=(c1 @ w3).astype(bf16),         b3c1=(c1 @ b3).astype(f32),
        bc1=col(params["bc1"]),
        wc2b=c2.astype(bf16),                bc2=col(params["bc2"]),
        wf1=jnp.asarray(params["Wf1"], f32), bf1=col(params["bf1"]),
        wcum=wcum,                           bcum=bcum,
    )


# ---------------------------------------------------------------------------
# Wrapper (jit-able).
# ---------------------------------------------------------------------------
def gnn_hypernetwork_forward(b, adj_hat, ops, *, P, m, hidden_dim, hyp_shape,
                             batch_tile=None):
    f32 = jnp.float32
    B = b.shape[0]
    H = hidden_dim
    hyp_shape = tuple(hyp_shape)
    n_out = math.prod(hyp_shape)
    n_out_pad = ops["wcum"].shape[0]

    # Batch tile = lane dim of every op: multiple of 128 (lane-dense stores);
    # 256 for large B (fills the v6e/v7x 256-wide MXU), nblk splits across TCs.
    if batch_tile is None:
        batch_tile = 256 if B > 128 else 128
    B_t = _round_up(batch_tile, LANE)
    B_pad = _round_up(max(B, 1), B_t)
    nblk = B_pad // B_t

    # Feature-major (batch along lanes) inputs, zero-padded on the batch dim.
    bT = jnp.zeros((P * m, B_pad), f32).at[:, :B].set(
        b.reshape(B, P * m).astype(f32).T)
    adjT = jnp.zeros((P * P, B_pad), f32).at[:, :B].set(
        adj_hat.astype(f32).reshape(B, P * P).T)

    weight_keys = ("w1", "b1", "w2", "b2", "w3c1", "b3c1", "bc1",
                   "wc2b", "bc2", "wf1", "bf1", "wcum", "bcum")
    weights = [ops[k] for k in weight_keys]

    def invariant_spec(arr):
        return pl.BlockSpec(arr.shape, lambda i, _nd=arr.ndim: (0,) * _nd)

    in_specs = ([pl.BlockSpec((P * m, B_t), lambda i: (0, i)),
                 pl.BlockSpec((P * P, B_t), lambda i: (0, i))]
                + [invariant_spec(w) for w in weights])

    PH, twoPH, twoH = P * H, 2 * P * H, 2 * H
    flops_blk = 2 * B_t * (PH * P * m + twoPH * PH + 2 * twoPH * twoPH
                           + 2 * P * P * twoH + H * twoH + n_out_pad * H)
    bytes_blk = 4 * B_t * (P * m + P * P + n_out_pad) + sum(
        int(w.size) * w.dtype.itemsize for w in weights)
    cost = pl.CostEstimate(flops=nblk * flops_blk,
                           transcendentals=nblk * B_t * n_out_pad,
                           bytes_accessed=nblk * bytes_blk)

    out_pad = pl.pallas_call(
        functools.partial(fused_kernel, P=P, H=H),
        out_shape=jax.ShapeDtypeStruct((n_out_pad, B_pad), f32),
        grid_spec=pltpu.PrefetchScalarGridSpec(
            num_scalar_prefetch=0,
            grid=(nblk,),
            in_specs=in_specs,
            out_specs=pl.BlockSpec((n_out_pad, B_t), lambda i: (0, i)),
            scratch_shapes=[pltpu.VMEM((twoPH, B_t), f32),
                            pltpu.VMEM((twoPH, B_t), f32)]),
        compiler_params=pltpu.CompilerParams(
            dimension_semantics=("parallel",)),
        cost_estimate=cost,
    )(bT, adjT, *weights)

    return out_pad[:n_out, :B].T.reshape((B,) + hyp_shape)


# ---------------------------------------------------------------------------
# Deterministic parameter init (mirrors the module's __init__;
# fc2: weight ~ N(0, 1e-7), bias = -10.0, as in the PyTorch code).
# ---------------------------------------------------------------------------
def init_params(key, P, m, hidden_dim, hyp_shape):
    H = hidden_dim
    ks = jax.random.split(key, 8)

    def linear(k, out_f, in_f):
        kw, kb = jax.random.split(k)
        bound = 1.0 / math.sqrt(in_f)
        w = jax.random.uniform(kw, (out_f, in_f), jnp.float32, -bound, bound)
        bv = jax.random.uniform(kb, (out_f,), jnp.float32, -bound, bound)
        return w, bv

    p = {}
    p["W1"], p["b1"] = linear(ks[0], P * H, P * m)
    p["W2"], p["b2"] = linear(ks[1], 2 * P * H, P * H)
    p["W3"], p["b3"] = linear(ks[2], 4 * P * H, 2 * P * H)
    p["Wc1"], p["bc1"] = linear(ks[3], 2 * H, 4 * H)       # GCNConv 1
    p["Wc2"], p["bc2"] = linear(ks[4], 2 * H, 2 * H)       # GCNConv 2
    p["Wf1"], p["bf1"] = linear(ks[5], H, 2 * H)           # fc1
    n_out = math.prod(hyp_shape)
    p["Wf2"] = 1e-7 * jax.random.normal(ks[6], (n_out, H), jnp.float32)
    p["bf2"] = jnp.full((n_out,), -10.0, jnp.float32)
    return p


def normalized_adjacency(P, extra_edges=()):
    """Dense A_hat = D^{-1/2}(A+I)D^{-1/2} for a ring graph (+ extra edges)."""
    A = jnp.zeros((P, P), jnp.float32)
    idx = jnp.arange(P)
    A = A.at[idx, (idx + 1) % P].set(1.0)
    A = A.at[(idx + 1) % P, idx].set(1.0)
    for (u, v) in extra_edges:
        A = A.at[u, v].set(1.0).at[v, u].set(1.0)
    A_sl = A + jnp.eye(P, dtype=jnp.float32)
    dinv = 1.0 / jnp.sqrt(A_sl.sum(axis=1))
    return dinv[:, None] * A_sl * dinv[None, :]


# ---------------------------------------------------------------------------
# Pure-JAX reference (mirrors the PyTorch forward exactly).
# ---------------------------------------------------------------------------
def reference_forward(b, adj_hat, params, *, P, m, hidden_dim, hyp_shape):
    B = b.shape[0]
    H = hidden_dim
    x = b.reshape(B, P * m)
    x = _lrelu(x @ params["W1"].T + params["b1"])
    x = _lrelu(x @ params["W2"].T + params["b2"])
    x = x @ params["W3"].T + params["b3"]
    x = x.reshape(B, P, 4 * H)
    outs = []
    for i in range(B):
        h = _lrelu(adj_hat[i] @ (x[i] @ params["Wc1"].T) + params["bc1"])
        h = _lrelu(adj_hat[i] @ (h @ params["Wc2"].T) + params["bc2"])
        pooled = h.mean(axis=0)                       # global_mean_pool
        f = _lrelu(pooled @ params["Wf1"].T + params["bf1"])
        f = f @ params["Wf2"].T + params["bf2"]
        outs.append(f.reshape(hyp_shape))
    hyp = jnp.stack(outs)
    hyp = jnp.cumsum(hyp, axis=1)
    return jax.nn.sigmoid(hyp)


if __name__ == "__main__":
    # Small shapes consistent with the module: P nodes, m measurements/node.
    P, m, hidden_dim = 8, 8, 16
    hyp_shape = (4, 8)
    B = 2

    key = jax.random.PRNGKey(0)
    kb, kp = jax.random.split(key)
    b = jax.random.normal(kb, (B, P, m), jnp.float32)
    params = init_params(kp, P, m, hidden_dim, hyp_shape)

    # Deterministic "graph_list": ring graph and ring + one chord.
    adj_hat = jnp.stack([normalized_adjacency(P),
                         normalized_adjacency(P, extra_edges=[(0, P // 2)])])

    ops = prepare_params(params, P=P, m=m, hidden_dim=hidden_dim,
                         hyp_shape=hyp_shape)
    fwd = jax.jit(functools.partial(gnn_hypernetwork_forward, P=P, m=m,
                                    hidden_dim=hidden_dim,
                                    hyp_shape=hyp_shape))
    out = jax.block_until_ready(fwd(b, adj_hat, ops))

    ref = reference_forward(b, adj_hat, params, P=P, m=m,
                            hidden_dim=hidden_dim, hyp_shape=hyp_shape)
    assert out.shape == (B,) + tuple(hyp_shape), out.shape
    max_err = float(jnp.max(jnp.abs(out - ref)))
    assert jnp.allclose(out, ref, atol=1e-4, rtol=1e-2), max_err

    print("KERNEL_OK")
</pallas_src>

<mosaic_0001>
module attributes {stable_mosaic.version = 11 : i64} {
  func.func @fused_kernel(%arg0: i32, %arg1: memref<64x128xf32, #tpu.memory_space<vmem>>, %arg2: memref<64x128xf32, #tpu.memory_space<vmem>>, %arg3: memref<128x64xbf16, #tpu.memory_space<vmem>>, %arg4: memref<128x1xf32, #tpu.memory_space<vmem>>, %arg5: memref<256x128xbf16, #tpu.memory_space<vmem>>, %arg6: memref<256x1xf32, #tpu.memory_space<vmem>>, %arg7: memref<256x256xbf16, #tpu.memory_space<vmem>>, %arg8: memref<256x1xf32, #tpu.memory_space<vmem>>, %arg9: memref<32x1xf32, #tpu.memory_space<vmem>>, %arg10: memref<256x256xbf16, #tpu.memory_space<vmem>>, %arg11: memref<32x1xf32, #tpu.memory_space<vmem>>, %arg12: memref<16x32xf32, #tpu.memory_space<vmem>>, %arg13: memref<16x1xf32, #tpu.memory_space<vmem>>, %arg14: memref<32x16xf32, #tpu.memory_space<vmem>>, %arg15: memref<32x1xf32, #tpu.memory_space<vmem>>, %arg16: memref<32x128xf32, #tpu.memory_space<vmem>>, %arg17: memref<256x128xf32, #tpu.memory_space<vmem>>, %arg18: memref<256x128xf32, #tpu.memory_space<vmem>>) attributes {dimension_semantics = [#tpu.dimension_semantics<parallel>], iteration_bounds = array<i64: 1>, scalar_prefetch = 0 : i64, scratch_operands = 2 : i64, tpu.core_type = #tpu.core_type<tc>, window_params = [{transform_indices = @transform_0, window_bounds = array<i64: 64, 128>}, {transform_indices = @transform_1, window_bounds = array<i64: 64, 128>}, {pipeline_mode = #tpu.pipeline_mode<synchronous>, transform_indices = @transform_2, window_bounds = array<i64: 128, 64>}, {pipeline_mode = #tpu.pipeline_mode<synchronous>, transform_indices = @transform_3, window_bounds = array<i64: 128, 1>}, {pipeline_mode = #tpu.pipeline_mode<synchronous>, transform_indices = @transform_4, window_bounds = array<i64: 256, 128>}, {pipeline_mode = #tpu.pipeline_mode<synchronous>, transform_indices = @transform_5, window_bounds = array<i64: 256, 1>}, {pipeline_mode = #tpu.pipeline_mode<synchronous>, transform_indices = @transform_6, window_bounds = array<i64: 256, 256>}, {pipeline_mode = #tpu.pipeline_mode<synchronous>, transform_indices = @transform_7, window_bounds = array<i64: 256, 1>}, {pipeline_mode = #tpu.pipeline_mode<synchronous>, transform_indices = @transform_8, window_bounds = array<i64: 32, 1>}, {pipeline_mode = #tpu.pipeline_mode<synchronous>, transform_indices = @transform_9, window_bounds = array<i64: 256, 256>}, {pipeline_mode = #tpu.pipeline_mode<synchronous>, transform_indices = @transform_10, window_bounds = array<i64: 32, 1>}, {pipeline_mode = #tpu.pipeline_mode<synchronous>, transform_indices = @transform_11, window_bounds = array<i64: 16, 32>}, {pipeline_mode = #tpu.pipeline_mode<synchronous>, transform_indices = @transform_12, window_bounds = array<i64: 16, 1>}, {pipeline_mode = #tpu.pipeline_mode<synchronous>, transform_indices = @transform_13, window_bounds = array<i64: 32, 16>}, {pipeline_mode = #tpu.pipeline_mode<synchronous>, transform_indices = @transform_14, window_bounds = array<i64: 32, 1>}, {transform_indices = @transform_15, window_bounds = array<i64: 32, 128>}]} {
    %c0 = arith.constant 0 : index
    %c0_0 = arith.constant 0 : index
    %0 = vector.load %arg1[%c0, %c0_0] : memref<64x128xf32, #tpu.memory_space<vmem>>, vector<64x128xf32>
    %c0_1 = arith.constant 0 : index
    %c0_2 = arith.constant 0 : index
    %1 = vector.load %arg3[%c0_1, %c0_2] : memref<128x64xbf16, #tpu.memory_space<vmem>>, vector<128x64xbf16>
    %2 = arith.truncf %0 : vector<64x128xf32> to vector<64x128xbf16>
    %cst = arith.constant dense<0.000000e+00> : vector<128x128xf32>
    %3 = tpu.matmul %1, %2, %cst {dimension_numbers = #tpu.dot_dimension_numbers<[1], [0], [0], [1], [0, 0, 1, 1], [], []>} : vector<128x64xbf16>, vector<64x128xbf16>, vector<128x128xf32> -> vector<128x128xf32>
    %c0_3 = arith.constant 0 : index
    %c0_4 = arith.constant 0 : index
    %4 = vector.load %arg4[%c0_3, %c0_4] : memref<128x1xf32, #tpu.memory_space<vmem>>, vector<128x1xf32>
    %5 = vector.broadcast %4 : vector<128x1xf32> to vector<128x128xf32>
    %6 = arith.addf %3, %5 : vector<128x128xf32>
    %cst_5 = arith.constant 0.000000e+00 : f32
    %7 = vector.broadcast %cst_5 : f32 to vector<128x128xf32>
    %8 = arith.cmpf oge, %6, %7 : vector<128x128xf32>
    %cst_6 = arith.constant 0.00999999977 : f32
    %9 = vector.broadcast %cst_6 : f32 to vector<128x128xf32>
    %10 = arith.mulf %9, %6 : vector<128x128xf32>
    %11 = arith.select %8, %6, %10 : vector<128x128xi1>, vector<128x128xf32>
    %c0_7 = arith.constant 0 : index
    %c0_8 = arith.constant 0 : index
    %12 = vector.load %arg5[%c0_7, %c0_8] : memref<256x128xbf16, #tpu.memory_space<vmem>>, vector<256x128xbf16>
    %13 = arith.truncf %11 : vector<128x128xf32> to vector<128x128xbf16>
    %cst_9 = arith.constant dense<0.000000e+00> : vector<256x128xf32>
    %14 = tpu.matmul %12, %13, %cst_9 {dimension_numbers = #tpu.dot_dimension_numbers<[1], [0], [0], [1], [0, 0, 1, 1], [], []>} : vector<256x128xbf16>, vector<128x128xbf16>, vector<256x128xf32> -> vector<256x128xf32>
    %c0_10 = arith.constant 0 : index
    %c0_11 = arith.constant 0 : index
    %15 = vector.load %arg6[%c0_10, %c0_11] : memref<256x1xf32, #tpu.memory_space<vmem>>, vector<256x1xf32>
    %16 = vector.broadcast %15 : vector<256x1xf32> to vector<256x128xf32>
    %17 = arith.addf %14, %16 : vector<256x128xf32>
    %cst_12 = arith.constant 0.000000e+00 : f32
    %18 = vector.broadcast %cst_12 : f32 to vector<256x128xf32>
    %19 = arith.cmpf oge, %17, %18 : vector<256x128xf32>
    %cst_13 = arith.constant 0.00999999977 : f32
    %20 = vector.broadcast %cst_13 : f32 to vector<256x128xf32>
    %21 = arith.mulf %20, %17 : vector<256x128xf32>
    %22 = arith.select %19, %17, %21 : vector<256x128xi1>, vector<256x128xf32>
    %c0_14 = arith.constant 0 : index
    %c0_15 = arith.constant 0 : index
    %23 = vector.load %arg7[%c0_14, %c0_15] : memref<256x256xbf16, #tpu.memory_space<vmem>>, vector<256x256xbf16>
    %24 = arith.truncf %22 : vector<256x128xf32> to vector<256x128xbf16>
    %cst_16 = arith.constant dense<0.000000e+00> : vector<256x128xf32>
    %25 = tpu.matmul %23, %24, %cst_16 {dimension_numbers = #tpu.dot_dimension_numbers<[1], [0], [0], [1], [0, 0, 1, 1], [], []>} : vector<256x256xbf16>, vector<256x128xbf16>, vector<256x128xf32> -> vector<256x128xf32>
    %c0_17 = arith.constant 0 : index
    %c0_18 = arith.constant 0 : index
    %26 = vector.load %arg8[%c0_17, %c0_18] : memref<256x1xf32, #tpu.memory_space<vmem>>, vector<256x1xf32>
    %27 = vector.broadcast %26 : vector<256x1xf32> to vector<256x128xf32>
    %28 = arith.addf %25, %27 : vector<256x128xf32>
    %c0_19 = arith.constant 0 : index
    %c0_20 = arith.constant 0 : index
    %29 = vector.load %arg17[%c0_19, %c0_20] : memref<256x128xf32, #tpu.memory_space<vmem>>, vector<256x128xf32>
    tpu.vector_store %arg17[%c0_19, %c0_20], %28 {strides = array<i32>} : memref<256x128xf32, #tpu.memory_space<vmem>>, vector<256x128xf32>,
    %c0_21 = arith.constant 0 : index
    %c0_22 = arith.constant 0 : index
    %30 = vector.load %arg2[%c0_21, %c0_22] : memref<64x128xf32, #tpu.memory_space<vmem>>, vector<64x128xf32>
    %c0_23 = arith.constant 0 : index
    %c0_24 = arith.constant 0 : index
    %31 = vector.load %arg9[%c0_23, %c0_24] : memref<32x1xf32, #tpu.memory_space<vmem>>, vector<32x1xf32>
    %32 = vector.extract_strided_slice %30 {offsets = [0, 0], sizes = [1, 128], strides = [1, 1]} : vector<64x128xf32> to vector<1x128xf32>
    %c0_25 = arith.constant 0 : index
    %c0_26 = arith.constant 0 : index
    %33 = vector.load %arg17[%c0_25, %c0_26] : memref<256x128xf32, #tpu.memory_space<vmem>>, vector<32x128xf32>
    %34 = vector.broadcast %32 : vector<1x128xf32> to vector<32x128xf32>
    %35 = arith.mulf %34, %33 : vector<32x128xf32>
    %36 = vector.extract_strided_slice %30 {offsets = [1, 0], sizes = [1, 128], strides = [1, 1]} : vector<64x128xf32> to vector<1x128xf32>
    %c32 = arith.constant 32 : index
    %c0_27 = arith.constant 0 : index
    %37 = vector.load %arg17[%c32, %c0_27] : memref<256x128xf32, #tpu.memory_space<vmem>>, vector<32x128xf32>
    %38 = vector.broadcast %36 : vector<1x128xf32> to vector<32x128xf32>
    %39 = arith.mulf %38, %37 : vector<32x128xf32>
    %40 = arith.addf %35, %39 : vector<32x128xf32>
    %41 = vector.extract_strided_slice %30 {offsets = [2, 0], sizes = [1, 128], strides = [1, 1]} : vector<64x128xf32> to vector<1x128xf32>
    %c64 = arith.constant 64 : index
    %c0_28 = arith.constant 0 : index
    %42 = vector.load %arg17[%c64, %c0_28] : memref<256x128xf32, #tpu.memory_space<vmem>>, vector<32x128xf32>
    %43 = vector.broadcast %41 : vector<1x128xf32> to vector<32x128xf32>
    %44 = arith.mulf %43, %42 : vector<32x128xf32>
    %45 = arith.addf %40, %44 : vector<32x128xf32>
    %46 = vector.extract_strided_slice %30 {offsets = [3, 0], sizes = [1, 128], strides = [1, 1]} : vector<64x128xf32> to vector<1x128xf32>
    %c96 = arith.constant 96 : index
    %c0_29 = arith.constant 0 : index
    %47 = vector.load %arg17[%c96, %c0_29] : memref<256x128xf32, #tpu.memory_space<vmem>>, vector<32x128xf32>
    %48 = vector.broadcast %46 : vector<1x128xf32> to vector<32x128xf32>
    %49 = arith.mulf %48, %47 : vector<32x128xf32>
    %50 = arith.addf %45, %49 : vector<32x128xf32>
    %51 = vector.extract_strided_slice %30 {offsets = [4, 0], sizes = [1, 128], strides = [1, 1]} : vector<64x128xf32> to vector<1x128xf32>
    %c128 = arith.constant 128 : index
    %c0_30 = arith.constant 0 : index
    %52 = vector.load %arg17[%c128, %c0_30] : memref<256x128xf32, #tpu.memory_space<vmem>>, vector<32x128xf32>
    %53 = vector.broadcast %51 : vector<1x128xf32> to vector<32x128xf32>
    %54 = arith.mulf %53, %52 : vector<32x128xf32>
    %55 = arith.addf %50, %54 : vector<32x128xf32>
    %56 = vector.extract_strided_slice %30 {offsets = [5, 0], sizes = [1, 128], strides = [1, 1]} : vector<64x128xf32> to vector<1x128xf32>
    %c160 = arith.constant 160 : index
    %c0_31 = arith.constant 0 : index
    %57 = vector.load %arg17[%c160, %c0_31] : memref<256x128xf32, #tpu.memory_space<vmem>>, vector<32x128xf32>
    %58 = vector.broadcast %56 : vector<1x128xf32> to vector<32x128xf32>
    %59 = arith.mulf %58, %57 : vector<32x128xf32>
    %60 = arith.addf %55, %59 : vector<32x128xf32>
    %61 = vector.extract_strided_slice %30 {offsets = [6, 0], sizes = [1, 128], strides = [1, 1]} : vector<64x128xf32> to vector<1x128xf32>
    %c192 = arith.constant 192 : index
    %c0_32 = arith.constant 0 : index
    %62 = vector.load %arg17[%c192, %c0_32] : memref<256x128xf32, #tpu.memory_space<vmem>>, vector<32x128xf32>
    %63 = vector.broadcast %61 : vector<1x128xf32> to vector<32x128xf32>
    %64 = arith.mulf %63, %62 : vector<32x128xf32>
    %65 = arith.addf %60, %64 : vector<32x128xf32>
    %66 = vector.extract_strided_slice %30 {offsets = [7, 0], sizes = [1, 128], strides = [1, 1]} : vector<64x128xf32> to vector<1x128xf32>
    %c224 = arith.constant 224 : index
    %c0_33 = arith.constant 0 : index
    %67 = vector.load %arg17[%c224, %c0_33] : memref<256x128xf32, #tpu.memory_space<vmem>>, vector<32x128xf32>
    %68 = vector.broadcast %66 : vector<1x128xf32> to vector<32x128xf32>
    %69 = arith.mulf %68, %67 : vector<32x128xf32>
    %70 = arith.addf %65, %69 : vector<32x128xf32>
    %71 = vector.broadcast %31 : vector<32x1xf32> to vector<32x128xf32>
    %72 = arith.addf %70, %71 : vector<32x128xf32>
    %cst_34 = arith.constant 0.000000e+00 : f32
    %73 = vector.broadcast %cst_34 : f32 to vector<32x128xf32>
    %74 = arith.cmpf oge, %72, %73 : vector<32x128xf32>
    %cst_35 = arith.constant 0.00999999977 : f32
    %75 = vector.broadcast %cst_35 : f32 to vector<32x128xf32>
    %76 = arith.mulf %75, %72 : vector<32x128xf32>
    %77 = arith.select %74, %72, %76 : vector<32x128xi1>, vector<32x128xf32>
    %c0_36 = arith.constant 0 : index
    %c0_37 = arith.constant 0 : index
    %78 = vector.load %arg18[%c0_36, %c0_37] : memref<256x128xf32, #tpu.memory_space<vmem>>, vector<32x128xf32>
    tpu.vector_store %arg18[%c0_36, %c0_37], %77 {strides = array<i32>} : memref<256x128xf32, #tpu.memory_space<vmem>>, vector<32x128xf32>,
    %79 = vector.extract_strided_slice %30 {offsets = [8, 0], sizes = [1, 128], strides = [1, 1]} : vector<64x128xf32> to vector<1x128xf32>
    %c0_38 = arith.constant 0 : index
    %c0_39 = arith.constant 0 : index
    %80 = vector.load %arg17[%c0_38, %c0_39] : memref<256x128xf32, #tpu.memory_space<vmem>>, vector<32x128xf32>
    %81 = vector.broadcast %79 : vector<1x128xf32> to vector<32x128xf32>
    %82 = arith.mulf %81, %80 : vector<32x128xf32>
    %83 = vector.extract_strided_slice %30 {offsets = [9, 0], sizes = [1, 128], strides = [1, 1]} : vector<64x128xf32> to vector<1x128xf32>
    %c32_40 = arith.constant 32 : index
    %c0_41 = arith.constant 0 : index
    %84 = vector.load %arg17[%c32_40, %c0_41] : memref<256x128xf32, #tpu.memory_space<vmem>>, vector<32x128xf32>
    %85 = vector.broadcast %83 : vector<1x128xf32> to vector<32x128xf32>
    %86 = arith.mulf %85, %84 : vector<32x128xf32>
    %87 = arith.addf %82, %86 : vector<32x128xf32>
    %88 = vector.extract_strided_slice %30 {offsets = [10, 0], sizes = [1, 128], strides = [1, 1]} : vector<64x128xf32> to vector<1x128xf32>
    %c64_42 = arith.constant 64 : index
    %c0_43 = arith.constant 0 : index
    %89 = vector.load %arg17[%c64_42, %c0_43] : memref<256x128xf32, #tpu.memory_space<vmem>>, vector<32x128xf32>
    %90 = vector.broadcast %88 : vector<1x128xf32> to vector<32x128xf32>
    %91 = arith.mulf %90, %89 : vector<32x128xf32>
    %92 = arith.addf %87, %91 : vector<32x128xf32>
    %93 = vector.extract_strided_slice %30 {offsets = [11, 0], sizes = [1, 128], strides = [1, 1]} : vector<64x128xf32> to vector<1x128xf32>
    %c96_44 = arith.constant 96 : index
    %c0_45 = arith.constant 0 : index
    %94 = vector.load %arg17[%c96_44, %c0_45] : memref<256x128xf32, #tpu.memory_space<vmem>>, vector<32x128xf32>
    %95 = vector.broadcast %93 : vector<1x128xf32> to vector<32x128xf32>
    %96 = arith.mulf %95, %94 : vector<32x128xf32>
    %97 = arith.addf %92, %96 : vector<32x128xf32>
    %98 = vector.extract_strided_slice %30 {offsets = [12, 0], sizes = [1, 128], strides = [1, 1]} : vector<64x128xf32> to vector<1x128xf32>
    %c128_46 = arith.constant 128 : index
    %c0_47 = arith.constant 0 : index
    %99 = vector.load %arg17[%c128_46, %c0_47] : memref<256x128xf32, #tpu.memory_space<vmem>>, vector<32x128xf32>
    %100 = vector.broadcast %98 : vector<1x128xf32> to vector<32x128xf32>
    %101 = arith.mulf %100, %99 : vector<32x128xf32>
    %102 = arith.addf %97, %101 : vector<32x128xf32>
    %103 = vector.extract_strided_slice %30 {offsets = [13, 0], sizes = [1, 128], strides = [1, 1]} : vector<64x128xf32> to vector<1x128xf32>
    %c160_48 = arith.constant 160 : index
    %c0_49 = arith.constant 0 : index
    %104 = vector.load %arg17[%c160_48, %c0_49] : memref<256x128xf32, #tpu.memory_space<vmem>>, vector<32x128xf32>
    %105 = vector.broadcast %103 : vector<1x128xf32> to vector<32x128xf32>
    %106 = arith.mulf %105, %104 : vector<32x128xf32>
    %107 = arith.addf %102, %106 : vector<32x128xf32>
    %108 = vector.extract_strided_slice %30 {offsets = [14, 0], sizes = [1, 128], strides = [1, 1]} : vector<64x128xf32> to vector<1x128xf32>
    %c192_50 = arith.constant 192 : index
    %c0_51 = arith.constant 0 : index
    %109 = vector.load %arg17[%c192_50, %c0_51] : memref<256x128xf32, #tpu.memory_space<vmem>>, vector<32x128xf32>
    %110 = vector.broadcast %108 : vector<1x128xf32> to vector<32x128xf32>
    %111 = arith.mulf %110, %109 : vector<32x128xf32>
    %112 = arith.addf %107, %111 : vector<32x128xf32>
    %113 = vector.extract_strided_slice %30 {offsets = [15, 0], sizes = [1, 128], strides = [1, 1]} : vector<64x128xf32> to vector<1x128xf32>
    %c224_52 = arith.constant 224 : index
    %c0_53 = arith.constant 0 : index
    %114 = vector.load %arg17[%c224_52, %c0_53] : memref<256x128xf32, #tpu.memory_space<vmem>>, vector<32x128xf32>
    %115 = vector.broadcast %113 : vector<1x128xf32> to vector<32x128xf32>
    %116 = arith.mulf %115, %114 : vector<32x128xf32>
    %117 = arith.addf %112, %116 : vector<32x128xf32>
    %118 = vector.broadcast %31 : vector<32x1xf32> to vector<32x128xf32>
    %119 = arith.addf %117, %118 : vector<32x128xf32>
    %cst_54 = arith.constant 0.000000e+00 : f32
    %120 = vector.broadcast %cst_54 : f32 to vector<32x128xf32>
    %121 = arith.cmpf oge, %119, %120 : vector<32x128xf32>
    %cst_55 = arith.constant 0.00999999977 : f32
    %122 = vector.broadcast %cst_55 : f32 to vector<32x128xf32>
    %123 = arith.mulf %122, %119 : vector<32x128xf32>
    %124 = arith.select %121, %119, %123 : vector<32x128xi1>, vector<32x128xf32>
    %c32_56 = arith.constant 32 : index
    %c0_57 = arith.constant 0 : index
    %125 = vector.load %arg18[%c32_56, %c0_57] : memref<256x128xf32, #tpu.memory_space<vmem>>, vector<32x128xf32>
    tpu.vector_store %arg18[%c32_56, %c0_57], %124 {strides = array<i32>} : memref<256x128xf32, #tpu.memory_space<vmem>>, vector<32x128xf32>,
    %126 = vector.extract_strided_slice %30 {offsets = [16, 0], sizes = [1, 128], strides = [1, 1]} : vector<64x128xf32> to vector<1x128xf32>
    %c0_58 = arith.constant 0 : index
    %c0_59 = arith.constant 0 : index
    %127 = vector.load %arg17[%c0_58, %c0_59] : memref<256x128xf32, #tpu.memory_space<vmem>>, vector<32x128xf32>
    %128 = vector.broadcast %126 : vector<1x128xf32> to vector<32x128xf32>
    %129 = arith.mulf %128, %127 : vector<32x128xf32>
    %130 = vector.extract_strided_slice %30 {offsets = [17, 0], sizes = [1, 128], strides = [1, 1]} : vector<64x128xf32> to vector<1x128xf32>
    %c32_60 = arith.constant 32 : index
    %c0_61 = arith.constant 0 : index
    %131 = vector.load %arg17[%c32_60, %c0_61] : memref<256x128xf32, #tpu.memory_space<vmem>>, vector<32x128xf32>
    %132 = vector.broadcast %130 : vector<1x128xf32> to vector<32x128xf32>
    %133 = arith.mulf %132, %131 : vector<32x128xf32>
    %134 = arith.addf %129, %133 : vector<32x128xf32>
    %135 = vector.extract_strided_slice %30 {offsets = [18, 0], sizes = [1, 128], strides = [1, 1]} : vector<64x128xf32> to vector<1x128xf32>
    %c64_62 = arith.constant 64 : index
    %c0_63 = arith.constant 0 : index
    %136 = vector.load %arg17[%c64_62, %c0_63] : memref<256x128xf32, #tpu.memory_space<vmem>>, vector<32x128xf32>
    %137 = vector.broadcast %135 : vector<1x128xf32> to vector<32x128xf32>
    %138 = arith.mulf %137, %136 : vector<32x128xf32>
    %139 = arith.addf %134, %138 : vector<32x128xf32>
    %140 = vector.extract_strided_slice %30 {offsets = [19, 0], sizes = [1, 128], strides = [1, 1]} : vector<64x128xf32> to vector<1x128xf32>
    %c96_64 = arith.constant 96 : index
    %c0_65 = arith.constant 0 : index
    %141 = vector.load %arg17[%c96_64, %c0_65] : memref<256x128xf32, #tpu.memory_space<vmem>>, vector<32x128xf32>
    %142 = vector.broadcast %140 : vector<1x128xf32> to vector<32x128xf32>
    %143 = arith.mulf %142, %141 : vector<32x128xf32>
    %144 = arith.addf %139, %143 : vector<32x128xf32>
    %145 = vector.extract_strided_slice %30 {offsets = [20, 0], sizes = [1, 128], strides = [1, 1]} : vector<64x128xf32> to vector<1x128xf32>
    %c128_66 = arith.constant 128 : index
    %c0_67 = arith.constant 0 : index
    %146 = vector.load %arg17[%c128_66, %c0_67] : memref<256x128xf32, #tpu.memory_space<vmem>>, vector<32x128xf32>
    %147 = vector.broadcast %145 : vector<1x128xf32> to vector<32x128xf32>
    %148 = arith.mulf %147, %146 : vector<32x128xf32>
    %149 = arith.addf %144, %148 : vector<32x128xf32>
    %150 = vector.extract_strided_slice %30 {offsets = [21, 0], sizes = [1, 128], strides = [1, 1]} : vector<64x128xf32> to vector<1x128xf32>
    %c160_68 = arith.constant 160 : index
    %c0_69 = arith.constant 0 : index
    %151 = vector.load %arg17[%c160_68, %c0_69] : memref<256x128xf32, #tpu.memory_space<vmem>>, vector<32x128xf32>
    %152 = vector.broadcast %150 : vector<1x128xf32> to vector<32x128xf32>
    %153 = arith.mulf %152, %151 : vector<32x128xf32>
    %154 = arith.addf %149, %153 : vector<32x128xf32>
    %155 = vector.extract_strided_slice %30 {offsets = [22, 0], sizes = [1, 128], strides = [1, 1]} : vector<64x128xf32> to vector<1x128xf32>
    %c192_70 = arith.constant 192 : index
    %c0_71 = arith.constant 0 : index
    %156 = vector.load %arg17[%c192_70, %c0_71] : memref<256x128xf32, #tpu.memory_space<vmem>>, vector<32x128xf32>
    %157 = vector.broadcast %155 : vector<1x128xf32> to vector<32x128xf32>
    %158 = arith.mulf %157, %156 : vector<32x128xf32>
    %159 = arith.addf %154, %158 : vector<32x128xf32>
    %160 = vector.extract_strided_slice %30 {offsets = [23, 0], sizes = [1, 128], strides = [1, 1]} : vector<64x128xf32> to vector<1x128xf32>
    %c224_72 = arith.constant 224 : index
    %c0_73 = arith.constant 0 : index
    %161 = vector.load %arg17[%c224_72, %c0_73] : memref<256x128xf32, #tpu.memory_space<vmem>>, vector<32x128xf32>
    %162 = vector.broadcast %160 : vector<1x128xf32> to vector<32x128xf32>
    %163 = arith.mulf %162, %161 : vector<32x128xf32>
    %164 = arith.addf %159, %163 : vector<32x128xf32>
    %165 = vector.broadcast %31 : vector<32x1xf32> to vector<32x128xf32>
    %166 = arith.addf %164, %165 : vector<32x128xf32>
    %cst_74 = arith.constant 0.000000e+00 : f32
    %167 = vector.broadcast %cst_74 : f32 to vector<32x128xf32>
    %168 = arith.cmpf oge, %166, %167 : vector<32x128xf32>
    %cst_75 = arith.constant 0.00999999977 : f32
    %169 = vector.broadcast %cst_75 : f32 to vector<32x128xf32>
    %170 = arith.mulf %169, %166 : vector<32x128xf32>
    %171 = arith.select %168, %166, %170 : vector<32x128xi1>, vector<32x128xf32>
    %c64_76 = arith.constant 64 : index
    %c0_77 = arith.constant 0 : index
    %172 = vector.load %arg18[%c64_76, %c0_77] : memref<256x128xf32, #tpu.memory_space<vmem>>, vector<32x128xf32>
    tpu.vector_store %arg18[%c64_76, %c0_77], %171 {strides = array<i32>} : memref<256x128xf32, #tpu.memory_space<vmem>>, vector<32x128xf32>,
    %173 = vector.extract_strided_slice %30 {offsets = [24, 0], sizes = [1, 128], strides = [1, 1]} : vector<64x128xf32> to vector<1x128xf32>
    %c0_78 = arith.constant 0 : index
    %c0_79 = arith.constant 0 : index
    %174 = vector.load %arg17[%c0_78, %c0_79] : memref<256x128xf32, #tpu.memory_space<vmem>>, vector<32x128xf32>
    %175 = vector.broadcast %173 : vector<1x128xf32> to vector<32x128xf32>
    %176 = arith.mulf %175, %174 : vector<32x128xf32>
    %177 = vector.extract_strided_slice %30 {offsets = [25, 0], sizes = [1, 128], strides = [1, 1]} : vector<64x128xf32> to vector<1x128xf32>
    %c32_80 = arith.constant 32 : index
    %c0_81 = arith.constant 0 : index
    %178 = vector.load %arg17[%c32_80, %c0_81] : memref<256x128xf32, #tpu.memory_space<vmem>>, vector<32x128xf32>
    %179 = vector.broadcast %177 : vector<1x128xf32> to vector<32x128xf32>
    %180 = arith.mulf %179, %178 : vector<32x128xf32>
    %181 = arith.addf %176, %180 : vector<32x128xf32>
    %182 = vector.extract_strided_slice %30 {offsets = [26, 0], sizes = [1, 128], strides = [1, 1]} : vector<64x128xf32> to vector<1x128xf32>
    %c64_82 = arith.constant 64 : index
    %c0_83 = arith.constant 0 : index
    %183 = vector.load %arg17[%c64_82, %c0_83] : memref<256x128xf32, #tpu.memory_space<vmem>>, vector<32x128xf32>
    %184 = vector.broadcast %182 : vector<1x128xf32> to vector<32x128xf32>
    %185 = arith.mulf %184, %183 : vector<32x128xf32>
    %186 = arith.addf %181, %185 : vector<32x128xf32>
    %187 = vector.extract_strided_slice %30 {offsets = [27, 0], sizes = [1, 128], strides = [1, 1]} : vector<64x128xf32> to vector<1x128xf32>
    %c96_84 = arith.constant 96 : index
    %c0_85 = arith.constant 0 : index
    %188 = vector.load %arg17[%c96_84, %c0_85] : memref<256x128xf32, #tpu.memory_space<vmem>>, vector<32x128xf32>
    %189 = vector.broadcast %187 : vector<1x128xf32> to vector<32x128xf32>
    %190 = arith.mulf %189, %188 : vector<32x128xf32>
    %191 = arith.addf %186, %190 : vector<32x128xf32>
    %192 = vector.extract_strided_slice %30 {offsets = [28, 0], sizes = [1, 128], strides = [1, 1]} : vector<64x128xf32> to vector<1x128xf32>
    %c128_86 = arith.constant 128 : index
    %c0_87 = arith.constant 0 : index
    %193 = vector.load %arg17[%c128_86, %c0_87] : memref<256x128xf32, #tpu.memory_space<vmem>>, vector<32x128xf32>
    %194 = vector.broadcast %192 : vector<1x128xf32> to vector<32x128xf32>
    %195 = arith.mulf %194, %193 : vector<32x128xf32>
    %196 = arith.addf %191, %195 : vector<32x128xf32>
    %197 = vector.extract_strided_slice %30 {offsets = [29, 0], sizes = [1, 128], strides = [1, 1]} : vector<64x128xf32> to vector<1x128xf32>
    %c160_88 = arith.constant 160 : index
    %c0_89 = arith.constant 0 : index
    %198 = vector.load %arg17[%c160_88, %c0_89] : memref<256x128xf32, #tpu.memory_space<vmem>>, vector<32x128xf32>
    %199 = vector.broadcast %197 : vector<1x128xf32> to vector<32x128xf32>
    %200 = arith.mulf %199, %198 : vector<32x128xf32>
    %201 = arith.addf %196, %200 : vector<32x128xf32>
    %202 = vector.extract_strided_slice %30 {offsets = [30, 0], sizes = [1, 128], strides = [1, 1]} : vector<64x128xf32> to vector<1x128xf32>
    %c192_90 = arith.constant 192 : index
    %c0_91 = arith.constant 0 : index
    %203 = vector.load %arg17[%c192_90, %c0_91] : memref<256x128xf32, #tpu.memory_space<vmem>>, vector<32x128xf32>
    %204 = vector.broadcast %202 : vector<1x128xf32> to vector<32x128xf32>
    %205 = arith.mulf %204, %203 : vector<32x128xf32>
    %206 = arith.addf %201, %205 : vector<32x128xf32>
    %207 = vector.extract_strided_slice %30 {offsets = [31, 0], sizes = [1, 128], strides = [1, 1]} : vector<64x128xf32> to vector<1x128xf32>
    %c224_92 = arith.constant 224 : index
    %c0_93 = arith.constant 0 : index
    %208 = vector.load %arg17[%c224_92, %c0_93] : memref<256x128xf32, #tpu.memory_space<vmem>>, vector<32x128xf32>
    %209 = vector.broadcast %207 : vector<1x128xf32> to vector<32x128xf32>
    %210 = arith.mulf %209, %208 : vector<32x128xf32>
    %211 = arith.addf %206, %210 : vector<32x128xf32>
    %212 = vector.broadcast %31 : vector<32x1xf32> to vector<32x128xf32>
    %213 = arith.addf %211, %212 : vector<32x128xf32>
    %cst_94 = arith.constant 0.000000e+00 : f32
    %214 = vector.broadcast %cst_94 : f32 to vector<32x128xf32>
    %215 = arith.cmpf oge, %213, %214 : vector<32x128xf32>
    %cst_95 = arith.constant 0.00999999977 : f32
    %216 = vector.broadcast %cst_95 : f32 to vector<32x128xf32>
    %217 = arith.mulf %216, %213 : vector<32x128xf32>
    %218 = arith.select %215, %213, %217 : vector<32x128xi1>, vector<32x128xf32>
    %c96_96 = arith.constant 96 : index
    %c0_97 = arith.constant 0 : index
    %219 = vector.load %arg18[%c96_96, %c0_97] : memref<256x128xf32, #tpu.memory_space<vmem>>, vector<32x128xf32>
    tpu.vector_store %arg18[%c96_96, %c0_97], %218 {strides = array<i32>} : memref<256x128xf32, #tpu.memory_space<vmem>>, vector<32x128xf32>,
    %220 = vector.extract_strided_slice %30 {offsets = [32, 0], sizes = [1, 128], strides = [1, 1]} : vector<64x128xf32> to vector<1x128xf32>
    %c0_98 = arith.constant 0 : index
    %c0_99 = arith.constant 0 : index
    %221 = vector.load %arg17[%c0_98, %c0_99] : memref<256x128xf32, #tpu.memory_space<vmem>>, vector<32x128xf32>
    %222 = vector.broadcast %220 : vector<1x128xf32> to vector<32x128xf32>
    %223 = arith.mulf %222, %221 : vector<32x128xf32>
    %224 = vector.extract_strided_slice %30 {offsets = [33, 0], sizes = [1, 128], strides = [1, 1]} : vector<64x128xf32> to vector<1x128xf32>
    %c32_100 = arith.constant 32 : index
    %c0_101 = arith.constant 0 : index
    %225 = vector.load %arg17[%c32_100, %c0_101] : memref<256x128xf32, #tpu.memory_space<vmem>>, vector<32x128xf32>
    %226 = vector.broadcast %224 : vector<1x128xf32> to vector<32x128xf32>
    %227 = arith.mulf %226, %225 : vector<32x128xf32>
    %228 = arith.addf %223, %227 : vector<32x128xf32>
    %229 = vector.extract_strided_slice %30 {offsets = [34, 0], sizes = [1, 128], strides = [1, 1]} : vector<64x128xf32> to vector<1x128xf32>
    %c64_102 = arith.constant 64 : index
    %c0_103 = arith.constant 0 : index
    %230 = vector.load %arg17[%c64_102, %c0_103] : memref<256x128xf32, #tpu.memory_space<vmem>>, vector<32x128xf32>
    %231 = vector.broadcast %229 : vector<1x128xf32> to vector<32x128xf32>
    %232 = arith.mulf %231, %230 : vector<32x128xf32>
    %233 = arith.addf %228, %232 : vector<32x128xf32>
    %234 = vector.extract_strided_slice %30 {offsets = [35, 0], sizes = [1, 128], strides = [1, 1]} : vector<64x128xf32> to vector<1x128xf32>
    %c96_104 = arith.constant 96 : index
    %c0_105 = arith.constant 0 : index
    %235 = vector.load %arg17[%c96_104, %c0_105] : memref<256x128xf32, #tpu.memory_space<vmem>>, vector<32x128xf32>
    %236 = vector.broadcast %234 : vector<1x128xf32> to vector<32x128xf32>
    %237 = arith.mulf %236, %235 : vector<32x128xf32>
    %238 = arith.addf %233, %237 : vector<32x128xf32>
    %239 = vector.extract_strided_slice %30 {offsets = [36, 0], sizes = [1, 128], strides = [1, 1]} : vector<64x128xf32> to vector<1x128xf32>
    %c128_106 = arith.constant 128 : index
    %c0_107 = arith.constant 0 : index
    %240 = vector.load %arg17[%c128_106, %c0_107] : memref<256x128xf32, #tpu.memory_space<vmem>>, vector<32x128xf32>
    %241 = vector.broadcast %239 : vector<1x128xf32> to vector<32x128xf32>
    %242 = arith.mulf %241, %240 : vector<32x128xf32>
    %243 = arith.addf %238, %242 : vector<32x128xf32>
    %244 = vector.extract_strided_slice %30 {offsets = [37, 0], sizes = [1, 128], strides = [1, 1]} : vector<64x128xf32> to vector<1x128xf32>
    %c160_108 = arith.constant 160 : index
    %c0_109 = arith.constant 0 : index
    %245 = vector.load %arg17[%c160_108, %c0_109] : memref<256x128xf32, #tpu.memory_space<vmem>>, vector<32x128xf32>
    %246 = vector.broadcast %244 : vector<1x128xf32> to vector<32x128xf32>
    %247 = arith.mulf %246, %245 : vector<32x128xf32>
    %248 = arith.addf %243, %247 : vector<32x128xf32>
    %249 = vector.extract_strided_slice %30 {offsets = [38, 0], sizes = [1, 128], strides = [1, 1]} : vector<64x128xf32> to vector<1x128xf32>
    %c192_110 = arith.constant 192 : index
    %c0_111 = arith.constant 0 : index
    %250 = vector.load %arg17[%c192_110, %c0_111] : memref<256x128xf32, #tpu.memory_space<vmem>>, vector<32x128xf32>
    %251 = vector.broadcast %249 : vector<1x128xf32> to vector<32x128xf32>
    %252 = arith.mulf %251, %250 : vector<32x128xf32>
    %253 = arith.addf %248, %252 : vector<32x128xf32>
    %254 = vector.extract_strided_slice %30 {offsets = [39, 0], sizes = [1, 128], strides = [1, 1]} : vector<64x128xf32> to vector<1x128xf32>
    %c224_112 = arith.constant 224 : index
    %c0_113 = arith.constant 0 : index
    %255 = vector.load %arg17[%c224_112, %c0_113] : memref<256x128xf32, #tpu.memory_space<vmem>>, vector<32x128xf32>
    %256 = vector.broadcast %254 : vector<1x128xf32> to vector<32x128xf32>
    %257 = arith.mulf %256, %255 : vector<32x128xf32>
    %258 = arith.addf %253, %257 : vector<32x128xf32>
    %259 = vector.broadcast %31 : vector<32x1xf32> to vector<32x128xf32>
    %260 = arith.addf %258, %259 : vector<32x128xf32>
    %cst_114 = arith.constant 0.000000e+00 : f32
    %261 = vector.broadcast %cst_114 : f32 to vector<32x128xf32>
    %262 = arith.cmpf oge, %260, %261 : vector<32x128xf32>
    %cst_115 = arith.constant 0.00999999977 : f32
    %263 = vector.broadcast %cst_115 : f32 to vector<32x128xf32>
    %264 = arith.mulf %263, %260 : vector<32x128xf32>
    %265 = arith.select %262, %260, %264 : vector<32x128xi1>, vector<32x128xf32>
    %c128_116 = arith.constant 128 : index
    %c0_117 = arith.constant 0 : index
    %266 = vector.load %arg18[%c128_116, %c0_117] : memref<256x128xf32, #tpu.memory_space<vmem>>, vector<32x128xf32>
    tpu.vector_store %arg18[%c128_116, %c0_117], %265 {strides = array<i32>} : memref<256x128xf32, #tpu.memory_space<vmem>>, vector<32x128xf32>,
    %267 = vector.extract_strided_slice %30 {offsets = [40, 0], sizes = [1, 128], strides = [1, 1]} : vector<64x128xf32> to vector<1x128xf32>
    %c0_118 = arith.constant 0 : index
    %c0_119 = arith.constant 0 : index
    %268 = vector.load %arg17[%c0_118, %c0_119] : memref<256x128xf32, #tpu.memory_space<vmem>>, vector<32x128xf32>
    %269 = vector.broadcast %267 : vector<1x128xf32> to vector<32x128xf32>
    %270 = arith.mulf %269, %268 : vector<32x128xf32>
    %271 = vector.extract_strided_slice %30 {offsets = [41, 0], sizes = [1, 128], strides = [1, 1]} : vector<64x128xf32> to vector<1x128xf32>
    %c32_120 = arith.constant 32 : index
    %c0_121 = arith.constant 0 : index
    %272 = vector.load %arg17[%c32_120, %c0_121] : memref<256x128xf32, #tpu.memory_space<vmem>>, vector<32x128xf32>
    %273 = vector.broadcast %271 : vector<1x128xf32> to vector<32x128xf32>
    %274 = arith.mulf %273, %272 : vector<32x128xf32>
    %275 = arith.addf %270, %274 : vector<32x128xf32>
    %276 = vector.extract_strided_slice %30 {offsets = [42, 0], sizes = [1, 128], strides = [1, 1]} : vector<64x128xf32> to vector<1x128xf32>
    %c64_122 = arith.constant 64 : index
    %c0_123 = arith.constant 0 : index
    %277 = vector.load %arg17[%c64_122, %c0_123] : memref<256x128xf32, #tpu.memory_space<vmem>>, vector<32x128xf32>
    %278 = vector.broadcast %276 : vector<1x128xf32> to vector<32x128xf32>
    %279 = arith.mulf %278, %277 : vector<32x128xf32>
    %280 = arith.addf %275, %279 : vector<32x128xf32>
    %281 = vector.extract_strided_slice %30 {offsets = [43, 0], sizes = [1, 128], strides = [1, 1]} : vector<64x128xf32> to vector<1x128xf32>
    %c96_124 = arith.constant 96 : index
    %c0_125 = arith.constant 0 : index
    %282 = vector.load %arg17[%c96_124, %c0_125] : memref<256x128xf32, #tpu.memory_space<vmem>>, vector<32x128xf32>
    %283 = vector.broadcast %281 : vector<1x128xf32> to vector<32x128xf32>
    %284 = arith.mulf %283, %282 : vector<32x128xf32>
    %285 = arith.addf %280, %284 : vector<32x128xf32>
    %286 = vector.extract_strided_slice %30 {offsets = [44, 0], sizes = [1, 128], strides = [1, 1]} : vector<64x128xf32> to vector<1x128xf32>
    %c128_126 = arith.constant 128 : index
    %c0_127 = arith.constant 0 : index
    %287 = vector.load %arg17[%c128_126, %c0_127] : memref<256x128xf32, #tpu.memory_space<vmem>>, vector<32x128xf32>
    %288 = vector.broadcast %286 : vector<1x128xf32> to vector<32x128xf32>
    %289 = arith.mulf %288, %287 : vector<32x128xf32>
    %290 = arith.addf %285, %289 : vector<32x128xf32>
    %291 = vector.extract_strided_slice %30 {offsets = [45, 0], sizes = [1, 128], strides = [1, 1]} : vector<64x128xf32> to vector<1x128xf32>
    %c160_128 = arith.constant 160 : index
    %c0_129 = arith.constant 0 : index
    %292 = vector.load %arg17[%c160_128, %c0_129] : memref<256x128xf32, #tpu.memory_space<vmem>>, vector<32x128xf32>
    %293 = vector.broadcast %291 : vector<1x128xf32> to vector<32x128xf32>
    %294 = arith.mulf %293, %292 : vector<32x128xf32>
    %295 = arith.addf %290, %294 : vector<32x128xf32>
    %296 = vector.extract_strided_slice %30 {offsets = [46, 0], sizes = [1, 128], strides = [1, 1]} : vector<64x128xf32> to vector<1x128xf32>
    %c192_130 = arith.constant 192 : index
    %c0_131 = arith.constant 0 : index
    %297 = vector.load %arg17[%c192_130, %c0_131] : memref<256x128xf32, #tpu.memory_space<vmem>>, vector<32x128xf32>
    %298 = vector.broadcast %296 : vector<1x128xf32> to vector<32x128xf32>
    %299 = arith.mulf %298, %297 : vector<32x128xf32>
    %300 = arith.addf %295, %299 : vector<32x128xf32>
    %301 = vector.extract_strided_slice %30 {offsets = [47, 0], sizes = [1, 128], strides = [1, 1]} : vector<64x128xf32> to vector<1x128xf32>
    %c224_132 = arith.constant 224 : index
    %c0_133 = arith.constant 0 : index
    %302 = vector.load %arg17[%c224_132, %c0_133] : memref<256x128xf32, #tpu.memory_space<vmem>>, vector<32x128xf32>
    %303 = vector.broadcast %301 : vector<1x128xf32> to vector<32x128xf32>
    %304 = arith.mulf %303, %302 : vector<32x128xf32>
    %305 = arith.addf %300, %304 : vector<32x128xf32>
    %306 = vector.broadcast %31 : vector<32x1xf32> to vector<32x128xf32>
    %307 = arith.addf %305, %306 : vector<32x128xf32>
    %cst_134 = arith.constant 0.000000e+00 : f32
    %308 = vector.broadcast %cst_134 : f32 to vector<32x128xf32>
    %309 = arith.cmpf oge, %307, %308 : vector<32x128xf32>
    %cst_135 = arith.constant 0.00999999977 : f32
    %310 = vector.broadcast %cst_135 : f32 to vector<32x128xf32>
    %311 = arith.mulf %310, %307 : vector<32x128xf32>
    %312 = arith.select %309, %307, %311 : vector<32x128xi1>, vector<32x128xf32>
    %c160_136 = arith.constant 160 : index
    %c0_137 = arith.constant 0 : index
    %313 = vector.load %arg18[%c160_136, %c0_137] : memref<256x128xf32, #tpu.memory_space<vmem>>, vector<32x128xf32>
    tpu.vector_store %arg18[%c160_136, %c0_137], %312 {strides = array<i32>} : memref<256x128xf32, #tpu.memory_space<vmem>>, vector<32x128xf32>,
    %314 = vector.extract_strided_slice %30 {offsets = [48, 0], sizes = [1, 128], strides = [1, 1]} : vector<64x128xf32> to vector<1x128xf32>
    %c0_138 = arith.constant 0 : index
    %c0_139 = arith.constant 0 : index
    %315 = vector.load %arg17[%c0_138, %c0_139] : memref<256x128xf32, #tpu.memory_space<vmem>>, vector<32x128xf32>
    %316 = vector.broadcast %314 : vector<1x128xf32> to vector<32x128xf32>
    %317 = arith.mulf %316, %315 : vector<32x128xf32>
    %318 = vector.extract_strided_slice %30 {offsets = [49, 0], sizes = [1, 128], strides = [1, 1]} : vector<64x128xf32> to vector<1x128xf32>
    %c32_140 = arith.constant 32 : index
    %c0_141 = arith.constant 0 : index
    %319 = vector.load %arg17[%c32_140, %c0_141] : memref<256x128xf32, #tpu.memory_space<vmem>>, vector<32x128xf32>
    %320 = vector.broadcast %318 : vector<1x128xf32> to vector<32x128xf32>
    %321 = arith.mulf %320, %319 : vector<32x128xf32>
    %322 = arith.addf %317, %321 : vector<32x128xf32>
    %323 = vector.extract_strided_slice %30 {offsets = [50, 0], sizes = [1, 128], strides = [1, 1]} : vector<64x128xf32> to vector<1x128xf32>
    %c64_142 = arith.constant 64 : index
    %c0_143 = arith.constant 0 : index
    %324 = vector.load %arg17[%c64_142, %c0_143] : memref<256x128xf32, #tpu.memory_space<vmem>>, vector<32x128xf32>
    %325 = vector.broadcast %323 : vector<1x128xf32> to vector<32x128xf32>
    %326 = arith.mulf %325, %324 : vector<32x128xf32>
    %327 = arith.addf %322, %326 : vector<32x128xf32>
    %328 = vector.extract_strided_slice %30 {offsets = [51, 0], sizes = [1, 128], strides = [1, 1]} : vector<64x128xf32> to vector<1x128xf32>
    %c96_144 = arith.constant 96 : index
    %c0_145 = arith.constant 0 : index
    %329 = vector.load %arg17[%c96_144, %c0_145] : memref<256x128xf32, #tpu.memory_space<vmem>>, vector<32x128xf32>
    %330 = vector.broadcast %328 : vector<1x128xf32> to vector<32x128xf32>
    %331 = arith.mulf %330, %329 : vector<32x128xf32>
    %332 = arith.addf %327, %331 : vector<32x128xf32>
    %333 = vector.extract_strided_slice %30 {offsets = [52, 0], sizes = [1, 128], strides = [1, 1]} : vector<64x128xf32> to vector<1x128xf32>
    %c128_146 = arith.constant 128 : index
    %c0_147 = arith.constant 0 : index
    %334 = vector.load %arg17[%c128_146, %c0_147] : memref<256x128xf32, #tpu.memory_space<vmem>>, vector<32x128xf32>
    %335 = vector.broadcast %333 : vector<1x128xf32> to vector<32x128xf32>
    %336 = arith.mulf %335, %334 : vector<32x128xf32>
    %337 = arith.addf %332, %336 : vector<32x128xf32>
    %338 = vector.extract_strided_slice %30 {offsets = [53, 0], sizes = [1, 128], strides = [1, 1]} : vector<64x128xf32> to vector<1x128xf32>
    %c160_148 = arith.constant 160 : index
    %c0_149 = arith.constant 0 : index
    %339 = vector.load %arg17[%c160_148, %c0_149] : memref<256x128xf32, #tpu.memory_space<vmem>>, vector<32x128xf32>
    %340 = vector.broadcast %338 : vector<1x128xf32> to vector<32x128xf32>
    %341 = arith.mulf %340, %339 : vector<32x128xf32>
    %342 = arith.addf %337, %341 : vector<32x128xf32>
    %343 = vector.extract_strided_slice %30 {offsets = [54, 0], sizes = [1, 128], strides = [1, 1]} : vector<64x128xf32> to vector<1x128xf32>
    %c192_150 = arith.constant 192 : index
    %c0_151 = arith.constant 0 : index
    %344 = vector.load %arg17[%c192_150, %c0_151] : memref<256x128xf32, #tpu.memory_space<vmem>>, vector<32x128xf32>
    %345 = vector.broadcast %343 : vector<1x128xf32> to vector<32x128xf32>
    %346 = arith.mulf %345, %344 : vector<32x128xf32>
    %347 = arith.addf %342, %346 : vector<32x128xf32>
    %348 = vector.extract_strided_slice %30 {offsets = [55, 0], sizes = [1, 128], strides = [1, 1]} : vector<64x128xf32> to vector<1x128xf32>
    %c224_152 = arith.constant 224 : index
    %c0_153 = arith.constant 0 : index
    %349 = vector.load %arg17[%c224_152, %c0_153] : memref<256x128xf32, #tpu.memory_space<vmem>>, vector<32x128xf32>
    %350 = vector.broadcast %348 : vector<1x128xf32> to vector<32x128xf32>
    %351 = arith.mulf %350, %349 : vector<32x128xf32>
    %352 = arith.addf %347, %351 : vector<32x128xf32>
    %353 = vector.broadcast %31 : vector<32x1xf32> to vector<32x128xf32>
    %354 = arith.addf %352, %353 : vector<32x128xf32>
    %cst_154 = arith.constant 0.000000e+00 : f32
    %355 = vector.broadcast %cst_154 : f32 to vector<32x128xf32>
    %356 = arith.cmpf oge, %354, %355 : vector<32x128xf32>
    %cst_155 = arith.constant 0.00999999977 : f32
    %357 = vector.broadcast %cst_155 : f32 to vector<32x128xf32>
    %358 = arith.mulf %357, %354 : vector<32x128xf32>
    %359 = arith.select %356, %354, %358 : vector<32x128xi1>, vector<32x128xf32>
    %c192_156 = arith.constant 192 : index
    %c0_157 = arith.constant 0 : index
    %360 = vector.load %arg18[%c192_156, %c0_157] : memref<256x128xf32, #tpu.memory_space<vmem>>, vector<32x128xf32>
    tpu.vector_store %arg18[%c192_156, %c0_157], %359 {strides = array<i32>} : memref<256x128xf32, #tpu.memory_space<vmem>>, vector<32x128xf32>,
    %361 = vector.extract_strided_slice %30 {offsets = [56, 0], sizes = [1, 128], strides = [1, 1]} : vector<64x128xf32> to vector<1x128xf32>
    %c0_158 = arith.constant 0 : index
    %c0_159 = arith.constant 0 : index
    %362 = vector.load %arg17[%c0_158, %c0_159] : memref<256x128xf32, #tpu.memory_space<vmem>>, vector<32x128xf32>
    %363 = vector.broadcast %361 : vector<1x128xf32> to vector<32x128xf32>
    %364 = arith.mulf %363, %362 : vector<32x128xf32>
    %365 = vector.extract_strided_slice %30 {offsets = [57, 0], sizes = [1, 128], strides = [1, 1]} : vector<64x128xf32> to vector<1x128xf32>
    %c32_160 = arith.constant 32 : index
    %c0_161 = arith.constant 0 : index
    %366 = vector.load %arg17[%c32_160, %c0_161] : memref<256x128xf32, #tpu.memory_space<vmem>>, vector<32x128xf32>
    %367 = vector.broadcast %365 : vector<1x128xf32> to vector<32x128xf32>
    %368 = arith.mulf %367, %366 : vector<32x128xf32>
    %369 = arith.addf %364, %368 : vector<32x128xf32>
    %370 = vector.extract_strided_slice %30 {offsets = [58, 0], sizes = [1, 128], strides = [1, 1]} : vector<64x128xf32> to vector<1x128xf32>
    %c64_162 = arith.constant 64 : index
    %c0_163 = arith.constant 0 : index
    %371 = vector.load %arg17[%c64_162, %c0_163] : memref<256x128xf32, #tpu.memory_space<vmem>>, vector<32x128xf32>
    %372 = vector.broadcast %370 : vector<1x128xf32> to vector<32x128xf32>
    %373 = arith.mulf %372, %371 : vector<32x128xf32>
    %374 = arith.addf %369, %373 : vector<32x128xf32>
    %375 = vector.extract_strided_slice %30 {offsets = [59, 0], sizes = [1, 128], strides = [1, 1]} : vector<64x128xf32> to vector<1x128xf32>
    %c96_164 = arith.constant 96 : index
    %c0_165 = arith.constant 0 : index
    %376 = vector.load %arg17[%c96_164, %c0_165] : memref<256x128xf32, #tpu.memory_space<vmem>>, vector<32x128xf32>
    %377 = vector.broadcast %375 : vector<1x128xf32> to vector<32x128xf32>
    %378 = arith.mulf %377, %376 : vector<32x128xf32>
    %379 = arith.addf %374, %378 : vector<32x128xf32>
    %380 = vector.extract_strided_slice %30 {offsets = [60, 0], sizes = [1, 128], strides = [1, 1]} : vector<64x128xf32> to vector<1x128xf32>
    %c128_166 = arith.constant 128 : index
    %c0_167 = arith.constant 0 : index
    %381 = vector.load %arg17[%c128_166, %c0_167] : memref<256x128xf32, #tpu.memory_space<vmem>>, vector<32x128xf32>
    %382 = vector.broadcast %380 : vector<1x128xf32> to vector<32x128xf32>
    %383 = arith.mulf %382, %381 : vector<32x128xf32>
    %384 = arith.addf %379, %383 : vector<32x128xf32>
    %385 = vector.extract_strided_slice %30 {offsets = [61, 0], sizes = [1, 128], strides = [1, 1]} : vector<64x128xf32> to vector<1x128xf32>
    %c160_168 = arith.constant 160 : index
    %c0_169 = arith.constant 0 : index
    %386 = vector.load %arg17[%c160_168, %c0_169] : memref<256x128xf32, #tpu.memory_space<vmem>>, vector<32x128xf32>
    %387 = vector.broadcast %385 : vector<1x128xf32> to vector<32x128xf32>
    %388 = arith.mulf %387, %386 : vector<32x128xf32>
    %389 = arith.addf %384, %388 : vector<32x128xf32>
    %390 = vector.extract_strided_slice %30 {offsets = [62, 0], sizes = [1, 128], strides = [1, 1]} : vector<64x128xf32> to vector<1x128xf32>
    %c192_170 = arith.constant 192 : index
    %c0_171 = arith.constant 0 : index
    %391 = vector.load %arg17[%c192_170, %c0_171] : memref<256x128xf32, #tpu.memory_space<vmem>>, vector<32x128xf32>
    %392 = vector.broadcast %390 : vector<1x128xf32> to vector<32x128xf32>
    %393 = arith.mulf %392, %391 : vector<32x128xf32>
    %394 = arith.addf %389, %393 : vector<32x128xf32>
    %395 = vector.extract_strided_slice %30 {offsets = [63, 0], sizes = [1, 128], strides = [1, 1]} : vector<64x128xf32> to vector<1x128xf32>
    %c224_172 = arith.constant 224 : index
    %c0_173 = arith.constant 0 : index
    %396 = vector.load %arg17[%c224_172, %c0_173] : memref<256x128xf32, #tpu.memory_space<vmem>>, vector<32x128xf32>
    %397 = vector.broadcast %395 : vector<1x128xf32> to vector<32x128xf32>
    %398 = arith.mulf %397, %396 : vector<32x128xf32>
    %399 = arith.addf %394, %398 : vector<32x128xf32>
    %400 = vector.broadcast %31 : vector<32x1xf32> to vector<32x128xf32>
    %401 = arith.addf %399, %400 : vector<32x128xf32>
    %cst_174 = arith.constant 0.000000e+00 : f32
    %402 = vector.broadcast %cst_174 : f32 to vector<32x128xf32>
    %403 = arith.cmpf oge, %401, %402 : vector<32x128xf32>
    %cst_175 = arith.constant 0.00999999977 : f32
    %404 = vector.broadcast %cst_175 : f32 to vector<32x128xf32>
    %405 = arith.mulf %404, %401 : vector<32x128xf32>
    %406 = arith.select %403, %401, %405 : vector<32x128xi1>, vector<32x128xf32>
    %c224_176 = arith.constant 224 : index
    %c0_177 = arith.constant 0 : index
    %407 = vector.load %arg18[%c224_176, %c0_177] : memref<256x128xf32, #tpu.memory_space<vmem>>, vector<32x128xf32>
    tpu.vector_store %arg18[%c224_176, %c0_177], %406 {strides = array<i32>} : memref<256x128xf32, #tpu.memory_space<vmem>>, vector<32x128xf32>,
    %c0_178 = arith.constant 0 : index
    %c0_179 = arith.constant 0 : index
    %408 = vector.load %arg10[%c0_178, %c0_179] : memref<256x256xbf16, #tpu.memory_space<vmem>>, vector<256x256xbf16>
    %c0_180 = arith.constant 0 : index
    %c0_181 = arith.constant 0 : index
    %409 = vector.load %arg18[%c0_180, %c0_181] : memref<256x128xf32, #tpu.memory_space<vmem>>, vector<256x128xf32>
    %410 = arith.truncf %409 : vector<256x128xf32> to vector<256x128xbf16>
    %cst_182 = arith.constant dense<0.000000e+00> : vector<256x128xf32>
    %411 = tpu.matmul %408, %410, %cst_182 {dimension_numbers = #tpu.dot_dimension_numbers<[1], [0], [0], [1], [0, 0, 1, 1], [], []>} : vector<256x256xbf16>, vector<256x128xbf16>, vector<256x128xf32> -> vector<256x128xf32>
    %c0_183 = arith.constant 0 : index
    %c0_184 = arith.constant 0 : index
    %412 = vector.load %arg17[%c0_183, %c0_184] : memref<256x128xf32, #tpu.memory_space<vmem>>, vector<256x128xf32>
    tpu.vector_store %arg17[%c0_183, %c0_184], %411 {strides = array<i32>} : memref<256x128xf32, #tpu.memory_space<vmem>>, vector<256x128xf32>,
    %c0_185 = arith.constant 0 : index
    %c0_186 = arith.constant 0 : index
    %413 = vector.load %arg11[%c0_185, %c0_186] : memref<32x1xf32, #tpu.memory_space<vmem>>, vector<32x1xf32>
    %414 = vector.extract_strided_slice %30 {offsets = [0, 0], sizes = [1, 128], strides = [1, 1]} : vector<64x128xf32> to vector<1x128xf32>
    %c0_187 = arith.constant 0 : index
    %c0_188 = arith.constant 0 : index
    %415 = vector.load %arg17[%c0_187, %c0_188] : memref<256x128xf32, #tpu.memory_space<vmem>>, vector<32x128xf32>
    %416 = vector.broadcast %414 : vector<1x128xf32> to vector<32x128xf32>
    %417 = arith.mulf %416, %415 : vector<32x128xf32>
    %418 = vector.extract_strided_slice %30 {offsets = [1, 0], sizes = [1, 128], strides = [1, 1]} : vector<64x128xf32> to vector<1x128xf32>
    %c32_189 = arith.constant 32 : index
    %c0_190 = arith.constant 0 : index
    %419 = vector.load %arg17[%c32_189, %c0_190] : memref<256x128xf32, #tpu.memory_space<vmem>>, vector<32x128xf32>
    %420 = vector.broadcast %418 : vector<1x128xf32> to vector<32x128xf32>
    %421 = arith.mulf %420, %419 : vector<32x128xf32>
    %422 = arith.addf %417, %421 : vector<32x128xf32>
    %423 = vector.extract_strided_slice %30 {offsets = [2, 0], sizes = [1, 128], strides = [1, 1]} : vector<64x128xf32> to vector<1x128xf32>
    %c64_191 = arith.constant 64 : index
    %c0_192 = arith.constant 0 : index
    %424 = vector.load %arg17[%c64_191, %c0_192] : memref<256x128xf32, #tpu.memory_space<vmem>>, vector<32x128xf32>
    %425 = vector.broadcast %423 : vector<1x128xf32> to vector<32x128xf32>
    %426 = arith.mulf %425, %424 : vector<32x128xf32>
    %427 = arith.addf %422, %426 : vector<32x128xf32>
    %428 = vector.extract_strided_slice %30 {offsets = [3, 0], sizes = [1, 128], strides = [1, 1]} : vector<64x128xf32> to vector<1x128xf32>
    %c96_193 = arith.constant 96 : index
    %c0_194 = arith.constant 0 : index
    %429 = vector.load %arg17[%c96_193, %c0_194] : memref<256x128xf32, #tpu.memory_space<vmem>>, vector<32x128xf32>
    %430 = vector.broadcast %428 : vector<1x128xf32> to vector<32x128xf32>
    %431 = arith.mulf %430, %429 : vector<32x128xf32>
    %432 = arith.addf %427, %431 : vector<32x128xf32>
    %433 = vector.extract_strided_slice %30 {offsets = [4, 0], sizes = [1, 128], strides = [1, 1]} : vector<64x128xf32> to vector<1x128xf32>
    %c128_195 = arith.constant 128 : index
    %c0_196 = arith.constant 0 : index
    %434 = vector.load %arg17[%c128_195, %c0_196] : memref<256x128xf32, #tpu.memory_space<vmem>>, vector<32x128xf32>
    %435 = vector.broadcast %433 : vector<1x128xf32> to vector<32x128xf32>
    %436 = arith.mulf %435, %434 : vector<32x128xf32>
    %437 = arith.addf %432, %436 : vector<32x128xf32>
    %438 = vector.extract_strided_slice %30 {offsets = [5, 0], sizes = [1, 128], strides = [1, 1]} : vector<64x128xf32> to vector<1x128xf32>
    %c160_197 = arith.constant 160 : index
    %c0_198 = arith.constant 0 : index
    %439 = vector.load %arg17[%c160_197, %c0_198] : memref<256x128xf32, #tpu.memory_space<vmem>>, vector<32x128xf32>
    %440 = vector.broadcast %438 : vector<1x128xf32> to vector<32x128xf32>
    %441 = arith.mulf %440, %439 : vector<32x128xf32>
    %442 = arith.addf %437, %441 : vector<32x128xf32>
    %443 = vector.extract_strided_slice %30 {offsets = [6, 0], sizes = [1, 128], strides = [1, 1]} : vector<64x128xf32> to vector<1x128xf32>
    %c192_199 = arith.constant 192 : index
    %c0_200 = arith.constant 0 : index
    %444 = vector.load %arg17[%c192_199, %c0_200] : memref<256x128xf32, #tpu.memory_space<vmem>>, vector<32x128xf32>
    %445 = vector.broadcast %443 : vector<1x128xf32> to vector<32x128xf32>
    %446 = arith.mulf %445, %444 : vector<32x128xf32>
    %447 = arith.addf %442, %446 : vector<32x128xf32>
    %448 = vector.extract_strided_slice %30 {offsets = [7, 0], sizes = [1, 128], strides = [1, 1]} : vector<64x128xf32> to vector<1x128xf32>
    %c224_201 = arith.constant 224 : index
    %c0_202 = arith.constant 0 : index
    %449 = vector.load %arg17[%c224_201, %c0_202] : memref<256x128xf32, #tpu.memory_space<vmem>>, vector<32x128xf32>
    %450 = vector.broadcast %448 : vector<1x128xf32> to vector<32x128xf32>
    %451 = arith.mulf %450, %449 : vector<32x128xf32>
    %452 = arith.addf %447, %451 : vector<32x128xf32>
    %453 = vector.broadcast %413 : vector<32x1xf32> to vector<32x128xf32>
    %454 = arith.addf %452, %453 : vector<32x128xf32>
    %cst_203 = arith.constant 0.000000e+00 : f32
    %455 = vector.broadcast %cst_203 : f32 to vector<32x128xf32>
    %456 = arith.cmpf oge, %454, %455 : vector<32x128xf32>
    %cst_204 = arith.constant 0.00999999977 : f32
    %457 = vector.broadcast %cst_204 : f32 to vector<32x128xf32>
    %458 = arith.mulf %457, %454 : vector<32x128xf32>
    %459 = arith.select %456, %454, %458 : vector<32x128xi1>, vector<32x128xf32>
    %c0_205 = arith.constant 0 : index
    %c0_206 = arith.constant 0 : index
    %460 = vector.load %arg18[%c0_205, %c0_206] : memref<256x128xf32, #tpu.memory_space<vmem>>, vector<32x128xf32>
    tpu.vector_store %arg18[%c0_205, %c0_206], %459 {strides = array<i32>} : memref<256x128xf32, #tpu.memory_space<vmem>>, vector<32x128xf32>,
    %461 = vector.extract_strided_slice %30 {offsets = [8, 0], sizes = [1, 128], strides = [1, 1]} : vector<64x128xf32> to vector<1x128xf32>
    %c0_207 = arith.constant 0 : index
    %c0_208 = arith.constant 0 : index
    %462 = vector.load %arg17[%c0_207, %c0_208] : memref<256x128xf32, #tpu.memory_space<vmem>>, vector<32x128xf32>
    %463 = vector.broadcast %461 : vector<1x128xf32> to vector<32x128xf32>
    %464 = arith.mulf %463, %462 : vector<32x128xf32>
    %465 = vector.extract_strided_slice %30 {offsets = [9, 0], sizes = [1, 128], strides = [1, 1]} : vector<64x128xf32> to vector<1x128xf32>
    %c32_209 = arith.constant 32 : index
    %c0_210 = arith.constant 0 : index
    %466 = vector.load %arg17[%c32_209, %c0_210] : memref<256x128xf32, #tpu.memory_space<vmem>>, vector<32x128xf32>
    %467 = vector.broadcast %465 : vector<1x128xf32> to vector<32x128xf32>
    %468 = arith.mulf %467, %466 : vector<32x128xf32>
    %469 = arith.addf %464, %468 : vector<32x128xf32>
    %470 = vector.extract_strided_slice %30 {offsets = [10, 0], sizes = [1, 128], strides = [1, 1]} : vector<64x128xf32> to vector<1x128xf32>
    %c64_211 = arith.constant 64 : index
    %c0_212 = arith.constant 0 : index
    %471 = vector.load %arg17[%c64_211, %c0_212] : memref<256x128xf32, #tpu.memory_space<vmem>>, vector<32x128xf32>
    %472 = vector.broadcast %470 : vector<1x128xf32> to vector<32x128xf32>
    %473 = arith.mulf %472, %471 : vector<32x128xf32>
    %474 = arith.addf %469, %473 : vector<32x128xf32>
    %475 = vector.extract_strided_slice %30 {offsets = [11, 0], sizes = [1, 128], strides = [1, 1]} : vector<64x128xf32> to vector<1x128xf32>
    %c96_213 = arith.constant 96 : index
    %c0_214 = arith.constant 0 : index
    %476 = vector.load %arg17[%c96_213, %c0_214] : memref<256x128xf32, #tpu.memory_space<vmem>>, vector<32x128xf32>
    %477 = vector.broadcast %475 : vector<1x128xf32> to vector<32x128xf32>
    %478 = arith.mulf %477, %476 : vector<32x128xf32>
    %479 = arith.addf %474, %478 : vector<32x128xf32>
    %480 = vector.extract_strided_slice %30 {offsets = [12, 0], sizes = [1, 128], strides = [1, 1]} : vector<64x128xf32> to vector<1x128xf32>
    %c128_215 = arith.constant 128 : index
    %c0_216 = arith.constant 0 : index
    %481 = vector.load %arg17[%c128_215, %c0_216] : memref<256x128xf32, #tpu.memory_space<vmem>>, vector<32x128xf32>
    %482 = vector.broadcast %480 : vector<1x128xf32> to vector<32x128xf32>
    %483 = arith.mulf %482, %481 : vector<32x128xf32>
    %484 = arith.addf %479, %483 : vector<32x128xf32>
    %485 = vector.extract_strided_slice %30 {offsets = [13, 0], sizes = [1, 128], strides = [1, 1]} : vector<64x128xf32> to vector<1x128xf32>
    %c160_217 = arith.constant 160 : index
    %c0_218 = arith.constant 0 : index
    %486 = vector.load %arg17[%c160_217, %c0_218] : memref<256x128xf32, #tpu.memory_space<vmem>>, vector<32x128xf32>
    %487 = vector.broadcast %485 : vector<1x128xf32> to vector<32x128xf32>
    %488 = arith.mulf %487, %486 : vector<32x128xf32>
    %489 = arith.addf %484, %488 : vector<32x128xf32>
    %490 = vector.extract_strided_slice %30 {offsets = [14, 0], sizes = [1, 128], strides = [1, 1]} : vector<64x128xf32> to vector<1x128xf32>
    %c192_219 = arith.constant 192 : index
    %c0_220 = arith.constant 0 : index
    %491 = vector.load %arg17[%c192_219, %c0_220] : memref<256x128xf32, #tpu.memory_space<vmem>>, vector<32x128xf32>
    %492 = vector.broadcast %490 : vector<1x128xf32> to vector<32x128xf32>
    %493 = arith.mulf %492, %491 : vector<32x128xf32>
    %494 = arith.addf %489, %493 : vector<32x128xf32>
    %495 = vector.extract_strided_slice %30 {offsets = [15, 0], sizes = [1, 128], strides = [1, 1]} : vector<64x128xf32> to vector<1x128xf32>
    %c224_221 = arith.constant 224 : index
    %c0_222 = arith.constant 0 : index
    %496 = vector.load %arg17[%c224_221, %c0_222] : memref<256x128xf32, #tpu.memory_space<vmem>>, vector<32x128xf32>
    %497 = vector.broadcast %495 : vector<1x128xf32> to vector<32x128xf32>
    %498 = arith.mulf %497, %496 : vector<32x128xf32>
    %499 = arith.addf %494, %498 : vector<32x128xf32>
    %500 = vector.broadcast %413 : vector<32x1xf32> to vector<32x128xf32>
    %501 = arith.addf %499, %500 : vector<32x128xf32>
    %cst_223 = arith.constant 0.000000e+00 : f32
    %502 = vector.broadcast %cst_223 : f32 to vector<32x128xf32>
    %503 = arith.cmpf oge, %501, %502 : vector<32x128xf32>
    %cst_224 = arith.constant 0.00999999977 : f32
    %504 = vector.broadcast %cst_224 : f32 to vector<32x128xf32>
    %505 = arith.mulf %504, %501 : vector<32x128xf32>
    %506 = arith.select %503, %501, %505 : vector<32x128xi1>, vector<32x128xf32>
    %c32_225 = arith.constant 32 : index
    %c0_226 = arith.constant 0 : index
    %507 = vector.load %arg18[%c32_225, %c0_226] : memref<256x128xf32, #tpu.memory_space<vmem>>, vector<32x128xf32>
    tpu.vector_store %arg18[%c32_225, %c0_226], %506 {strides = array<i32>} : memref<256x128xf32, #tpu.memory_space<vmem>>, vector<32x128xf32>,
    %508 = vector.extract_strided_slice %30 {offsets = [16, 0], sizes = [1, 128], strides = [1, 1]} : vector<64x128xf32> to vector<1x128xf32>
    %c0_227 = arith.constant 0 : index
    %c0_228 = arith.constant 0 : index
    %509 = vector.load %arg17[%c0_227, %c0_228] : memref<256x128xf32, #tpu.memory_space<vmem>>, vector<32x128xf32>
    %510 = vector.broadcast %508 : vector<1x128xf32> to vector<32x128xf32>
    %511 = arith.mulf %510, %509 : vector<32x128xf32>
    %512 = vector.extract_strided_slice %30 {offsets = [17, 0], sizes = [1, 128], strides = [1, 1]} : vector<64x128xf32> to vector<1x128xf32>
    %c32_229 = arith.constant 32 : index
    %c0_230 = arith.constant 0 : index
    %513 = vector.load %arg17[%c32_229, %c0_230] : memref<256x128xf32, #tpu.memory_space<vmem>>, vector<32x128xf32>
    %514 = vector.broadcast %512 : vector<1x128xf32> to vector<32x128xf32>
    %515 = arith.mulf %514, %513 : vector<32x128xf32>
    %516 = arith.addf %511, %515 : vector<32x128xf32>
    %517 = vector.extract_strided_slice %30 {offsets = [18, 0], sizes = [1, 128], strides = [1, 1]} : vector<64x128xf32> to vector<1x128xf32>
    %c64_231 = arith.constant 64 : index
    %c0_232 = arith.constant 0 : index
    %518 = vector.load %arg17[%c64_231, %c0_232] : memref<256x128xf32, #tpu.memory_space<vmem>>, vector<32x128xf32>
    %519 = vector.broadcast %517 : vector<1x128xf32> to vector<32x128xf32>
    %520 = arith.mulf %519, %518 : vector<32x128xf32>
    %521 = arith.addf %516, %520 : vector<32x128xf32>
    %522 = vector.extract_strided_slice %30 {offsets = [19, 0], sizes = [1, 128], strides = [1, 1]} : vector<64x128xf32> to vector<1x128xf32>
    %c96_233 = arith.constant 96 : index
    %c0_234 = arith.constant 0 : index
    %523 = vector.load %arg17[%c96_233, %c0_234] : memref<256x128xf32, #tpu.memory_space<vmem>>, vector<32x128xf32>
    %524 = vector.broadcast %522 : vector<1x128xf32> to vector<32x128xf32>
    %525 = arith.mulf %524, %523 : vector<32x128xf32>
    %526 = arith.addf %521, %525 : vector<32x128xf32>
    %527 = vector.extract_strided_slice %30 {offsets = [20, 0], sizes = [1, 128], strides = [1, 1]} : vector<64x128xf32> to vector<1x128xf32>
    %c128_235 = arith.constant 128 : index
    %c0_236 = arith.constant 0 : index
    %528 = vector.load %arg17[%c128_235, %c0_236] : memref<256x128xf32, #tpu.memory_space<vmem>>, vector<32x128xf32>
    %529 = vector.broadcast %527 : vector<1x128xf32> to vector<32x128xf32>
    %530 = arith.mulf %529, %528 : vector<32x128xf32>
    %531 = arith.addf %526, %530 : vector<32x128xf32>
    %532 = vector.extract_strided_slice %30 {offsets = [21, 0], sizes = [1, 128], strides = [1, 1]} : vector<64x128xf32> to vector<1x128xf32>
    %c160_237 = arith.constant 160 : index
    %c0_238 = arith.constant 0 : index
    %533 = vector.load %arg17[%c160_237, %c0_238] : memref<256x128xf32, #tpu.memory_space<vmem>>, vector<32x128xf32>
    %534 = vector.broadcast %532 : vector<1x128xf32> to vector<32x128xf32>
    %535 = arith.mulf %534, %533 : vector<32x128xf32>
    %536 = arith.addf %531, %535 : vector<32x128xf32>
    %537 = vector.extract_strided_slice %30 {offsets = [22, 0], sizes = [1, 128], strides = [1, 1]} : vector<64x128xf32> to vector<1x128xf32>
    %c192_239 = arith.constant 192 : index
    %c0_240 = arith.constant 0 : index
    %538 = vector.load %arg17[%c192_239, %c0_240] : memref<256x128xf32, #tpu.memory_space<vmem>>, vector<32x128xf32>
    %539 = vector.broadcast %537 : vector<1x128xf32> to vector<32x128xf32>
    %540 = arith.mulf %539, %538 : vector<32x128xf32>
    %541 = arith.addf %536, %540 : vector<32x128xf32>
    %542 = vector.extract_strided_slice %30 {offsets = [23, 0], sizes = [1, 128], strides = [1, 1]} : vector<64x128xf32> to vector<1x128xf32>
    %c224_241 = arith.constant 224 : index
    %c0_242 = arith.constant 0 : index
    %543 = vector.load %arg17[%c224_241, %c0_242] : memref<256x128xf32, #tpu.memory_space<vmem>>, vector<32x128xf32>
    %544 = vector.broadcast %542 : vector<1x128xf32> to vector<32x128xf32>
    %545 = arith.mulf %544, %543 : vector<32x128xf32>
    %546 = arith.addf %541, %545 : vector<32x128xf32>
    %547 = vector.broadcast %413 : vector<32x1xf32> to vector<32x128xf32>
    %548 = arith.addf %546, %547 : vector<32x128xf32>
    %cst_243 = arith.constant 0.000000e+00 : f32
    %549 = vector.broadcast %cst_243 : f32 to vector<32x128xf32>
    %550 = arith.cmpf oge, %548, %549 : vector<32x128xf32>
    %cst_244 = arith.constant 0.00999999977 : f32
    %551 = vector.broadcast %cst_244 : f32 to vector<32x128xf32>
    %552 = arith.mulf %551, %548 : vector<32x128xf32>
    %553 = arith.select %550, %548, %552 : vector<32x128xi1>, vector<32x128xf32>
    %c64_245 = arith.constant 64 : index
    %c0_246 = arith.constant 0 : index
    %554 = vector.load %arg18[%c64_245, %c0_246] : memref<256x128xf32, #tpu.memory_space<vmem>>, vector<32x128xf32>
    tpu.vector_store %arg18[%c64_245, %c0_246], %553 {strides = array<i32>} : memref<256x128xf32, #tpu.memory_space<vmem>>, vector<32x128xf32>,
    %555 = vector.extract_strided_slice %30 {offsets = [24, 0], sizes = [1, 128], strides = [1, 1]} : vector<64x128xf32> to vector<1x128xf32>
    %c0_247 = arith.constant 0 : index
    %c0_248 = arith.constant 0 : index
    %556 = vector.load %arg17[%c0_247, %c0_248] : memref<256x128xf32, #tpu.memory_space<vmem>>, vector<32x128xf32>
    %557 = vector.broadcast %555 : vector<1x128xf32> to vector<32x128xf32>
    %558 = arith.mulf %557, %556 : vector<32x128xf32>
    %559 = vector.extract_strided_slice %30 {offsets = [25, 0], sizes = [1, 128], strides = [1, 1]} : vector<64x128xf32> to vector<1x128xf32>
    %c32_249 = arith.constant 32 : index
    %c0_250 = arith.constant 0 : index
    %560 = vector.load %arg17[%c32_249, %c0_250] : memref<256x128xf32, #tpu.memory_space<vmem>>, vector<32x128xf32>
    %561 = vector.broadcast %559 : vector<1x128xf32> to vector<32x128xf32>
    %562 = arith.mulf %561, %560 : vector<32x128xf32>
    %563 = arith.addf %558, %562 : vector<32x128xf32>
    %564 = vector.extract_strided_slice %30 {offsets = [26, 0], sizes = [1, 128], strides = [1, 1]} : vector<64x128xf32> to vector<1x128xf32>
    %c64_251 = arith.constant 64 : index
    %c0_252 = arith.constant 0 : index
    %565 = vector.load %arg17[%c64_251, %c0_252] : memref<256x128xf32, #tpu.memory_space<vmem>>, vector<32x128xf32>
    %566 = vector.broadcast %564 : vector<1x128xf32> to vector<32x128xf32>
    %567 = arith.mulf %566, %565 : vector<32x128xf32>
    %568 = arith.addf %563, %567 : vector<32x128xf32>
    %569 = vector.extract_strided_slice %30 {offsets = [27, 0], sizes = [1, 128], strides = [1, 1]} : vector<64x128xf32> to vector<1x128xf32>
    %c96_253 = arith.constant 96 : index
    %c0_254 = arith.constant 0 : index
    %570 = vector.load %arg17[%c96_253, %c0_254] : memref<256x128xf32, #tpu.memory_space<vmem>>, vector<32x128xf32>
    %571 = vector.broadcast %569 : vector<1x128xf32> to vector<32x128xf32>
    %572 = arith.mulf %571, %570 : vector<32x128xf32>
    %573 = arith.addf %568, %572 : vector<32x128xf32>
    %574 = vector.extract_strided_slice %30 {offsets = [28, 0], sizes = [1, 128], strides = [1, 1]} : vector<64x128xf32> to vector<1x128xf32>
    %c128_255 = arith.constant 128 : index
    %c0_256 = arith.constant 0 : index
    %575 = vector.load %arg17[%c128_255, %c0_256] : memref<256x128xf32, #tpu.memory_space<vmem>>, vector<32x128xf32>
    %576 = vector.broadcast %574 : vector<1x128xf32> to vector<32x128xf32>
    %577 = arith.mulf %576, %575 : vector<32x128xf32>
    %578 = arith.addf %573, %577 : vector<32x128xf32>
    %579 = vector.extract_strided_slice %30 {offsets = [29, 0], sizes = [1, 128], strides = [1, 1]} : vector<64x128xf32> to vector<1x128xf32>
    %c160_257 = arith.constant 160 : index
    %c0_258 = arith.constant 0 : index
    %580 = vector.load %arg17[%c160_257, %c0_258] : memref<256x128xf32, #tpu.memory_space<vmem>>, vector<32x128xf32>
    %581 = vector.broadcast %579 : vector<1x128xf32> to vector<32x128xf32>
    %582 = arith.mulf %581, %580 : vector<32x128xf32>
    %583 = arith.addf %578, %582 : vector<32x128xf32>
    %584 = vector.extract_strided_slice %30 {offsets = [30, 0], sizes = [1, 128], strides = [1, 1]} : vector<64x128xf32> to vector<1x128xf32>
    %c192_259 = arith.constant 192 : index
    %c0_260 = arith.constant 0 : index
    %585 = vector.load %arg17[%c192_259, %c0_260] : memref<256x128xf32, #tpu.memory_space<vmem>>, vector<32x128xf32>
    %586 = vector.broadcast %584 : vector<1x128xf32> to vector<32x128xf32>
    %587 = arith.mulf %586, %585 : vector<32x128xf32>
    %588 = arith.addf %583, %587 : vector<32x128xf32>
    %589 = vector.extract_strided_slice %30 {offsets = [31, 0], sizes = [1, 128], strides = [1, 1]} : vector<64x128xf32> to vector<1x128xf32>
    %c224_261 = arith.constant 224 : index
    %c0_262 = arith.constant 0 : index
    %590 = vector.load %arg17[%c224_261, %c0_262] : memref<256x128xf32, #tpu.memory_space<vmem>>, vector<32x128xf32>
    %591 = vector.broadcast %589 : vector<1x128xf32> to vector<32x128xf32>
    %592 = arith.mulf %591, %590 : vector<32x128xf32>
    %593 = arith.addf %588, %592 : vector<32x128xf32>
    %594 = vector.broadcast %413 : vector<32x1xf32> to vector<32x128xf32>
    %595 = arith.addf %593, %594 : vector<32x128xf32>
    %cst_263 = arith.constant 0.000000e+00 : f32
    %596 = vector.broadcast %cst_263 : f32 to vector<32x128xf32>
    %597 = arith.cmpf oge, %595, %596 : vector<32x128xf32>
    %cst_264 = arith.constant 0.00999999977 : f32
    %598 = vector.broadcast %cst_264 : f32 to vector<32x128xf32>
    %599 = arith.mulf %598, %595 : vector<32x128xf32>
    %600 = arith.select %597, %595, %599 : vector<32x128xi1>, vector<32x128xf32>
    %c96_265 = arith.constant 96 : index
    %c0_266 = arith.constant 0 : index
    %601 = vector.load %arg18[%c96_265, %c0_266] : memref<256x128xf32, #tpu.memory_space<vmem>>, vector<32x128xf32>
    tpu.vector_store %arg18[%c96_265, %c0_266], %600 {strides = array<i32>} : memref<256x128xf32, #tpu.memory_space<vmem>>, vector<32x128xf32>,
    %602 = vector.extract_strided_slice %30 {offsets = [32, 0], sizes = [1, 128], strides = [1, 1]} : vector<64x128xf32> to vector<1x128xf32>
    %c0_267 = arith.constant 0 : index
    %c0_268 = arith.constant 0 : index
    %603 = vector.load %arg17[%c0_267, %c0_268] : memref<256x128xf32, #tpu.memory_space<vmem>>, vector<32x128xf32>
    %604 = vector.broadcast %602 : vector<1x128xf32> to vector<32x128xf32>
    %605 = arith.mulf %604, %603 : vector<32x128xf32>
    %606 = vector.extract_strided_slice %30 {offsets = [33, 0], sizes = [1, 128], strides = [1, 1]} : vector<64x128xf32> to vector<1x128xf32>
    %c32_269 = arith.constant 32 : index
    %c0_270 = arith.constant 0 : index
    %607 = vector.load %arg17[%c32_269, %c0_270] : memref<256x128xf32, #tpu.memory_space<vmem>>, vector<32x128xf32>
    %608 = vector.broadcast %606 : vector<1x128xf32> to vector<32x128xf32>
    %609 = arith.mulf %608, %607 : vector<32x128xf32>
    %610 = arith.addf %605, %609 : vector<32x128xf32>
    %611 = vector.extract_strided_slice %30 {offsets = [34, 0], sizes = [1, 128], strides = [1, 1]} : vector<64x128xf32> to vector<1x128xf32>
    %c64_271 = arith.constant 64 : index
    %c0_272 = arith.constant 0 : index
    %612 = vector.load %arg17[%c64_271, %c0_272] : memref<256x128xf32, #tpu.memory_space<vmem>>, vector<32x128xf32>
    %613 = vector.broadcast %611 : vector<1x128xf32> to vector<32x128xf32>
    %614 = arith.mulf %613, %612 : vector<32x128xf32>
    %615 = arith.addf %610, %614 : vector<32x128xf32>
    %616 = vector.extract_strided_slice %30 {offsets = [35, 0], sizes = [1, 128], strides = [1, 1]} : vector<64x128xf32> to vector<1x128xf32>
    %c96_273 = arith.constant 96 : index
    %c0_274 = arith.constant 0 : index
    %617 = vector.load %arg17[%c96_273, %c0_274] : memref<256x128xf32, #tpu.memory_space<vmem>>, vector<32x128xf32>
    %618 = vector.broadcast %616 : vector<1x128xf32> to vector<32x128xf32>
    %619 = arith.mulf %618, %617 : vector<32x128xf32>
    %620 = arith.addf %615, %619 : vector<32x128xf32>
    %621 = vector.extract_strided_slice %30 {offsets = [36, 0], sizes = [1, 128], strides = [1, 1]} : vector<64x128xf32> to vector<1x128xf32>
    %c128_275 = arith.constant 128 : index
    %c0_276 = arith.constant 0 : index
    %622 = vector.load %arg17[%c128_275, %c0_276] : memref<256x128xf32, #tpu.memory_space<vmem>>, vector<32x128xf32>
    %623 = vector.broadcast %621 : vector<1x128xf32> to vector<32x128xf32>
    %624 = arith.mulf %623, %622 : vector<32x128xf32>
    %625 = arith.addf %620, %624 : vector<32x128xf32>
    %626 = vector.extract_strided_slice %30 {offsets = [37, 0], sizes = [1, 128], strides = [1, 1]} : vector<64x128xf32> to vector<1x128xf32>
    %c160_277 = arith.constant 160 : index
    %c0_278 = arith.constant 0 : index
    %627 = vector.load %arg17[%c160_277, %c0_278] : memref<256x128xf32, #tpu.memory_space<vmem>>, vector<32x128xf32>
    %628 = vector.broadcast %626 : vector<1x128xf32> to vector<32x128xf32>
    %629 = arith.mulf %628, %627 : vector<32x128xf32>
    %630 = arith.addf %625, %629 : vector<32x128xf32>
    %631 = vector.extract_strided_slice %30 {offsets = [38, 0], sizes = [1, 128], strides = [1, 1]} : vector<64x128xf32> to vector<1x128xf32>
    %c192_279 = arith.constant 192 : index
    %c0_280 = arith.constant 0 : index
    %632 = vector.load %arg17[%c192_279, %c0_280] : memref<256x128xf32, #tpu.memory_space<vmem>>, vector<32x128xf32>
    %633 = vector.broadcast %631 : vector<1x128xf32> to vector<32x128xf32>
    %634 = arith.mulf %633, %632 : vector<32x128xf32>
    %635 = arith.addf %630, %634 : vector<32x128xf32>
    %636 = vector.extract_strided_slice %30 {offsets = [39, 0], sizes = [1, 128], strides = [1, 1]} : vector<64x128xf32> to vector<1x128xf32>
    %c224_281 = arith.constant 224 : index
    %c0_282 = arith.constant 0 : index
    %637 = vector.load %arg17[%c224_281, %c0_282] : memref<256x128xf32, #tpu.memory_space<vmem>>, vector<32x128xf32>
    %638 = vector.broadcast %636 : vector<1x128xf32> to vector<32x128xf32>
    %639 = arith.mulf %638, %637 : vector<32x128xf32>
    %640 = arith.addf %635, %639 : vector<32x128xf32>
    %641 = vector.broadcast %413 : vector<32x1xf32> to vector<32x128xf32>
    %642 = arith.addf %640, %641 : vector<32x128xf32>
    %cst_283 = arith.constant 0.000000e+00 : f32
    %643 = vector.broadcast %cst_283 : f32 to vector<32x128xf32>
    %644 = arith.cmpf oge, %642, %643 : vector<32x128xf32>
    %cst_284 = arith.constant 0.00999999977 : f32
    %645 = vector.broadcast %cst_284 : f32 to vector<32x128xf32>
    %646 = arith.mulf %645, %642 : vector<32x128xf32>
    %647 = arith.select %644, %642, %646 : vector<32x128xi1>, vector<32x128xf32>
    %c128_285 = arith.constant 128 : index
    %c0_286 = arith.constant 0 : index
    %648 = vector.load %arg18[%c128_285, %c0_286] : memref<256x128xf32, #tpu.memory_space<vmem>>, vector<32x128xf32>
    tpu.vector_store %arg18[%c128_285, %c0_286], %647 {strides = array<i32>} : memref<256x128xf32, #tpu.memory_space<vmem>>, vector<32x128xf32>,
    %649 = vector.extract_strided_slice %30 {offsets = [40, 0], sizes = [1, 128], strides = [1, 1]} : vector<64x128xf32> to vector<1x128xf32>
    %c0_287 = arith.constant 0 : index
    %c0_288 = arith.constant 0 : index
    %650 = vector.load %arg17[%c0_287, %c0_288] : memref<256x128xf32, #tpu.memory_space<vmem>>, vector<32x128xf32>
    %651 = vector.broadcast %649 : vector<1x128xf32> to vector<32x128xf32>
    %652 = arith.mulf %651, %650 : vector<32x128xf32>
    %653 = vector.extract_strided_slice %30 {offsets = [41, 0], sizes = [1, 128], strides = [1, 1]} : vector<64x128xf32> to vector<1x128xf32>
    %c32_289 = arith.constant 32 : index
    %c0_290 = arith.constant 0 : index
    %654 = vector.load %arg17[%c32_289, %c0_290] : memref<256x128xf32, #tpu.memory_space<vmem>>, vector<32x128xf32>
    %655 = vector.broadcast %653 : vector<1x128xf32> to vector<32x128xf32>
    %656 = arith.mulf %655, %654 : vector<32x128xf32>
    %657 = arith.addf %652, %656 : vector<32x128xf32>
    %658 = vector.extract_strided_slice %30 {offsets = [42, 0], sizes = [1, 128], strides = [1, 1]} : vector<64x128xf32> to vector<1x128xf32>
    %c64_291 = arith.constant 64 : index
    %c0_292 = arith.constant 0 : index
    %659 = vector.load %arg17[%c64_291, %c0_292] : memref<256x128xf32, #tpu.memory_space<vmem>>, vector<32x128xf32>
    %660 = vector.broadcast %658 : vector<1x128xf32> to vector<32x128xf32>
    %661 = arith.mulf %660, %659 : vector<32x128xf32>
    %662 = arith.addf %657, %661 : vector<32x128xf32>
    %663 = vector.extract_strided_slice %30 {offsets = [43, 0], sizes = [1, 128], strides = [1, 1]} : vector<64x128xf32> to vector<1x128xf32>
    %c96_293 = arith.constant 96 : index
    %c0_294 = arith.constant 0 : index
    %664 = vector.load %arg17[%c96_293, %c0_294] : memref<256x128xf32, #tpu.memory_space<vmem>>, vector<32x128xf32>
    %665 = vector.broadcast %663 : vector<1x128xf32> to vector<32x128xf32>
    %666 = arith.mulf %665, %664 : vector<32x128xf32>
    %667 = arith.addf %662, %666 : vector<32x128xf32>
    %668 = vector.extract_strided_slice %30 {offsets = [44, 0], sizes = [1, 128], strides = [1, 1]} : vector<64x128xf32> to vector<1x128xf32>
    %c128_295 = arith.constant 128 : index
    %c0_296 = arith.constant 0 : index
    %669 = vector.load %arg17[%c128_295, %c0_296] : memref<256x128xf32, #tpu.memory_space<vmem>>, vector<32x128xf32>
    %670 = vector.broadcast %668 : vector<1x128xf32> to vector<32x128xf32>
    %671 = arith.mulf %670, %669 : vector<32x128xf32>
    %672 = arith.addf %667, %671 : vector<32x128xf32>
    %673 = vector.extract_strided_slice %30 {offsets = [45, 0], sizes = [1, 128], strides = [1, 1]} : vector<64x128xf32> to vector<1x128xf32>
    %c160_297 = arith.constant 160 : index
    %c0_298 = arith.constant 0 : index
    %674 = vector.load %arg17[%c160_297, %c0_298] : memref<256x128xf32, #tpu.memory_space<vmem>>, vector<32x128xf32>
    %675 = vector.broadcast %673 : vector<1x128xf32> to vector<32x128xf32>
    %676 = arith.mulf %675, %674 : vector<32x128xf32>
    %677 = arith.addf %672, %676 : vector<32x128xf32>
    %678 = vector.extract_strided_slice %30 {offsets = [46, 0], sizes = [1, 128], strides = [1, 1]} : vector<64x128xf32> to vector<1x128xf32>
    %c192_299 = arith.constant 192 : index
    %c0_300 = arith.constant 0 : index
    %679 = vector.load %arg17[%c192_299, %c0_300] : memref<256x128xf32, #tpu.memory_space<vmem>>, vector<32x128xf32>
    %680 = vector.broadcast %678 : vector<1x128xf32> to vector<32x128xf32>
    %681 = arith.mulf %680, %679 : vector<32x128xf32>
    %682 = arith.addf %677, %681 : vector<32x128xf32>
    %683 = vector.extract_strided_slice %30 {offsets = [47, 0], sizes = [1, 128], strides = [1, 1]} : vector<64x128xf32> to vector<1x128xf32>
    %c224_301 = arith.constant 224 : index
    %c0_302 = arith.constant 0 : index
    %684 = vector.load %arg17[%c224_301, %c0_302] : memref<256x128xf32, #tpu.memory_space<vmem>>, vector<32x128xf32>
    %685 = vector.broadcast %683 : vector<1x128xf32> to vector<32x128xf32>
    %686 = arith.mulf %685, %684 : vector<32x128xf32>
    %687 = arith.addf %682, %686 : vector<32x128xf32>
    %688 = vector.broadcast %413 : vector<32x1xf32> to vector<32x128xf32>
    %689 = arith.addf %687, %688 : vector<32x128xf32>
    %cst_303 = arith.constant 0.000000e+00 : f32
    %690 = vector.broadcast %cst_303 : f32 to vector<32x128xf32>
    %691 = arith.cmpf oge, %689, %690 : vector<32x128xf32>
    %cst_304 = arith.constant 0.00999999977 : f32
    %692 = vector.broadcast %cst_304 : f32 to vector<32x128xf32>
    %693 = arith.mulf %692, %689 : vector<32x128xf32>
    %694 = arith.select %691, %689, %693 : vector<32x128xi1>, vector<32x128xf32>
    %c160_305 = arith.constant 160 : index
    %c0_306 = arith.constant 0 : index
    %695 = vector.load %arg18[%c160_305, %c0_306] : memref<256x128xf32, #tpu.memory_space<vmem>>, vector<32x128xf32>
    tpu.vector_store %arg18[%c160_305, %c0_306], %694 {strides = array<i32>} : memref<256x128xf32, #tpu.memory_space<vmem>>, vector<32x128xf32>,
    %696 = vector.extract_strided_slice %30 {offsets = [48, 0], sizes = [1, 128], strides = [1, 1]} : vector<64x128xf32> to vector<1x128xf32>
    %c0_307 = arith.constant 0 : index
    %c0_308 = arith.constant 0 : index
    %697 = vector.load %arg17[%c0_307, %c0_308] : memref<256x128xf32, #tpu.memory_space<vmem>>, vector<32x128xf32>
    %698 = vector.broadcast %696 : vector<1x128xf32> to vector<32x128xf32>
    %699 = arith.mulf %698, %697 : vector<32x128xf32>
    %700 = vector.extract_strided_slice %30 {offsets = [49, 0], sizes = [1, 128], strides = [1, 1]} : vector<64x128xf32> to vector<1x128xf32>
    %c32_309 = arith.constant 32 : index
    %c0_310 = arith.constant 0 : index
    %701 = vector.load %arg17[%c32_309, %c0_310] : memref<256x128xf32, #tpu.memory_space<vmem>>, vector<32x128xf32>
    %702 = vector.broadcast %700 : vector<1x128xf32> to vector<32x128xf32>
    %703 = arith.mulf %702, %701 : vector<32x128xf32>
    %704 = arith.addf %699, %703 : vector<32x128xf32>
    %705 = vector.extract_strided_slice %30 {offsets = [50, 0], sizes = [1, 128], strides = [1, 1]} : vector<64x128xf32> to vector<1x128xf32>
    %c64_311 = arith.constant 64 : index
    %c0_312 = arith.constant 0 : index
    %706 = vector.load %arg17[%c64_311, %c0_312] : memref<256x128xf32, #tpu.memory_space<vmem>>, vector<32x128xf32>
    %707 = vector.broadcast %705 : vector<1x128xf32> to vector<32x128xf32>
    %708 = arith.mulf %707, %706 : vector<32x128xf32>
    %709 = arith.addf %704, %708 : vector<32x128xf32>
    %710 = vector.extract_strided_slice %30 {offsets = [51, 0], sizes = [1, 128], strides = [1, 1]} : vector<64x128xf32> to vector<1x128xf32>
    %c96_313 = arith.constant 96 : index
    %c0_314 = arith.constant 0 : index
    %711 = vector.load %arg17[%c96_313, %c0_314] : memref<256x128xf32, #tpu.memory_space<vmem>>, vector<32x128xf32>
    %712 = vector.broadcast %710 : vector<1x128xf32> to vector<32x128xf32>
    %713 = arith.mulf %712, %711 : vector<32x128xf32>
    %714 = arith.addf %709, %713 : vector<32x128xf32>
    %715 = vector.extract_strided_slice %30 {offsets = [52, 0], sizes = [1, 128], strides = [1, 1]} : vector<64x128xf32> to vector<1x128xf32>
    %c128_315 = arith.constant 128 : index
    %c0_316 = arith.constant 0 : index
    %716 = vector.load %arg17[%c128_315, %c0_316] : memref<256x128xf32, #tpu.memory_space<vmem>>, vector<32x128xf32>
    %717 = vector.broadcast %715 : vector<1x128xf32> to vector<32x128xf32>
    %718 = arith.mulf %717, %716 : vector<32x128xf32>
    %719 = arith.addf %714, %718 : vector<32x128xf32>
    %720 = vector.extract_strided_slice %30 {offsets = [53, 0], sizes = [1, 128], strides = [1, 1]} : vector<64x128xf32> to vector<1x128xf32>
    %c160_317 = arith.constant 160 : index
    %c0_318 = arith.constant 0 : index
    %721 = vector.load %arg17[%c160_317, %c0_318] : memref<256x128xf32, #tpu.memory_space<vmem>>, vector<32x128xf32>
    %722 = vector.broadcast %720 : vector<1x128xf32> to vector<32x128xf32>
    %723 = arith.mulf %722, %721 : vector<32x128xf32>
    %724 = arith.addf %719, %723 : vector<32x128xf32>
    %725 = vector.extract_strided_slice %30 {offsets = [54, 0], sizes = [1, 128], strides = [1, 1]} : vector<64x128xf32> to vector<1x128xf32>
    %c192_319 = arith.constant 192 : index
    %c0_320 = arith.constant 0 : index
    %726 = vector.load %arg17[%c192_319, %c0_320] : memref<256x128xf32, #tpu.memory_space<vmem>>, vector<32x128xf32>
    %727 = vector.broadcast %725 : vector<1x128xf32> to vector<32x128xf32>
    %728 = arith.mulf %727, %726 : vector<32x128xf32>
    %729 = arith.addf %724, %728 : vector<32x128xf32>
    %730 = vector.extract_strided_slice %30 {offsets = [55, 0], sizes = [1, 128], strides = [1, 1]} : vector<64x128xf32> to vector<1x128xf32>
    %c224_321 = arith.constant 224 : index
    %c0_322 = arith.constant 0 : index
    %731 = vector.load %arg17[%c224_321, %c0_322] : memref<256x128xf32, #tpu.memory_space<vmem>>, vector<32x128xf32>
    %732 = vector.broadcast %730 : vector<1x128xf32> to vector<32x128xf32>
    %733 = arith.mulf %732, %731 : vector<32x128xf32>
    %734 = arith.addf %729, %733 : vector<32x128xf32>
    %735 = vector.broadcast %413 : vector<32x1xf32> to vector<32x128xf32>
    %736 = arith.addf %734, %735 : vector<32x128xf32>
    %cst_323 = arith.constant 0.000000e+00 : f32
    %737 = vector.broadcast %cst_323 : f32 to vector<32x128xf32>
    %738 = arith.cmpf oge, %736, %737 : vector<32x128xf32>
    %cst_324 = arith.constant 0.00999999977 : f32
    %739 = vector.broadcast %cst_324 : f32 to vector<32x128xf32>
    %740 = arith.mulf %739, %736 : vector<32x128xf32>
    %741 = arith.select %738, %736, %740 : vector<32x128xi1>, vector<32x128xf32>
    %c192_325 = arith.constant 192 : index
    %c0_326 = arith.constant 0 : index
    %742 = vector.load %arg18[%c192_325, %c0_326] : memref<256x128xf32, #tpu.memory_space<vmem>>, vector<32x128xf32>
    tpu.vector_store %arg18[%c192_325, %c0_326], %741 {strides = array<i32>} : memref<256x128xf32, #tpu.memory_space<vmem>>, vector<32x128xf32>,
    %743 = vector.extract_strided_slice %30 {offsets = [56, 0], sizes = [1, 128], strides = [1, 1]} : vector<64x128xf32> to vector<1x128xf32>
    %c0_327 = arith.constant 0 : index
    %c0_328 = arith.constant 0 : index
    %744 = vector.load %arg17[%c0_327, %c0_328] : memref<256x128xf32, #tpu.memory_space<vmem>>, vector<32x128xf32>
    %745 = vector.broadcast %743 : vector<1x128xf32> to vector<32x128xf32>
    %746 = arith.mulf %745, %744 : vector<32x128xf32>
    %747 = vector.extract_strided_slice %30 {offsets = [57, 0], sizes = [1, 128], strides = [1, 1]} : vector<64x128xf32> to vector<1x128xf32>
    %c32_329 = arith.constant 32 : index
    %c0_330 = arith.constant 0 : index
    %748 = vector.load %arg17[%c32_329, %c0_330] : memref<256x128xf32, #tpu.memory_space<vmem>>, vector<32x128xf32>
    %749 = vector.broadcast %747 : vector<1x128xf32> to vector<32x128xf32>
    %750 = arith.mulf %749, %748 : vector<32x128xf32>
    %751 = arith.addf %746, %750 : vector<32x128xf32>
    %752 = vector.extract_strided_slice %30 {offsets = [58, 0], sizes = [1, 128], strides = [1, 1]} : vector<64x128xf32> to vector<1x128xf32>
    %c64_331 = arith.constant 64 : index
    %c0_332 = arith.constant 0 : index
    %753 = vector.load %arg17[%c64_331, %c0_332] : memref<256x128xf32, #tpu.memory_space<vmem>>, vector<32x128xf32>
    %754 = vector.broadcast %752 : vector<1x128xf32> to vector<32x128xf32>
    %755 = arith.mulf %754, %753 : vector<32x128xf32>
    %756 = arith.addf %751, %755 : vector<32x128xf32>
    %757 = vector.extract_strided_slice %30 {offsets = [59, 0], sizes = [1, 128], strides = [1, 1]} : vector<64x128xf32> to vector<1x128xf32>
    %c96_333 = arith.constant 96 : index
    %c0_334 = arith.constant 0 : index
    %758 = vector.load %arg17[%c96_333, %c0_334] : memref<256x128xf32, #tpu.memory_space<vmem>>, vector<32x128xf32>
    %759 = vector.broadcast %757 : vector<1x128xf32> to vector<32x128xf32>
    %760 = arith.mulf %759, %758 : vector<32x128xf32>
    %761 = arith.addf %756, %760 : vector<32x128xf32>
    %762 = vector.extract_strided_slice %30 {offsets = [60, 0], sizes = [1, 128], strides = [1, 1]} : vector<64x128xf32> to vector<1x128xf32>
    %c128_335 = arith.constant 128 : index
    %c0_336 = arith.constant 0 : index
    %763 = vector.load %arg17[%c128_335, %c0_336] : memref<256x128xf32, #tpu.memory_space<vmem>>, vector<32x128xf32>
    %764 = vector.broadcast %762 : vector<1x128xf32> to vector<32x128xf32>
    %765 = arith.mulf %764, %763 : vector<32x128xf32>
    %766 = arith.addf %761, %765 : vector<32x128xf32>
    %767 = vector.extract_strided_slice %30 {offsets = [61, 0], sizes = [1, 128], strides = [1, 1]} : vector<64x128xf32> to vector<1x128xf32>
    %c160_337 = arith.constant 160 : index
    %c0_338 = arith.constant 0 : index
    %768 = vector.load %arg17[%c160_337, %c0_338] : memref<256x128xf32, #tpu.memory_space<vmem>>, vector<32x128xf32>
    %769 = vector.broadcast %767 : vector<1x128xf32> to vector<32x128xf32>
    %770 = arith.mulf %769, %768 : vector<32x128xf32>
    %771 = arith.addf %766, %770 : vector<32x128xf32>
    %772 = vector.extract_strided_slice %30 {offsets = [62, 0], sizes = [1, 128], strides = [1, 1]} : vector<64x128xf32> to vector<1x128xf32>
    %c192_339 = arith.constant 192 : index
    %c0_340 = arith.constant 0 : index
    %773 = vector.load %arg17[%c192_339, %c0_340] : memref<256x128xf32, #tpu.memory_space<vmem>>, vector<32x128xf32>
    %774 = vector.broadcast %772 : vector<1x128xf32> to vector<32x128xf32>
    %775 = arith.mulf %774, %773 : vector<32x128xf32>
    %776 = arith.addf %771, %775 : vector<32x128xf32>
    %777 = vector.extract_strided_slice %30 {offsets = [63, 0], sizes = [1, 128], strides = [1, 1]} : vector<64x128xf32> to vector<1x128xf32>
    %c224_341 = arith.constant 224 : index
    %c0_342 = arith.constant 0 : index
    %778 = vector.load %arg17[%c224_341, %c0_342] : memref<256x128xf32, #tpu.memory_space<vmem>>, vector<32x128xf32>
    %779 = vector.broadcast %777 : vector<1x128xf32> to vector<32x128xf32>
    %780 = arith.mulf %779, %778 : vector<32x128xf32>
    %781 = arith.addf %776, %780 : vector<32x128xf32>
    %782 = vector.broadcast %413 : vector<32x1xf32> to vector<32x128xf32>
    %783 = arith.addf %781, %782 : vector<32x128xf32>
    %cst_343 = arith.constant 0.000000e+00 : f32
    %784 = vector.broadcast %cst_343 : f32 to vector<32x128xf32>
    %785 = arith.cmpf oge, %783, %784 : vector<32x128xf32>
    %cst_344 = arith.constant 0.00999999977 : f32
    %786 = vector.broadcast %cst_344 : f32 to vector<32x128xf32>
    %787 = arith.mulf %786, %783 : vector<32x128xf32>
    %788 = arith.select %785, %783, %787 : vector<32x128xi1>, vector<32x128xf32>
    %c224_345 = arith.constant 224 : index
    %c0_346 = arith.constant 0 : index
    %789 = vector.load %arg18[%c224_345, %c0_346] : memref<256x128xf32, #tpu.memory_space<vmem>>, vector<32x128xf32>
    tpu.vector_store %arg18[%c224_345, %c0_346], %788 {strides = array<i32>} : memref<256x128xf32, #tpu.memory_space<vmem>>, vector<32x128xf32>,
    %c0_347 = arith.constant 0 : index
    %c0_348 = arith.constant 0 : index
    %790 = vector.load %arg18[%c0_347, %c0_348] : memref<256x128xf32, #tpu.memory_space<vmem>>, vector<32x128xf32>
    %c32_349 = arith.constant 32 : index
    %c0_350 = arith.constant 0 : index
    %791 = vector.load %arg18[%c32_349, %c0_350] : memref<256x128xf32, #tpu.memory_space<vmem>>, vector<32x128xf32>
    %792 = arith.addf %790, %791 : vector<32x128xf32>
    %c64_351 = arith.constant 64 : index
    %c0_352 = arith.constant 0 : index
    %793 = vector.load %arg18[%c64_351, %c0_352] : memref<256x128xf32, #tpu.memory_space<vmem>>, vector<32x128xf32>
    %794 = arith.addf %792, %793 : vector<32x128xf32>
    %c96_353 = arith.constant 96 : index
    %c0_354 = arith.constant 0 : index
    %795 = vector.load %arg18[%c96_353, %c0_354] : memref<256x128xf32, #tpu.memory_space<vmem>>, vector<32x128xf32>
    %796 = arith.addf %794, %795 : vector<32x128xf32>
    %c128_355 = arith.constant 128 : index
    %c0_356 = arith.constant 0 : index
    %797 = vector.load %arg18[%c128_355, %c0_356] : memref<256x128xf32, #tpu.memory_space<vmem>>, vector<32x128xf32>
    %798 = arith.addf %796, %797 : vector<32x128xf32>
    %c160_357 = arith.constant 160 : index
    %c0_358 = arith.constant 0 : index
    %799 = vector.load %arg18[%c160_357, %c0_358] : memref<256x128xf32, #tpu.memory_space<vmem>>, vector<32x128xf32>
    %800 = arith.addf %798, %799 : vector<32x128xf32>
    %c192_359 = arith.constant 192 : index
    %c0_360 = arith.constant 0 : index
    %801 = vector.load %arg18[%c192_359, %c0_360] : memref<256x128xf32, #tpu.memory_space<vmem>>, vector<32x128xf32>
    %802 = arith.addf %800, %801 : vector<32x128xf32>
    %c224_361 = arith.constant 224 : index
    %c0_362 = arith.constant 0 : index
    %803 = vector.load %arg18[%c224_361, %c0_362] : memref<256x128xf32, #tpu.memory_space<vmem>>, vector<32x128xf32>
    %804 = arith.addf %802, %803 : vector<32x128xf32>
    %cst_363 = arith.constant 1.250000e-01 : f32
    %805 = vector.broadcast %cst_363 : f32 to vector<32x128xf32>
    %806 = arith.mulf %804, %805 : vector<32x128xf32>
    %c0_364 = arith.constant 0 : index
    %c0_365 = arith.constant 0 : index
    %807 = vector.load %arg12[%c0_364, %c0_365] : memref<16x32xf32, #tpu.memory_space<vmem>>, vector<16x32xf32>
    %cst_366 = arith.constant dense<0.000000e+00> : vector<16x128xf32>
    %808 = tpu.matmul %807, %806, %cst_366 {dimension_numbers = #tpu.dot_dimension_numbers<[1], [0], [0], [1], [0, 0, 1, 1], [], []>} : vector<16x32xf32>, vector<32x128xf32>, vector<16x128xf32> -> vector<16x128xf32>
    %c0_367 = arith.constant 0 : index
    %c0_368 = arith.constant 0 : index
    %809 = vector.load %arg13[%c0_367, %c0_368] : memref<16x1xf32, #tpu.memory_space<vmem>>, vector<16x1xf32>
    %810 = vector.broadcast %809 : vector<16x1xf32> to vector<16x128xf32>
    %811 = arith.addf %808, %810 : vector<16x128xf32>
    %cst_369 = arith.constant 0.000000e+00 : f32
    %812 = vector.broadcast %cst_369 : f32 to vector<16x128xf32>
    %813 = arith.cmpf oge, %811, %812 : vector<16x128xf32>
    %cst_370 = arith.constant 0.00999999977 : f32
    %814 = vector.broadcast %cst_370 : f32 to vector<16x128xf32>
    %815 = arith.mulf %814, %811 : vector<16x128xf32>
    %816 = arith.select %813, %811, %815 : vector<16x128xi1>, vector<16x128xf32>
    %c0_371 = arith.constant 0 : index
    %c0_372 = arith.constant 0 : index
    %817 = vector.load %arg14[%c0_371, %c0_372] : memref<32x16xf32, #tpu.memory_space<vmem>>, vector<32x16xf32>
    %cst_373 = arith.constant dense<0.000000e+00> : vector<32x128xf32>
    %818 = tpu.matmul %817, %816, %cst_373 {dimension_numbers = #tpu.dot_dimension_numbers<[1], [0], [0], [1], [0, 0, 1, 1], [], []>} : vector<32x16xf32>, vector<16x128xf32>, vector<32x128xf32> -> vector<32x128xf32>
    %c0_374 = arith.constant 0 : index
    %c0_375 = arith.constant 0 : index
    %819 = vector.load %arg15[%c0_374, %c0_375] : memref<32x1xf32, #tpu.memory_space<vmem>>, vector<32x1xf32>
    %820 = vector.broadcast %819 : vector<32x1xf32> to vector<32x128xf32>
    %821 = arith.addf %818, %820 : vector<32x128xf32>
    %822 = arith.negf %821 : vector<32x128xf32>
    %823 = math.exp %822 : vector<32x128xf32>
    %cst_376 = arith.constant 1.000000e+00 : f32
    %824 = vector.broadcast %cst_376 : f32 to vector<32x128xf32>
    %825 = arith.addf %824, %823 : vector<32x128xf32>
    %826 = arith.divf %824, %825 : vector<32x128xf32>
    %c0_377 = arith.constant 0 : index
    %c0_378 = arith.constant 0 : index
    %827 = vector.load %arg16[%c0_377, %c0_378] : memref<32x128xf32, #tpu.memory_space<vmem>>, vector<32x128xf32>
    tpu.vector_store %arg16[%c0_377, %c0_378], %826 {strides = array<i32>} : memref<32x128xf32, #tpu.memory_space<vmem>>, vector<32x128xf32>,
    return
  }
  func.func @transform_0(%arg0: i32) -> (i32, i32) {
    %c0_i32 = arith.constant 0 : i32
    %c0_i32_0 = arith.constant 0 : i32
    return %c0_i32, %arg0 : i32, i32
  }
  func.func @transform_1(%arg0: i32) -> (i32, i32) {
    %c0_i32 = arith.constant 0 : i32
    %c0_i32_0 = arith.constant 0 : i32
    return %c0_i32, %arg0 : i32, i32
  }
  func.func @transform_2(%arg0: i32) -> (i32, i32) {
    %c0_i32 = arith.constant 0 : i32
    %c0_i32_0 = arith.constant 0 : i32
    %c0_i32_1 = arith.constant 0 : i32
    return %c0_i32, %c0_i32_0 : i32, i32
  }
  func.func @transform_3(%arg0: i32) -> (i32, i32) {
    %c0_i32 = arith.constant 0 : i32
    %c0_i32_0 = arith.constant 0 : i32
    %c0_i32_1 = arith.constant 0 : i32
    return %c0_i32, %c0_i32_0 : i32, i32
  }
  func.func @transform_4(%arg0: i32) -> (i32, i32) {
    %c0_i32 = arith.constant 0 : i32
    %c0_i32_0 = arith.constant 0 : i32
    %c0_i32_1 = arith.constant 0 : i32
    return %c0_i32, %c0_i32_0 : i32, i32
  }
  func.func @transform_5(%arg0: i32) -> (i32, i32) {
    %c0_i32 = arith.constant 0 : i32
    %c0_i32_0 = arith.constant 0 : i32
    %c0_i32_1 = arith.constant 0 : i32
    return %c0_i32, %c0_i32_0 : i32, i32
  }
  func.func @transform_6(%arg0: i32) -> (i32, i32) {
    %c0_i32 = arith.constant 0 : i32
    %c0_i32_0 = arith.constant 0 : i32
    %c0_i32_1 = arith.constant 0 : i32
    return %c0_i32, %c0_i32_0 : i32, i32
  }
  func.func @transform_7(%arg0: i32) -> (i32, i32) {
    %c0_i32 = arith.constant 0 : i32
    %c0_i32_0 = arith.constant 0 : i32
    %c0_i32_1 = arith.constant 0 : i32
    return %c0_i32, %c0_i32_0 : i32, i32
  }
  func.func @transform_8(%arg0: i32) -> (i32, i32) {
    %c0_i32 = arith.constant 0 : i32
    %c0_i32_0 = arith.constant 0 : i32
    %c0_i32_1 = arith.constant 0 : i32
    return %c0_i32, %c0_i32_0 : i32, i32
  }
  func.func @transform_9(%arg0: i32) -> (i32, i32) {
    %c0_i32 = arith.constant 0 : i32
    %c0_i32_0 = arith.constant 0 : i32
    %c0_i32_1 = arith.constant 0 : i32
    return %c0_i32, %c0_i32_0 : i32, i32
  }
  func.func @transform_10(%arg0: i32) -> (i32, i32) {
    %c0_i32 = arith.constant 0 : i32
    %c0_i32_0 = arith.constant 0 : i32
    %c0_i32_1 = arith.constant 0 : i32
    return %c0_i32, %c0_i32_0 : i32, i32
  }
  func.func @transform_11(%arg0: i32) -> (i32, i32) {
    %c0_i32 = arith.constant 0 : i32
    %c0_i32_0 = arith.constant 0 : i32
    %c0_i32_1 = arith.constant 0 : i32
    return %c0_i32, %c0_i32_0 : i32, i32
  }
  func.func @transform_12(%arg0: i32) -> (i32, i32) {
    %c0_i32 = arith.constant 0 : i32
    %c0_i32_0 = arith.constant 0 : i32
    %c0_i32_1 = arith.constant 0 : i32
    return %c0_i32, %c0_i32_0 : i32, i32
  }
  func.func @transform_13(%arg0: i32) -> (i32, i32) {
    %c0_i32 = arith.constant 0 : i32
    %c0_i32_0 = arith.constant 0 : i32
    %c0_i32_1 = arith.constant 0 : i32
    return %c0_i32, %c0_i32_0 : i32, i32
  }
  func.func @transform_14(%arg0: i32) -> (i32, i32) {
    %c0_i32 = arith.constant 0 : i32
    %c0_i32_0 = arith.constant 0 : i32
    %c0_i32_1 = arith.constant 0 : i32
    return %c0_i32, %c0_i32_0 : i32, i32
  }
  func.func @transform_15(%arg0: i32) -> (i32, i32) {
    %c0_i32 = arith.constant 0 : i32
    %c0_i32_0 = arith.constant 0 : i32
    return %c0_i32, %arg0 : i32, i32
  }
}

</mosaic_0001>

<llo_original>
// kernel: gnn_hypernetwork_forward.1
$region0: #{gnn_hypernetwork_forward.1}
  #allocation0 [shape = 'u32[]', space=smem, size = 0x4, offset = 0x4, fixed_abs, tag = 'smem constant byte address 0x4 - core index']
  #allocation1 [shape = 'u32[144,128]{1,0:T(1,128)}', space=vmem, size = 0x12000, scoped, tag = 'internal scratch']
  #allocation2 [shape = 'f32[256,128]{1,0:T(8,128)}', space=vmem, size = 0x20000, scoped, tag = 'scratch operand']
  #allocation3 [shape = 'f32[256,128]{1,0:T(8,128)}', space=vmem, size = 0x20000, scoped, tag = 'scratch operand']
  %s0 = inlined_call_operand.vmem [shape: f32[64,128], index: 0, kind: input, shape index: {}]
  %s1 = inlined_call_operand.vmem [shape: f32[64,128], index: 1, kind: input, shape index: {}]
  %s2 = inlined_call_operand.vmem [shape: bf16[128,64], index: 2, kind: input, shape index: {}]
  %s3 = inlined_call_operand.vmem [shape: f32[128,1], index: 3, kind: input, shape index: {}]
  %s4 = inlined_call_operand.vmem [shape: bf16[256,128], index: 4, kind: input, shape index: {}]
  %s5 = inlined_call_operand.vmem [shape: f32[256,1], index: 5, kind: input, shape index: {}]
  %s6 = inlined_call_operand.vmem [shape: bf16[256,256], index: 6, kind: input, shape index: {}]
  %s7 = inlined_call_operand.vmem [shape: f32[256,1], index: 7, kind: input, shape index: {}]
  %s8 = inlined_call_operand.vmem [shape: f32[32,1], index: 8, kind: input, shape index: {}]
  %s9 = inlined_call_operand.vmem [shape: bf16[256,256], index: 9, kind: input, shape index: {}]
  %s10 = inlined_call_operand.vmem [shape: f32[32,1], index: 10, kind: input, shape index: {}]
  %s11 = inlined_call_operand.vmem [shape: f32[16,32], index: 11, kind: input, shape index: {}]
  %s12 = inlined_call_operand.vmem [shape: f32[16,1], index: 12, kind: input, shape index: {}]
  %s13 = inlined_call_operand.vmem [shape: f32[32,16], index: 13, kind: input, shape index: {}]
  %s14 = inlined_call_operand.vmem [shape: f32[32,1], index: 14, kind: input, shape index: {}]
  %s15 = inlined_call_operand.vmem [shape: f32[32,128], index: 15, kind: output, shape index: {}]
  %s16 = sld [smem:[#allocation0]]
  $region70: #{gnn_hypernetwork_forward.1} parent=0
    _
  %s18 = ssub.s32 1, %s16
  %s19 = scalar_select 0, %s18, %s16
  // Predicated region
  $region2: #{gnn_hypernetwork_forward.1} parent=0 // pred_check
    _
  $region3: #{gnn_hypernetwork_forward.1} parent=0 // pred_check_branch
    %21 = sbr.rel (0) target = $region5
  $region4: #{gnn_hypernetwork_forward.1} parent=0 // pred_region
    _
  $region5: #{gnn_hypernetwork_forward.1} parent=0 // pred_fallthru
    _
  // Predicated region
  $region6: #{gnn_hypernetwork_forward.1} parent=0 // pred_check
    _
  $region7: #{gnn_hypernetwork_forward.1} parent=0 // pred_check_branch
    %23 = sbr.rel (0) target = $region9
  $region8: #{gnn_hypernetwork_forward.1} parent=0 // pred_region
    _
  $region9: #{gnn_hypernetwork_forward.1} parent=0 // pred_fallthru
    _
  // Predicated region
  $region10: #{gnn_hypernetwork_forward.1} parent=0 // pred_check
    _
  $region11: #{gnn_hypernetwork_forward.1} parent=0 // pred_check_branch
    %25 = sbr.rel (0) target = $region13
  $region12: #{gnn_hypernetwork_forward.1} parent=0 // pred_region
    _
  $region13: #{gnn_hypernetwork_forward.1} parent=0 // pred_fallthru
    _
  // Predicated region
  $region14: #{gnn_hypernetwork_forward.1} parent=0 // pred_check
    _
  $region15: #{gnn_hypernetwork_forward.1} parent=0 // pred_check_branch
    %27 = sbr.rel (0) target = $region17
  $region16: #{gnn_hypernetwork_forward.1} parent=0 // pred_region
    _
  $region17: #{gnn_hypernetwork_forward.1} parent=0 // pred_fallthru
    _
  // Predicated region
  $region18: #{gnn_hypernetwork_forward.1} parent=0 // pred_check
    _
  $region19: #{gnn_hypernetwork_forward.1} parent=0 // pred_check_branch
    %29 = sbr.rel (0) target = $region21
  $region20: #{gnn_hypernetwork_forward.1} parent=0 // pred_region
    _
  $region21: #{gnn_hypernetwork_forward.1} parent=0 // pred_fallthru
    _
  // Predicated region
  $region22: #{gnn_hypernetwork_forward.1} parent=0 // pred_check
    _
  $region23: #{gnn_hypernetwork_forward.1} parent=0 // pred_check_branch
    %31 = sbr.rel (0) target = $region25
  $region24: #{gnn_hypernetwork_forward.1} parent=0 // pred_region
    _
  $region25: #{gnn_hypernetwork_forward.1} parent=0 // pred_fallthru
    _
  // Predicated region
  $region26: #{gnn_hypernetwork_forward.1} parent=0 // pred_check
    _
  $region27: #{gnn_hypernetwork_forward.1} parent=0 // pred_check_branch
    %33 = sbr.rel (0) target = $region29
  $region28: #{gnn_hypernetwork_forward.1} parent=0 // pred_region
    _
  $region29: #{gnn_hypernetwork_forward.1} parent=0 // pred_fallthru
    _
  // Predicated region
  $region30: #{gnn_hypernetwork_forward.1} parent=0 // pred_check
    _
  $region31: #{gnn_hypernetwork_forward.1} parent=0 // pred_check_branch
    %35 = sbr.rel (0) target = $region33
  $region32: #{gnn_hypernetwork_forward.1} parent=0 // pred_region
    _
  $region33: #{gnn_hypernetwork_forward.1} parent=0 // pred_fallthru
    _
  // Predicated region
  $region34: #{gnn_hypernetwork_forward.1} parent=0 // pred_check
    _
  $region35: #{gnn_hypernetwork_forward.1} parent=0 // pred_check_branch
    %37 = sbr.rel (0) target = $region37
  $region36: #{gnn_hypernetwork_forward.1} parent=0 // pred_region
    _
  $region37: #{gnn_hypernetwork_forward.1} parent=0 // pred_fallthru
    _
  // Predicated region
  $region38: #{gnn_hypernetwork_forward.1} parent=0 // pred_check
    _
  $region39: #{gnn_hypernetwork_forward.1} parent=0 // pred_check_branch
    %39 = sbr.rel (0) target = $region41
  $region40: #{gnn_hypernetwork_forward.1} parent=0 // pred_region
    _
  $region41: #{gnn_hypernetwork_forward.1} parent=0 // pred_fallthru
    _
  // Predicated region
  $region42: #{gnn_hypernetwork_forward.1} parent=0 // pred_check
    _
  $region43: #{gnn_hypernetwork_forward.1} parent=0 // pred_check_branch
    %41 = sbr.rel (0) target = $region45
  $region44: #{gnn_hypernetwork_forward.1} parent=0 // pred_region
    _
  $region45: #{gnn_hypernetwork_forward.1} parent=0 // pred_fallthru
    _
  // Predicated region
  $region46: #{gnn_hypernetwork_forward.1} parent=0 // pred_check
    _
  $region47: #{gnn_hypernetwork_forward.1} parent=0 // pred_check_branch
    %43 = sbr.rel (0) target = $region49
  $region48: #{gnn_hypernetwork_forward.1} parent=0 // pred_region
    _
  $region49: #{gnn_hypernetwork_forward.1} parent=0 // pred_fallthru
    _
  // Predicated region
  $region50: #{gnn_hypernetwork_forward.1} parent=0 // pred_check
    _
  $region51: #{gnn_hypernetwork_forward.1} parent=0 // pred_check_branch
    %45 = sbr.rel (0) target = $region53
  $region52: #{gnn_hypernetwork_forward.1} parent=0 // pred_region
    _
  $region53: #{gnn_hypernetwork_forward.1} parent=0 // pred_fallthru
    _
  // Predicated region
  $region54: #{gnn_hypernetwork_forward.1} parent=0 // pred_check
    _
  $region55: #{gnn_hypernetwork_forward.1} parent=0 // pred_check_branch
    %47 = sbr.rel (0) target = $region57
  $region56: #{gnn_hypernetwork_forward.1} parent=0 // pred_region
    _
  $region57: #{gnn_hypernetwork_forward.1} parent=0 // pred_fallthru
    _
  // Predicated region
  $region58: #{gnn_hypernetwork_forward.1} parent=0 // pred_check
    _
  $region59: #{gnn_hypernetwork_forward.1} parent=0 // pred_check_branch
    %49 = sbr.rel (0) target = $region61
  $region60: #{gnn_hypernetwork_forward.1} parent=0 // pred_region
    _
  $region61: #{gnn_hypernetwork_forward.1} parent=0 // pred_fallthru
    _
  %v51 = vld [vmem:[%s0] sm:$0xff]
  %v52 = vld [vmem:[%s0 + $0x8] sm:$0xff]
  %v53 = vld [vmem:[%s0 + $0x10] sm:$0xff]
  %v54 = vld [vmem:[%s0 + $0x18] sm:$0xff]
  %v55 = vld [vmem:[%s0 + $0x20] sm:$0xff]
  %v56 = vld [vmem:[%s0 + $0x28] sm:$0xff]
  %v57 = vld [vmem:[%s0 + $0x30] sm:$0xff]
  %v58 = vld [vmem:[%s0 + $0x38] sm:$0xff]
  %v59 = vld [vmem:[%s2] sm:$0xf]
  %v60 = vld [vmem:[%s2 + $0x4] sm:$0xf]
  %v61 = vld [vmem:[%s2 + $0x8] sm:$0xf]
  %v62 = vld [vmem:[%s2 + $0xc] sm:$0xf]
  %v63 = vld [vmem:[%s2 + $0x10] sm:$0xf]
  %v64 = vld [vmem:[%s2 + $0x14] sm:$0xf]
  %v65 = vld [vmem:[%s2 + $0x18] sm:$0xf]
  %v66 = vld [vmem:[%s2 + $0x1c] sm:$0xf]
  %v67 = vld [vmem:[%s2 + $0x20] sm:$0xf]
  %v68 = vld [vmem:[%s2 + $0x24] sm:$0xf]
  %v69 = vld [vmem:[%s2 + $0x28] sm:$0xf]
  %v70 = vld [vmem:[%s2 + $0x2c] sm:$0xf]
  %v71 = vld [vmem:[%s2 + $0x30] sm:$0xf]
  %v72 = vld [vmem:[%s2 + $0x34] sm:$0xf]
  %v73 = vld [vmem:[%s2 + $0x38] sm:$0xf]
  %v74 = vld [vmem:[%s2 + $0x3c] sm:$0xf]
  %v75 = vpack.c.bf16 %v52, %v51
  %v76 = vpack.c.bf16 %v54, %v53
  %v77 = vpack.c.bf16 %v56, %v55
  %v78 = vpack.c.bf16 %v58, %v57
  %v79 = vld [vmem:[%s3] sm:$0xff]
  %v80 = vld [vmem:[%s3 + $0x8] sm:$0xff]
  %v81 = vld [vmem:[%s3 + $0x10] sm:$0xff]
  %v82 = vld [vmem:[%s3 + $0x18] sm:$0xff]
  %v83 = vld [vmem:[%s3 + $0x20] sm:$0xff]
  %v84 = vld [vmem:[%s3 + $0x28] sm:$0xff]
  %v85 = vld [vmem:[%s3 + $0x30] sm:$0xff]
  %v86 = vld [vmem:[%s3 + $0x38] sm:$0xff]
  %v87 = vld [vmem:[%s3 + $0x40] sm:$0xff]
  %v88 = vld [vmem:[%s3 + $0x48] sm:$0xff]
  %v89 = vld [vmem:[%s3 + $0x50] sm:$0xff]
  %v90 = vld [vmem:[%s3 + $0x58] sm:$0xff]
  %v91 = vld [vmem:[%s3 + $0x60] sm:$0xff]
  %v92 = vld [vmem:[%s3 + $0x68] sm:$0xff]
  %v93 = vld [vmem:[%s3 + $0x70] sm:$0xff]
  %v94 = vld [vmem:[%s3 + $0x78] sm:$0xff]
  %96 = vset.pattern.permute.xlu0 0
  %97 = vperm.xlu0 %96, %v79
  %v98 = vpop.permute.xlu0 %97
  %101 = vset.pattern.permute.xlu0 0
  %102 = vperm.xlu0 %101, %v80
  %v103 = vpop.permute.xlu0 %102
  %106 = vset.pattern.permute.xlu0 0
  %107 = vperm.xlu0 %106, %v81
  %v108 = vpop.permute.xlu0 %107
  %111 = vset.pattern.permute.xlu0 0
  %112 = vperm.xlu0 %111, %v82
  %v113 = vpop.permute.xlu0 %112
  %116 = vset.pattern.permute.xlu0 0
  %117 = vperm.xlu0 %116, %v83
  %v118 = vpop.permute.xlu0 %117
  %121 = vset.pattern.permute.xlu0 0
  %122 = vperm.xlu0 %121, %v84
  %v123 = vpop.permute.xlu0 %122
  %126 = vset.pattern.permute.xlu0 0
  %127 = vperm.xlu0 %126, %v85
  %v128 = vpop.permute.xlu0 %127
  %131 = vset.pattern.permute.xlu0 0
  %132 = vperm.xlu0 %131, %v86
  %v133 = vpop.permute.xlu0 %132
  %136 = vset.pattern.permute.xlu0 0
  %137 = vperm.xlu0 %136, %v87
  %v138 = vpop.permute.xlu0 %137
  %141 = vset.pattern.permute.xlu0 0
  %142 = vperm.xlu0 %141, %v88
  %v143 = vpop.permute.xlu0 %142
  %146 = vset.pattern.permute.xlu0 0
  %147 = vperm.xlu0 %146, %v89
  %v148 = vpop.permute.xlu0 %147
  %151 = vset.pattern.permute.xlu0 0
  %152 = vperm.xlu0 %151, %v90
  %v153 = vpop.permute.xlu0 %152
  %156 = vset.pattern.permute.xlu0 0
  %157 = vperm.xlu0 %156, %v91
  %v158 = vpop.permute.xlu0 %157
  %161 = vset.pattern.permute.xlu0 0
  %162 = vperm.xlu0 %161, %v92
  %v163 = vpop.permute.xlu0 %162
  %166 = vset.pattern.permute.xlu0 0
  %167 = vperm.xlu0 %166, %v93
  %v168 = vpop.permute.xlu0 %167
  %171 = vset.pattern.permute.xlu0 0
  %172 = vperm.xlu0 %171, %v94
  %v173 = vpop.permute.xlu0 %172
  %v191 = vunpack.c.l.b16 %v59
  %v192 = vunpack.c.l.b16 %v60
  %v193 = vunpack.c.l.b16 %v61
  %v194 = vunpack.c.l.b16 %v62
  %v195 = vunpack.c.l.b16 %v63
  %v196 = vunpack.c.l.b16 %v64
  %v197 = vunpack.c.l.b16 %v65
  %v198 = vunpack.c.l.b16 %v66
  %v199 = vunpack.c.l.b16 %v67
  %v200 = vunpack.c.l.b16 %v68
  %v201 = vunpack.c.l.b16 %v69
  %v202 = vunpack.c.l.b16 %v70
  %v203 = vunpack.c.l.b16 %v71
  %v204 = vunpack.c.l.b16 %v72
  %v205 = vunpack.c.l.b16 %v73
  %v206 = vunpack.c.l.b16 %v74
  %v207 = vpack.c.b16 %v192, %v191
  %v208 = vpack.c.b16 %v194, %v193
  %v209 = vpack.c.b16 %v196, %v195
  %v210 = vpack.c.b16 %v198, %v197
  %v211 = vpack.c.b16 %v200, %v199
  %v212 = vpack.c.b16 %v202, %v201
  %v213 = vpack.c.b16 %v204, %v203
  %v214 = vpack.c.b16 %v206, %v205
  %vm215 = vcmask 523264
  %v217 = vsel %vm215, %v207, 0
  %v220 = vsel %vm215, %v208, 0
  %v223 = vsel %vm215, %v209, 0
  %v226 = vsel %vm215, %v210, 0
  %v229 = vsel %vm215, %v211, 0
  %v232 = vsel %vm215, %v212, 0
  %v235 = vsel %vm215, %v213, 0
  %v238 = vsel %vm215, %v214, 0
  %240 = vmatprep.subr.bf16.mxu0 0
  %241 = vmatpush1.bf16.msra.mxu0 %v75
  %242 = vmatprep.subr.bf16.mxu0 0
  %243 = vmatpush1.bf16.msra.mxu0 %v76
  %244 = vmatprep.subr.bf16.mxu0 0
  %245 = vmatpush1.bf16.msra.mxu0 %v77
  %246 = vmatprep.subr.bf16.mxu0 0
  %247 = vmatpush1.bf16.msra.mxu0 %v78
  %248 = vmatprep.subr.bf16.mxu0 0
  %249 = vmatpush1.bf16.msra.mxu0 0
  %250 = vmatprep.subr.bf16.mxu0 0
  %251 = vmatpush1.bf16.msra.mxu0 0
  %252 = vmatprep.subr.bf16.mxu0 0
  %253 = vmatpush1.bf16.msra.mxu0 0
  %254 = vmatprep.subr.bf16.mxu0 0
  %255 = vmatpush1.bf16.msra.mxu0 0
  %256 = vmatprep.subr.bf16.mxu0 0
  %257 = vmatpush1.bf16.msra.mxu0 0
  %258 = vmatprep.subr.bf16.mxu0 0
  %259 = vmatpush1.bf16.msra.mxu0 0
  %260 = vmatprep.subr.bf16.mxu0 0
  %261 = vmatpush1.bf16.msra.mxu0 0
  %262 = vmatprep.subr.bf16.mxu0 0
  %263 = vmatpush1.bf16.msra.mxu0 0
  %264 = vmatprep.subr.bf16.mxu0 0
  %265 = vmatpush1.bf16.msra.mxu0 0
  %266 = vmatprep.subr.bf16.mxu0 0
  %267 = vmatpush1.bf16.msra.mxu0 0
  %268 = vmatprep.subr.bf16.mxu0 0
  %269 = vmatpush1.bf16.msra.mxu0 0
  %270 = vmatprep.subr.bf16.mxu0 0
  %271 = vmatpush1.bf16.msra.mxu0 0
  %272 = vmatprep.mubr.bf16.mxu0 0
  %273 = vmatmul.mubr.bf16.gmra.mrb[0].mxu0 %v217
  %v274 = vpop.f32.mrb[0].mxu0
  %v275 = vadd.f32 %v98, %v274
  %v276 = vpop.f32.mrb[0].mxu0
  %v277 = vpop.f32.mrb[0].mxu0
  %v278 = vadd.f32 %v103, %v277
  %v279 = vpop.f32.mrb[0].mxu0
  %280 = vmatprep.mubr.bf16.mxu0 0
  %281 = vmatmul.mubr.bf16.gmra.mrb[0].mxu0 %v220
  %v282 = vpop.f32.mrb[0].mxu0
  %v283 = vadd.f32 %v108, %v282
  %v284 = vpop.f32.mrb[0].mxu0
  %v285 = vpop.f32.mrb[0].mxu0
  %v286 = vadd.f32 %v113, %v285
  %v287 = vpop.f32.mrb[0].mxu0
  %288 = vmatprep.mubr.bf16.mxu0 0
  %289 = vmatmul.mubr.bf16.gmra.mrb[0].mxu0 %v223
  %v290 = vpop.f32.mrb[0].mxu0
  %v291 = vadd.f32 %v118, %v290
  %v292 = vpop.f32.mrb[0].mxu0
  %v293 = vpop.f32.mrb[0].mxu0
  %v294 = vadd.f32 %v123, %v293
  %v295 = vpop.f32.mrb[0].mxu0
  %296 = vmatprep.mubr.bf16.mxu0 0
  %297 = vmatmul.mubr.bf16.gmra.mrb[0].mxu0 %v226
  %v298 = vpop.f32.mrb[0].mxu0
  %v299 = vadd.f32 %v128, %v298
  %v300 = vpop.f32.mrb[0].mxu0
  %v301 = vpop.f32.mrb[0].mxu0
  %v302 = vadd.f32 %v133, %v301
  %v303 = vpop.f32.mrb[0].mxu0
  %304 = vmatprep.mubr.bf16.mxu0 0
  %305 = vmatmul.mubr.bf16.gmra.mrb[0].mxu0 %v229
  %v306 = vpop.f32.mrb[0].mxu0
  %v307 = vadd.f32 %v138, %v306
  %v308 = vpop.f32.mrb[0].mxu0
  %v309 = vpop.f32.mrb[0].mxu0
  %v310 = vadd.f32 %v143, %v309
  %v311 = vpop.f32.mrb[0].mxu0
  %312 = vmatprep.mubr.bf16.mxu0 0
  %313 = vmatmul.mubr.bf16.gmra.mrb[0].mxu0 %v232
  %v314 = vpop.f32.mrb[0].mxu0
  %v315 = vadd.f32 %v148, %v314
  %v316 = vpop.f32.mrb[0].mxu0
  %v317 = vpop.f32.mrb[0].mxu0
  %v318 = vadd.f32 %v153, %v317
  %v319 = vpop.f32.mrb[0].mxu0
  %320 = vmatprep.mubr.bf16.mxu0 0
  %321 = vmatmul.mubr.bf16.gmra.mrb[0].mxu0 %v235
  %v322 = vpop.f32.mrb[0].mxu0
  %v323 = vadd.f32 %v158, %v322
  %v324 = vpop.f32.mrb[0].mxu0
  %v325 = vpop.f32.mrb[0].mxu0
  %v326 = vadd.f32 %v163, %v325
  %v327 = vpop.f32.mrb[0].mxu0
  %328 = vmatprep.mubr.bf16.mxu0 0
  %329 = vmatmul.mubr.bf16.gmra.mrb[0].mxu0 %v238
  %v330 = vpop.f32.mrb[0].mxu0
  %v331 = vadd.f32 %v168, %v330
  %v332 = vpop.f32.mrb[0].mxu0
  %v333 = vpop.f32.mrb[0].mxu0
  %v334 = vadd.f32 %v173, %v333
  %v335 = vpop.f32.mrb[0].mxu0
  %336 = vdwg.mxu0
  %vm337 = vcmp.ge.f32.partialorder %v275, 0.0
  %vm338 = vcmp.ge.f32.partialorder %v278, 0.0
  %vm339 = vcmp.ge.f32.partialorder %v283, 0.0
  %vm340 = vcmp.ge.f32.partialorder %v286, 0.0
  %vm341 = vcmp.ge.f32.partialorder %v291, 0.0
  %vm342 = vcmp.ge.f32.partialorder %v294, 0.0
  %vm343 = vcmp.ge.f32.partialorder %v299, 0.0
  %vm344 = vcmp.ge.f32.partialorder %v302, 0.0
  %vm345 = vcmp.ge.f32.partialorder %v307, 0.0
  %vm346 = vcmp.ge.f32.partialorder %v310, 0.0
  %vm347 = vcmp.ge.f32.partialorder %v315, 0.0
  %vm348 = vcmp.ge.f32.partialorder %v318, 0.0
  %vm349 = vcmp.ge.f32.partialorder %v323, 0.0
  %vm350 = vcmp.ge.f32.partialorder %v326, 0.0
  %vm351 = vcmp.ge.f32.partialorder %v331, 0.0
  %vm352 = vcmp.ge.f32.partialorder %v334, 0.0
  %v353 = vmul.f32 %v275, 0.01
  %v354 = vmul.f32 %v278, 0.01
  %v355 = vmul.f32 %v283, 0.01
  %v356 = vmul.f32 %v286, 0.01
  %v357 = vmul.f32 %v291, 0.01
  %v358 = vmul.f32 %v294, 0.01
  %v359 = vmul.f32 %v299, 0.01
  %v360 = vmul.f32 %v302, 0.01
  %v361 = vmul.f32 %v307, 0.01
  %v362 = vmul.f32 %v310, 0.01
  %v363 = vmul.f32 %v315, 0.01
  %v364 = vmul.f32 %v318, 0.01
  %v365 = vmul.f32 %v323, 0.01
  %v366 = vmul.f32 %v326, 0.01
  %v367 = vmul.f32 %v331, 0.01
  %v368 = vmul.f32 %v334, 0.01
  %v369 = vsel %vm337, %v275, %v353
  %v370 = vsel %vm338, %v278, %v354
  %v371 = vsel %vm339, %v283, %v355
  %v372 = vsel %vm340, %v286, %v356
  %v373 = vsel %vm341, %v291, %v357
  %v374 = vsel %vm342, %v294, %v358
  %v375 = vsel %vm343, %v299, %v359
  %v376 = vsel %vm344, %v302, %v360
  %v377 = vsel %vm345, %v307, %v361
  %v378 = vsel %vm346, %v310, %v362
  %v379 = vsel %vm347, %v315, %v363
  %v380 = vsel %vm348, %v318, %v364
  %v381 = vsel %vm349, %v323, %v365
  %v382 = vsel %vm350, %v326, %v366
  %v383 = vsel %vm351, %v331, %v367
  %v384 = vsel %vm352, %v334, %v368
  %v385 = vld [vmem:[%s4] sm:$0xf]
  %v386 = vld [vmem:[%s4 + $0x4] sm:$0xf]
  %v387 = vld [vmem:[%s4 + $0x8] sm:$0xf]
  %v388 = vld [vmem:[%s4 + $0xc] sm:$0xf]
  %v389 = vld [vmem:[%s4 + $0x10] sm:$0xf]
  %v390 = vld [vmem:[%s4 + $0x14] sm:$0xf]
  %v391 = vld [vmem:[%s4 + $0x18] sm:$0xf]
  %v392 = vld [vmem:[%s4 + $0x1c] sm:$0xf]
  %v393 = vld [vmem:[%s4 + $0x20] sm:$0xf]
  %v394 = vld [vmem:[%s4 + $0x24] sm:$0xf]
  %v395 = vld [vmem:[%s4 + $0x28] sm:$0xf]
  %v396 = vld [vmem:[%s4 + $0x2c] sm:$0xf]
  %v397 = vld [vmem:[%s4 + $0x30] sm:$0xf]
  %v398 = vld [vmem:[%s4 + $0x34] sm:$0xf]
  %v399 = vld [vmem:[%s4 + $0x38] sm:$0xf]
  %v400 = vld [vmem:[%s4 + $0x3c] sm:$0xf]
  %v401 = vld [vmem:[%s4 + $0x40] sm:$0xf]
  %v402 = vld [vmem:[%s4 + $0x44] sm:$0xf]
  %v403 = vld [vmem:[%s4 + $0x48] sm:$0xf]
  %v404 = vld [vmem:[%s4 + $0x4c] sm:$0xf]
  %v405 = vld [vmem:[%s4 + $0x50] sm:$0xf]
  %v406 = vld [vmem:[%s4 + $0x54] sm:$0xf]
  %v407 = vld [vmem:[%s4 + $0x58] sm:$0xf]
  %v408 = vld [vmem:[%s4 + $0x5c] sm:$0xf]
  %v409 = vld [vmem:[%s4 + $0x60] sm:$0xf]
  %v410 = vld [vmem:[%s4 + $0x64] sm:$0xf]
  %v411 = vld [vmem:[%s4 + $0x68] sm:$0xf]
  %v412 = vld [vmem:[%s4 + $0x6c] sm:$0xf]
  %v413 = vld [vmem:[%s4 + $0x70] sm:$0xf]
  %v414 = vld [vmem:[%s4 + $0x74] sm:$0xf]
  %v415 = vld [vmem:[%s4 + $0x78] sm:$0xf]
  %v416 = vld [vmem:[%s4 + $0x7c] sm:$0xf]
  %v417 = vpack.c.bf16 %v370, %v369
  %v418 = vpack.c.bf16 %v372, %v371
  %v419 = vpack.c.bf16 %v374, %v373
  %v420 = vpack.c.bf16 %v376, %v375
  %v421 = vpack.c.bf16 %v378, %v377
  %v422 = vpack.c.bf16 %v380, %v379
  %v423 = vpack.c.bf16 %v382, %v381
  %v424 = vpack.c.bf16 %v384, %v383
  %v425 = vld [vmem:[%s5] sm:$0xff]
  %v426 = vld [vmem:[%s5 + $0x8] sm:$0xff]
  %v427 = vld [vmem:[%s5 + $0x10] sm:$0xff]
  %v428 = vld [vmem:[%s5 + $0x18] sm:$0xff]
  %v429 = vld [vmem:[%s5 + $0x20] sm:$0xff]
  %v430 = vld [vmem:[%s5 + $0x28] sm:$0xff]
  %v431 = vld [vmem:[%s5 + $0x30] sm:$0xff]
  %v432 = vld [vmem:[%s5 + $0x38] sm:$0xff]
  %v433 = vld [vmem:[%s5 + $0x40] sm:$0xff]
  %v434 = vld [vmem:[%s5 + $0x48] sm:$0xff]
  %v435 = vld [vmem:[%s5 + $0x50] sm:$0xff]
  %v436 = vld [vmem:[%s5 + $0x58] sm:$0xff]
  %v437 = vld [vmem:[%s5 + $0x60] sm:$0xff]
  %v438 = vld [vmem:[%s5 + $0x68] sm:$0xff]
  %v439 = vld [vmem:[%s5 + $0x70] sm:$0xff]
  %v440 = vld [vmem:[%s5 + $0x78] sm:$0xff]
  %v441 = vld [vmem:[%s5 + $0x80] sm:$0xff]
  %v442 = vld [vmem:[%s5 + $0x88] sm:$0xff]
  %v443 = vld [vmem:[%s5 + $0x90] sm:$0xff]
  %v444 = vld [vmem:[%s5 + $0x98] sm:$0xff]
  %v445 = vld [vmem:[%s5 + $0xa0] sm:$0xff]
  %v446 = vld [vmem:[%s5 + $0xa8] sm:$0xff]
  %v447 = vld [vmem:[%s5 + $0xb0] sm:$0xff]
  %v448 = vld [vmem:[%s5 + $0xb8] sm:$0xff]
  %v449 = vld [vmem:[%s5 + $0xc0] sm:$0xff]
  %v450 = vld [vmem:[%s5 + $0xc8] sm:$0xff]
  %v451 = vld [vmem:[%s5 + $0xd0] sm:$0xff]
  %v452 = vld [vmem:[%s5 + $0xd8] sm:$0xff]
  %v453 = vld [vmem:[%s5 + $0xe0] sm:$0xff]
  %v454 = vld [vmem:[%s5 + $0xe8] sm:$0xff]
  %v455 = vld [vmem:[%s5 + $0xf0] sm:$0xff]
  %v456 = vld [vmem:[%s5 + $0xf8] sm:$0xff]
  %458 = vset.pattern.permute.xlu0 0
  %459 = vperm.xlu0 %458, %v425
  %v460 = vpop.permute.xlu0 %459
  %463 = vset.pattern.permute.xlu0 0
  %464 = vperm.xlu0 %463, %v426
  %v465 = vpop.permute.xlu0 %464
  %468 = vset.pattern.permute.xlu0 0
  %469 = vperm.xlu0 %468, %v427
  %v470 = vpop.permute.xlu0 %469
  %473 = vset.pattern.permute.xlu0 0
  %474 = vperm.xlu0 %473, %v428
  %v475 = vpop.permute.xlu0 %474
  %478 = vset.pattern.permute.xlu0 0
  %479 = vperm.xlu0 %478, %v429
  %v480 = vpop.permute.xlu0 %479
  %483 = vset.pattern.permute.xlu0 0
  %484 = vperm.xlu0 %483, %v430
  %v485 = vpop.permute.xlu0 %484
  %488 = vset.pattern.permute.xlu0 0
  %489 = vperm.xlu0 %488, %v431
  %v490 = vpop.permute.xlu0 %489
  %493 = vset.pattern.permute.xlu0 0
  %494 = vperm.xlu0 %493, %v432
  %v495 = vpop.permute.xlu0 %494
  %498 = vset.pattern.permute.xlu0 0
  %499 = vperm.xlu0 %498, %v433
  %v500 = vpop.permute.xlu0 %499
  %503 = vset.pattern.permute.xlu0 0
  %504 = vperm.xlu0 %503, %v434
  %v505 = vpop.permute.xlu0 %504
  %508 = vset.pattern.permute.xlu0 0
  %509 = vperm.xlu0 %508, %v435
  %v510 = vpop.permute.xlu0 %509
  %513 = vset.pattern.permute.xlu0 0
  %514 = vperm.xlu0 %513, %v436
  %v515 = vpop.permute.xlu0 %514
  %518 = vset.pattern.permute.xlu0 0
  %519 = vperm.xlu0 %518, %v437
  %v520 = vpop.permute.xlu0 %519
  %523 = vset.pattern.permute.xlu0 0
  %524 = vperm.xlu0 %523, %v438
  %v525 = vpop.permute.xlu0 %524
  %528 = vset.pattern.permute.xlu0 0
  %529 = vperm.xlu0 %528, %v439
  %v530 = vpop.permute.xlu0 %529
  %533 = vset.pattern.permute.xlu0 0
  %534 = vperm.xlu0 %533, %v440
  %v535 = vpop.permute.xlu0 %534
  %538 = vset.pattern.permute.xlu0 0
  %539 = vperm.xlu0 %538, %v441
  %v540 = vpop.permute.xlu0 %539
  %543 = vset.pattern.permute.xlu0 0
  %544 = vperm.xlu0 %543, %v442
  %v545 = vpop.permute.xlu0 %544
  %548 = vset.pattern.permute.xlu0 0
  %549 = vperm.xlu0 %548, %v443
  %v550 = vpop.permute.xlu0 %549
  %553 = vset.pattern.permute.xlu0 0
  %554 = vperm.xlu0 %553, %v444
  %v555 = vpop.permute.xlu0 %554
  %558 = vset.pattern.permute.xlu0 0
  %559 = vperm.xlu0 %558, %v445
  %v560 = vpop.permute.xlu0 %559
  %563 = vset.pattern.permute.xlu0 0
  %564 = vperm.xlu0 %563, %v446
  %v565 = vpop.permute.xlu0 %564
  %568 = vset.pattern.permute.xlu0 0
  %569 = vperm.xlu0 %568, %v447
  %v570 = vpop.permute.xlu0 %569
  %573 = vset.pattern.permute.xlu0 0
  %574 = vperm.xlu0 %573, %v448
  %v575 = vpop.permute.xlu0 %574
  %578 = vset.pattern.permute.xlu0 0
  %579 = vperm.xlu0 %578, %v449
  %v580 = vpop.permute.xlu0 %579
  %583 = vset.pattern.permute.xlu0 0
  %584 = vperm.xlu0 %583, %v450
  %v585 = vpop.permute.xlu0 %584
  %588 = vset.pattern.permute.xlu0 0
  %589 = vperm.xlu0 %588, %v451
  %v590 = vpop.permute.xlu0 %589
  %593 = vset.pattern.permute.xlu0 0
  %594 = vperm.xlu0 %593, %v452
  %v595 = vpop.permute.xlu0 %594
  %598 = vset.pattern.permute.xlu0 0
  %599 = vperm.xlu0 %598, %v453
  %v600 = vpop.permute.xlu0 %599
  %603 = vset.pattern.permute.xlu0 0
  %604 = vperm.xlu0 %603, %v454
  %v605 = vpop.permute.xlu0 %604
  %608 = vset.pattern.permute.xlu0 0
  %609 = vperm.xlu0 %608, %v455
  %v610 = vpop.permute.xlu0 %609
  %613 = vset.pattern.permute.xlu0 0
  %614 = vperm.xlu0 %613, %v456
  %v615 = vpop.permute.xlu0 %614
  %v649 = vunpack.c.l.b16 %v385
  %v650 = vunpack.c.l.b16 %v386
  %v651 = vunpack.c.l.b16 %v387
  %v652 = vunpack.c.l.b16 %v388
  %v653 = vunpack.c.l.b16 %v389
  %v654 = vunpack.c.l.b16 %v390
  %v655 = vunpack.c.l.b16 %v391
  %v656 = vunpack.c.l.b16 %v392
  %v657 = vunpack.c.l.b16 %v393
  %v658 = vunpack.c.l.b16 %v394
  %v659 = vunpack.c.l.b16 %v395
  %v660 = vunpack.c.l.b16 %v396
  %v661 = vunpack.c.l.b16 %v397
  %v662 = vunpack.c.l.b16 %v398
  %v663 = vunpack.c.l.b16 %v399
  %v664 = vunpack.c.l.b16 %v400
  %v665 = vunpack.c.l.b16 %v401
  %v666 = vunpack.c.l.b16 %v402
  %v667 = vunpack.c.l.b16 %v403
  %v668 = vunpack.c.l.b16 %v404
  %v669 = vunpack.c.l.b16 %v405
  %v670 = vunpack.c.l.b16 %v406
  %v671 = vunpack.c.l.b16 %v407
  %v672 = vunpack.c.l.b16 %v408
  %v673 = vunpack.c.l.b16 %v409
  %v674 = vunpack.c.l.b16 %v410
  %v675 = vunpack.c.l.b16 %v411
  %v676 = vunpack.c.l.b16 %v412
  %v677 = vunpack.c.l.b16 %v413
  %v678 = vunpack.c.l.b16 %v414
  %v679 = vunpack.c.l.b16 %v415
  %v680 = vunpack.c.l.b16 %v416
  %v681 = vpack.c.b16 %v650, %v649
  %v682 = vpack.c.b16 %v652, %v651
  %v683 = vpack.c.b16 %v654, %v653
  %v684 = vpack.c.b16 %v656, %v655
  %v685 = vpack.c.b16 %v658, %v657
  %v686 = vpack.c.b16 %v660, %v659
  %v687 = vpack.c.b16 %v662, %v661
  %v688 = vpack.c.b16 %v664, %v663
  %v689 = vpack.c.b16 %v666, %v665
  %v690 = vpack.c.b16 %v668, %v667
  %v691 = vpack.c.b16 %v670, %v669
  %v692 = vpack.c.b16 %v672, %v671
  %v693 = vpack.c.b16 %v674, %v673
  %v694 = vpack.c.b16 %v676, %v675
  %v695 = vpack.c.b16 %v678, %v677
  %v696 = vpack.c.b16 %v680, %v679
  %713 = vmatprep.subr.bf16.mxu0 0
  %714 = vmatpush1.bf16.msra.mxu0 %v417
  %715 = vmatprep.subr.bf16.mxu0 0
  %716 = vmatpush1.bf16.msra.mxu0 %v418
  %717 = vmatprep.subr.bf16.mxu0 0
  %718 = vmatpush1.bf16.msra.mxu0 %v419
  %719 = vmatprep.subr.bf16.mxu0 0
  %720 = vmatpush1.bf16.msra.mxu0 %v420
  %721 = vmatprep.subr.bf16.mxu0 0
  %722 = vmatpush1.bf16.msra.mxu0 %v421
  %723 = vmatprep.subr.bf16.mxu0 0
  %724 = vmatpush1.bf16.msra.mxu0 %v422
  %725 = vmatprep.subr.bf16.mxu0 0
  %726 = vmatpush1.bf16.msra.mxu0 %v423
  %727 = vmatprep.subr.bf16.mxu0 0
  %728 = vmatpush1.bf16.msra.mxu0 %v424
  %729 = vmatprep.subr.bf16.mxu0 0
  %730 = vmatpush1.bf16.msra.mxu0 0
  %731 = vmatprep.subr.bf16.mxu0 0
  %732 = vmatpush1.bf16.msra.mxu0 0
  %733 = vmatprep.subr.bf16.mxu0 0
  %734 = vmatpush1.bf16.msra.mxu0 0
  %735 = vmatprep.subr.bf16.mxu0 0
  %736 = vmatpush1.bf16.msra.mxu0 0
  %737 = vmatprep.subr.bf16.mxu0 0
  %738 = vmatpush1.bf16.msra.mxu0 0
  %739 = vmatprep.subr.bf16.mxu0 0
  %740 = vmatpush1.bf16.msra.mxu0 0
  %741 = vmatprep.subr.bf16.mxu0 0
  %742 = vmatpush1.bf16.msra.mxu0 0
  %743 = vmatprep.subr.bf16.mxu0 0
  %744 = vmatpush1.bf16.msra.mxu0 0
  %745 = vmatprep.mubr.bf16.mxu0 0
  %746 = vmatmul.mubr.bf16.gmra.mrb[0].mxu0 %v681
  %v747 = vpop.f32.mrb[0].mxu0
  %v748 = vadd.f32 %v460, %v747
  %v749 = vpop.f32.mrb[0].mxu0
  %v750 = vpop.f32.mrb[0].mxu0
  %v751 = vadd.f32 %v465, %v750
  %v752 = vpop.f32.mrb[0].mxu0
  %753 = vmatprep.mubr.bf16.mxu0 0
  %754 = vmatmul.mubr.bf16.gmra.mrb[0].mxu0 %v682
  %v755 = vpop.f32.mrb[0].mxu0
  %v756 = vadd.f32 %v470, %v755
  %v757 = vpop.f32.mrb[0].mxu0
  %v758 = vpop.f32.mrb[0].mxu0
  %v759 = vadd.f32 %v475, %v758
  %v760 = vpop.f32.mrb[0].mxu0
  %761 = vmatprep.mubr.bf16.mxu0 0
  %762 = vmatmul.mubr.bf16.gmra.mrb[0].mxu0 %v683
  %v763 = vpop.f32.mrb[0].mxu0
  %v764 = vadd.f32 %v480, %v763
  %v765 = vpop.f32.mrb[0].mxu0
  %v766 = vpop.f32.mrb[0].mxu0
  %v767 = vadd.f32 %v485, %v766
  %v768 = vpop.f32.mrb[0].mxu0
  %769 = vmatprep.mubr.bf16.mxu0 0
  %770 = vmatmul.mubr.bf16.gmra.mrb[0].mxu0 %v684
  %v771 = vpop.f32.mrb[0].mxu0
  %v772 = vadd.f32 %v490, %v771
  %v773 = vpop.f32.mrb[0].mxu0
  %v774 = vpop.f32.mrb[0].mxu0
  %v775 = vadd.f32 %v495, %v774
  %v776 = vpop.f32.mrb[0].mxu0
  %777 = vmatprep.mubr.bf16.mxu0 0
  %778 = vmatmul.mubr.bf16.gmra.mrb[0].mxu0 %v685
  %v779 = vpop.f32.mrb[0].mxu0
  %v780 = vadd.f32 %v500, %v779
  %v781 = vpop.f32.mrb[0].mxu0
  %v782 = vpop.f32.mrb[0].mxu0
  %v783 = vadd.f32 %v505, %v782
  %v784 = vpop.f32.mrb[0].mxu0
  %785 = vmatprep.mubr.bf16.mxu0 0
  %786 = vmatmul.mubr.bf16.gmra.mrb[0].mxu0 %v686
  %v787 = vpop.f32.mrb[0].mxu0
  %v788 = vadd.f32 %v510, %v787
  %v789 = vpop.f32.mrb[0].mxu0
  %v790 = vpop.f32.mrb[0].mxu0
  %v791 = vadd.f32 %v515, %v790
  %v792 = vpop.f32.mrb[0].mxu0
  %793 = vmatprep.mubr.bf16.mxu0 0
  %794 = vmatmul.mubr.bf16.gmra.mrb[0].mxu0 %v687
  %v795 = vpop.f32.mrb[0].mxu0
  %v796 = vadd.f32 %v520, %v795
  %v797 = vpop.f32.mrb[0].mxu0
  %v798 = vpop.f32.mrb[0].mxu0
  %v799 = vadd.f32 %v525, %v798
  %v800 = vpop.f32.mrb[0].mxu0
  %801 = vmatprep.mubr.bf16.mxu0 0
  %802 = vmatmul.mubr.bf16.gmra.mrb[0].mxu0 %v688
  %v803 = vpop.f32.mrb[0].mxu0
  %v804 = vadd.f32 %v530, %v803
  %v805 = vpop.f32.mrb[0].mxu0
  %v806 = vpop.f32.mrb[0].mxu0
  %v807 = vadd.f32 %v535, %v806
  %v808 = vpop.f32.mrb[0].mxu0
  %809 = vmatprep.mubr.bf16.mxu0 0
  %810 = vmatmul.mubr.bf16.gmra.mrb[0].mxu0 %v689
  %v811 = vpop.f32.mrb[0].mxu0
  %v812 = vadd.f32 %v540, %v811
  %v813 = vpop.f32.mrb[0].mxu0
  %v814 = vpop.f32.mrb[0].mxu0
  %v815 = vadd.f32 %v545, %v814
  %v816 = vpop.f32.mrb[0].mxu0
  %817 = vmatprep.mubr.bf16.mxu0 0
  %818 = vmatmul.mubr.bf16.gmra.mrb[0].mxu0 %v690
  %v819 = vpop.f32.mrb[0].mxu0
  %v820 = vadd.f32 %v550, %v819
  %v821 = vpop.f32.mrb[0].mxu0
  %v822 = vpop.f32.mrb[0].mxu0
  %v823 = vadd.f32 %v555, %v822
  %v824 = vpop.f32.mrb[0].mxu0
  %825 = vmatprep.mubr.bf16.mxu0 0
  %826 = vmatmul.mubr.bf16.gmra.mrb[0].mxu0 %v691
  %v827 = vpop.f32.mrb[0].mxu0
  %v828 = vadd.f32 %v560, %v827
  %v829 = vpop.f32.mrb[0].mxu0
  %v830 = vpop.f32.mrb[0].mxu0
  %v831 = vadd.f32 %v565, %v830
  %v832 = vpop.f32.mrb[0].mxu0
  %833 = vmatprep.mubr.bf16.mxu0 0
  %834 = vmatmul.mubr.bf16.gmra.mrb[0].mxu0 %v692
  %v835 = vpop.f32.mrb[0].mxu0
  %v836 = vadd.f32 %v570, %v835
  %v837 = vpop.f32.mrb[0].mxu0
  %v838 = vpop.f32.mrb[0].mxu0
  %v839 = vadd.f32 %v575, %v838
  %v840 = vpop.f32.mrb[0].mxu0
  %841 = vmatprep.mubr.bf16.mxu0 0
  %842 = vmatmul.mubr.bf16.gmra.mrb[0].mxu0 %v693
  %v843 = vpop.f32.mrb[0].mxu0
  %v844 = vadd.f32 %v580, %v843
  %v845 = vpop.f32.mrb[0].mxu0
  %v846 = vpop.f32.mrb[0].mxu0
  %v847 = vadd.f32 %v585, %v846
  %v848 = vpop.f32.mrb[0].mxu0
  %849 = vmatprep.mubr.bf16.mxu0 0
  %850 = vmatmul.mubr.bf16.gmra.mrb[0].mxu0 %v694
  %v851 = vpop.f32.mrb[0].mxu0
  %v852 = vadd.f32 %v590, %v851
  %v853 = vpop.f32.mrb[0].mxu0
  %v854 = vpop.f32.mrb[0].mxu0
  %v855 = vadd.f32 %v595, %v854
  %v856 = vpop.f32.mrb[0].mxu0
  %857 = vmatprep.mubr.bf16.mxu0 0
  %858 = vmatmul.mubr.bf16.gmra.mrb[0].mxu0 %v695
  %v859 = vpop.f32.mrb[0].mxu0
  %v860 = vadd.f32 %v600, %v859
  %v861 = vpop.f32.mrb[0].mxu0
  %v862 = vpop.f32.mrb[0].mxu0
  %v863 = vadd.f32 %v605, %v862
  %v864 = vpop.f32.mrb[0].mxu0
  %865 = vmatprep.mubr.bf16.mxu0 0
  %866 = vmatmul.mubr.bf16.gmra.mrb[0].mxu0 %v696
  %v867 = vpop.f32.mrb[0].mxu0
  %v868 = vadd.f32 %v610, %v867
  %v869 = vpop.f32.mrb[0].mxu0
  %v870 = vpop.f32.mrb[0].mxu0
  %v871 = vadd.f32 %v615, %v870
  %v872 = vpop.f32.mrb[0].mxu0
  %873 = vdwg.mxu0
  %vm874 = vcmp.ge.f32.partialorder %v748, 0.0
  %vm875 = vcmp.ge.f32.partialorder %v751, 0.0
  %vm876 = vcmp.ge.f32.partialorder %v756, 0.0
  %vm877 = vcmp.ge.f32.partialorder %v759, 0.0
  %vm878 = vcmp.ge.f32.partialorder %v764, 0.0
  %vm879 = vcmp.ge.f32.partialorder %v767, 0.0
  %vm880 = vcmp.ge.f32.partialorder %v772, 0.0
  %vm881 = vcmp.ge.f32.partialorder %v775, 0.0
  %vm882 = vcmp.ge.f32.partialorder %v780, 0.0
  %vm883 = vcmp.ge.f32.partialorder %v783, 0.0
  %vm884 = vcmp.ge.f32.partialorder %v788, 0.0
  %vm885 = vcmp.ge.f32.partialorder %v791, 0.0
  %vm886 = vcmp.ge.f32.partialorder %v796, 0.0
  %vm887 = vcmp.ge.f32.partialorder %v799, 0.0
  %vm888 = vcmp.ge.f32.partialorder %v804, 0.0
  %vm889 = vcmp.ge.f32.partialorder %v807, 0.0
  %vm890 = vcmp.ge.f32.partialorder %v812, 0.0
  %vm891 = vcmp.ge.f32.partialorder %v815, 0.0
  %vm892 = vcmp.ge.f32.partialorder %v820, 0.0
  %vm893 = vcmp.ge.f32.partialorder %v823, 0.0
  %vm894 = vcmp.ge.f32.partialorder %v828, 0.0
  %vm895 = vcmp.ge.f32.partialorder %v831, 0.0
  %vm896 = vcmp.ge.f32.partialorder %v836, 0.0
  %vm897 = vcmp.ge.f32.partialorder %v839, 0.0
  %vm898 = vcmp.ge.f32.partialorder %v844, 0.0
  %vm899 = vcmp.ge.f32.partialorder %v847, 0.0
  %vm900 = vcmp.ge.f32.partialorder %v852, 0.0
  %vm901 = vcmp.ge.f32.partialorder %v855, 0.0
  %vm902 = vcmp.ge.f32.partialorder %v860, 0.0
  %vm903 = vcmp.ge.f32.partialorder %v863, 0.0
  %vm904 = vcmp.ge.f32.partialorder %v868, 0.0
  %vm905 = vcmp.ge.f32.partialorder %v871, 0.0
  %v906 = vmul.f32 %v748, 0.01
  %v907 = vmul.f32 %v751, 0.01
  %v908 = vmul.f32 %v756, 0.01
  %v909 = vmul.f32 %v759, 0.01
  %v910 = vmul.f32 %v764, 0.01
  %v911 = vmul.f32 %v767, 0.01
  %v912 = vmul.f32 %v772, 0.01
  %v913 = vmul.f32 %v775, 0.01
  %v914 = vmul.f32 %v780, 0.01
  %v915 = vmul.f32 %v783, 0.01
  %v916 = vmul.f32 %v788, 0.01
  %v917 = vmul.f32 %v791, 0.01
  %v918 = vmul.f32 %v796, 0.01
  %v919 = vmul.f32 %v799, 0.01
  %v920 = vmul.f32 %v804, 0.01
  %v921 = vmul.f32 %v807, 0.01
  %v922 = vmul.f32 %v812, 0.01
  %v923 = vmul.f32 %v815, 0.01
  %v924 = vmul.f32 %v820, 0.01
  %v925 = vmul.f32 %v823, 0.01
  %v926 = vmul.f32 %v828, 0.01
  %v927 = vmul.f32 %v831, 0.01
  %v928 = vmul.f32 %v836, 0.01
  %v929 = vmul.f32 %v839, 0.01
  %v930 = vmul.f32 %v844, 0.01
  %v931 = vmul.f32 %v847, 0.01
  %v932 = vmul.f32 %v852, 0.01
  %v933 = vmul.f32 %v855, 0.01
  %v934 = vmul.f32 %v860, 0.01
  %v935 = vmul.f32 %v863, 0.01
  %v936 = vmul.f32 %v868, 0.01
  %v937 = vmul.f32 %v871, 0.01
  %v938 = vsel %vm874, %v748, %v906
  %v939 = vsel %vm875, %v751, %v907
  %v940 = vsel %vm876, %v756, %v908
  %v941 = vsel %vm877, %v759, %v909
  %v942 = vsel %vm878, %v764, %v910
  %v943 = vsel %vm879, %v767, %v911
  %v944 = vsel %vm880, %v772, %v912
  %v945 = vsel %vm881, %v775, %v913
  %v946 = vsel %vm882, %v780, %v914
  %v947 = vsel %vm883, %v783, %v915
  %v948 = vsel %vm884, %v788, %v916
  %v949 = vsel %vm885, %v791, %v917
  %v950 = vsel %vm886, %v796, %v918
  %v951 = vsel %vm887, %v799, %v919
  %v952 = vsel %vm888, %v804, %v920
  %v953 = vsel %vm889, %v807, %v921
  %v954 = vsel %vm890, %v812, %v922
  %v955 = vsel %vm891, %v815, %v923
  %v956 = vsel %vm892, %v820, %v924
  %v957 = vsel %vm893, %v823, %v925
  %v958 = vsel %vm894, %v828, %v926
  %v959 = vsel %vm895, %v831, %v927
  %v960 = vsel %vm896, %v836, %v928
  %v961 = vsel %vm897, %v839, %v929
  %v962 = vsel %vm898, %v844, %v930
  %v963 = vsel %vm899, %v847, %v931
  %v964 = vsel %vm900, %v852, %v932
  %v965 = vsel %vm901, %v855, %v933
  %v966 = vsel %vm902, %v860, %v934
  %v967 = vsel %vm903, %v863, %v935
  %v968 = vsel %vm904, %v868, %v936
  %v969 = vsel %vm905, %v871, %v937
  %v970 = vld [vmem:[%s6] sm:$0xff]
  %v971 = vld [vmem:[%s6 + $0x8] sm:$0xff]
  %v972 = vld [vmem:[%s6 + $0x10] sm:$0xff]
  %v973 = vld [vmem:[%s6 + $0x18] sm:$0xff]
  %v974 = vld [vmem:[%s6 + $0x20] sm:$0xff]
  %v975 = vld [vmem:[%s6 + $0x28] sm:$0xff]
  %v976 = vld [vmem:[%s6 + $0x30] sm:$0xff]
  %v977 = vld [vmem:[%s6 + $0x38] sm:$0xff]
  %v978 = vld [vmem:[%s6 + $0x40] sm:$0xff]
  %v979 = vld [vmem:[%s6 + $0x48] sm:$0xff]
  %v980 = vld [vmem:[%s6 + $0x50] sm:$0xff]
  %v981 = vld [vmem:[%s6 + $0x58] sm:$0xff]
  %v982 = vld [vmem:[%s6 + $0x60] sm:$0xff]
  %v983 = vld [vmem:[%s6 + $0x68] sm:$0xff]
  %v984 = vld [vmem:[%s6 + $0x70] sm:$0xff]
  %v985 = vld [vmem:[%s6 + $0x78] sm:$0xff]
  %v986 = vld [vmem:[%s6 + $0x80] sm:$0xff]
  %v987 = vld [vmem:[%s6 + $0x88] sm:$0xff]
  %v988 = vld [vmem:[%s6 + $0x90] sm:$0xff]
  %v989 = vld [vmem:[%s6 + $0x98] sm:$0xff]
  %v990 = vld [vmem:[%s6 + $0xa0] sm:$0xff]
  %v991 = vld [vmem:[%s6 + $0xa8] sm:$0xff]
  %v992 = vld [vmem:[%s6 + $0xb0] sm:$0xff]
  %v993 = vld [vmem:[%s6 + $0xb8] sm:$0xff]
  %v994 = vld [vmem:[%s6 + $0xc0] sm:$0xff]
  %v995 = vld [vmem:[%s6 + $0xc8] sm:$0xff]
  %v996 = vld [vmem:[%s6 + $0xd0] sm:$0xff]
  %v997 = vld [vmem:[%s6 + $0xd8] sm:$0xff]
  %v998 = vld [vmem:[%s6 + $0xe0] sm:$0xff]
  %v999 = vld [vmem:[%s6 + $0xe8] sm:$0xff]
  %v1000 = vld [vmem:[%s6 + $0xf0] sm:$0xff]
  %v1001 = vld [vmem:[%s6 + $0xf8] sm:$0xff]
  %v1002 = vpack.c.bf16 %v939, %v938
  %v1003 = vpack.c.bf16 %v941, %v940
  %v1004 = vpack.c.bf16 %v943, %v942
  %v1005 = vpack.c.bf16 %v945, %v944
  %v1006 = vpack.c.bf16 %v947, %v946
  %v1007 = vpack.c.bf16 %v949, %v948
  %v1008 = vpack.c.bf16 %v951, %v950
  %v1009 = vpack.c.bf16 %v953, %v952
  %v1010 = vpack.c.bf16 %v955, %v954
  %v1011 = vpack.c.bf16 %v957, %v956
  %v1012 = vpack.c.bf16 %v959, %v958
  %v1013 = vpack.c.bf16 %v961, %v960
  %v1014 = vpack.c.bf16 %v963, %v962
  %v1015 = vpack.c.bf16 %v965, %v964
  %v1016 = vpack.c.bf16 %v967, %v966
  %v1017 = vpack.c.bf16 %v969, %v968
  %v1018 = vld [vmem:[%s7] sm:$0xff]
  %v1019 = vld [vmem:[%s7 + $0x8] sm:$0xff]
  %v1020 = vld [vmem:[%s7 + $0x10] sm:$0xff]
  %v1021 = vld [vmem:[%s7 + $0x18] sm:$0xff]
  %v1022 = vld [vmem:[%s7 + $0x20] sm:$0xff]
  %v1023 = vld [vmem:[%s7 + $0x28] sm:$0xff]
  %v1024 = vld [vmem:[%s7 + $0x30] sm:$0xff]
  %v1025 = vld [vmem:[%s7 + $0x38] sm:$0xff]
  %v1026 = vld [vmem:[%s7 + $0x40] sm:$0xff]
  %v1027 = vld [vmem:[%s7 + $0x48] sm:$0xff]
  %v1028 = vld [vmem:[%s7 + $0x50] sm:$0xff]
  %v1029 = vld [vmem:[%s7 + $0x58] sm:$0xff]
  %v1030 = vld [vmem:[%s7 + $0x60] sm:$0xff]
  %v1031 = vld [vmem:[%s7 + $0x68] sm:$0xff]
  %v1032 = vld [vmem:[%s7 + $0x70] sm:$0xff]
  %v1033 = vld [vmem:[%s7 + $0x78] sm:$0xff]
  %v1034 = vld [vmem:[%s7 + $0x80] sm:$0xff]
  %v1035 = vld [vmem:[%s7 + $0x88] sm:$0xff]
  %v1036 = vld [vmem:[%s7 + $0x90] sm:$0xff]
  %v1037 = vld [vmem:[%s7 + $0x98] sm:$0xff]
  %v1038 = vld [vmem:[%s7 + $0xa0] sm:$0xff]
  %v1039 = vld [vmem:[%s7 + $0xa8] sm:$0xff]
  %v1040 = vld [vmem:[%s7 + $0xb0] sm:$0xff]
  %v1041 = vld [vmem:[%s7 + $0xb8] sm:$0xff]
  %v1042 = vld [vmem:[%s7 + $0xc0] sm:$0xff]
  %v1043 = vld [vmem:[%s7 + $0xc8] sm:$0xff]
  %v1044 = vld [vmem:[%s7 + $0xd0] sm:$0xff]
  %v1045 = vld [vmem:[%s7 + $0xd8] sm:$0xff]
  %v1046 = vld [vmem:[%s7 + $0xe0] sm:$0xff]
  %v1047 = vld [vmem:[%s7 + $0xe8] sm:$0xff]
  %v1048 = vld [vmem:[%s7 + $0xf0] sm:$0xff]
  %v1049 = vld [vmem:[%s7 + $0xf8] sm:$0xff]
  %1051 = vset.pattern.permute.xlu0 0
  %1052 = vperm.xlu0 %1051, %v1018
  %v1053 = vpop.permute.xlu0 %1052
  %1056 = vset.pattern.permute.xlu0 0
  %1057 = vperm.xlu0 %1056, %v1019
  %v1058 = vpop.permute.xlu0 %1057
  %1061 = vset.pattern.permute.xlu0 0
  %1062 = vperm.xlu0 %1061, %v1020
  %v1063 = vpop.permute.xlu0 %1062
  %1066 = vset.pattern.permute.xlu0 0
  %1067 = vperm.xlu0 %1066, %v1021
  %v1068 = vpop.permute.xlu0 %1067
  %1071 = vset.pattern.permute.xlu0 0
  %1072 = vperm.xlu0 %1071, %v1022
  %v1073 = vpop.permute.xlu0 %1072
  %1076 = vset.pattern.permute.xlu0 0
  %1077 = vperm.xlu0 %1076, %v1023
  %v1078 = vpop.permute.xlu0 %1077
  %1081 = vset.pattern.permute.xlu0 0
  %1082 = vperm.xlu0 %1081, %v1024
  %v1083 = vpop.permute.xlu0 %1082
  %1086 = vset.pattern.permute.xlu0 0
  %1087 = vperm.xlu0 %1086, %v1025
  %v1088 = vpop.permute.xlu0 %1087
  %1091 = vset.pattern.permute.xlu0 0
  %1092 = vperm.xlu0 %1091, %v1026
  %v1093 = vpop.permute.xlu0 %1092
  %1096 = vset.pattern.permute.xlu0 0
  %1097 = vperm.xlu0 %1096, %v1027
  %v1098 = vpop.permute.xlu0 %1097
  %1101 = vset.pattern.permute.xlu0 0
  %1102 = vperm.xlu0 %1101, %v1028
  %v1103 = vpop.permute.xlu0 %1102
  %1106 = vset.pattern.permute.xlu0 0
  %1107 = vperm.xlu0 %1106, %v1029
  %v1108 = vpop.permute.xlu0 %1107
  %1111 = vset.pattern.permute.xlu0 0
  %1112 = vperm.xlu0 %1111, %v1030
  %v1113 = vpop.permute.xlu0 %1112
  %1116 = vset.pattern.permute.xlu0 0
  %1117 = vperm.xlu0 %1116, %v1031
  %v1118 = vpop.permute.xlu0 %1117
  %1121 = vset.pattern.permute.xlu0 0
  %1122 = vperm.xlu0 %1121, %v1032
  %v1123 = vpop.permute.xlu0 %1122
  %1126 = vset.pattern.permute.xlu0 0
  %1127 = vperm.xlu0 %1126, %v1033
  %v1128 = vpop.permute.xlu0 %1127
  %1131 = vset.pattern.permute.xlu0 0
  %1132 = vperm.xlu0 %1131, %v1034
  %v1133 = vpop.permute.xlu0 %1132
  %1136 = vset.pattern.permute.xlu0 0
  %1137 = vperm.xlu0 %1136, %v1035
  %v1138 = vpop.permute.xlu0 %1137
  %1141 = vset.pattern.permute.xlu0 0
  %1142 = vperm.xlu0 %1141, %v1036
  %v1143 = vpop.permute.xlu0 %1142
  %1146 = vset.pattern.permute.xlu0 0
  %1147 = vperm.xlu0 %1146, %v1037
  %v1148 = vpop.permute.xlu0 %1147
  %1151 = vset.pattern.permute.xlu0 0
  %1152 = vperm.xlu0 %1151, %v1038
  %v1153 = vpop.permute.xlu0 %1152
  %1156 = vset.pattern.permute.xlu0 0
  %1157 = vperm.xlu0 %1156, %v1039
  %v1158 = vpop.permute.xlu0 %1157
  %1161 = vset.pattern.permute.xlu0 0
  %1162 = vperm.xlu0 %1161, %v1040
  %v1163 = vpop.permute.xlu0 %1162
  %1166 = vset.pattern.permute.xlu0 0
  %1167 = vperm.xlu0 %1166, %v1041
  %v1168 = vpop.permute.xlu0 %1167
  %1171 = vset.pattern.permute.xlu0 0
  %1172 = vperm.xlu0 %1171, %v1042
  %v1173 = vpop.permute.xlu0 %1172
  %1176 = vset.pattern.permute.xlu0 0
  %1177 = vperm.xlu0 %1176, %v1043
  %v1178 = vpop.permute.xlu0 %1177
  %1181 = vset.pattern.permute.xlu0 0
  %1182 = vperm.xlu0 %1181, %v1044
  %v1183 = vpop.permute.xlu0 %1182
  %1186 = vset.pattern.permute.xlu0 0
  %1187 = vperm.xlu0 %1186, %v1045
  %v1188 = vpop.permute.xlu0 %1187
  %1191 = vset.pattern.permute.xlu0 0
  %1192 = vperm.xlu0 %1191, %v1046
  %v1193 = vpop.permute.xlu0 %1192
  %1196 = vset.pattern.permute.xlu0 0
  %1197 = vperm.xlu0 %1196, %v1047
  %v1198 = vpop.permute.xlu0 %1197
  %1201 = vset.pattern.permute.xlu0 0
  %1202 = vperm.xlu0 %1201, %v1048
  %v1203 = vpop.permute.xlu0 %1202
  %1206 = vset.pattern.permute.xlu0 0
  %1207 = vperm.xlu0 %1206, %v1049
  %v1208 = vpop.permute.xlu0 %1207
  %v1242 = vunpack.c.l.b16 %v970
  %v1243 = vunpack.c.h.b16 %v970
  %v1244 = vunpack.c.l.b16 %v971
  %v1245 = vunpack.c.h.b16 %v971
  %v1246 = vunpack.c.l.b16 %v972
  %v1247 = vunpack.c.h.b16 %v972
  %v1248 = vunpack.c.l.b16 %v973
  %v1249 = vunpack.c.h.b16 %v973
  %v1250 = vunpack.c.l.b16 %v974
  %v1251 = vunpack.c.h.b16 %v974
  %v1252 = vunpack.c.l.b16 %v975
  %v1253 = vunpack.c.h.b16 %v975
  %v1254 = vunpack.c.l.b16 %v976
  %v1255 = vunpack.c.h.b16 %v976
  %v1256 = vunpack.c.l.b16 %v977
  %v1257 = vunpack.c.h.b16 %v977
  %v1258 = vunpack.c.l.b16 %v978
  %v1259 = vunpack.c.h.b16 %v978
  %v1260 = vunpack.c.l.b16 %v979
  %v1261 = vunpack.c.h.b16 %v979
  %v1262 = vunpack.c.l.b16 %v980
  %v1263 = vunpack.c.h.b16 %v980
  %v1264 = vunpack.c.l.b16 %v981
  %v1265 = vunpack.c.h.b16 %v981
  %v1266 = vunpack.c.l.b16 %v982
  %v1267 = vunpack.c.h.b16 %v982
  %v1268 = vunpack.c.l.b16 %v983
  %v1269 = vunpack.c.h.b16 %v983
  %v1270 = vunpack.c.l.b16 %v984
  %v1271 = vunpack.c.h.b16 %v984
  %v1272 = vunpack.c.l.b16 %v985
  %v1273 = vunpack.c.h.b16 %v985
  %v1274 = vunpack.c.l.b16 %v986
  %v1275 = vunpack.c.h.b16 %v986
  %v1276 = vunpack.c.l.b16 %v987
  %v1277 = vunpack.c.h.b16 %v987
  %v1278 = vunpack.c.l.b16 %v988
  %v1279 = vunpack.c.h.b16 %v988
  %v1280 = vunpack.c.l.b16 %v989
  %v1281 = vunpack.c.h.b16 %v989
  %v1282 = vunpack.c.l.b16 %v990
  %v1283 = vunpack.c.h.b16 %v990
  %v1284 = vunpack.c.l.b16 %v991
  %v1285 = vunpack.c.h.b16 %v991
  %v1286 = vunpack.c.l.b16 %v992
  %v1287 = vunpack.c.h.b16 %v992
  %v1288 = vunpack.c.l.b16 %v993
  %v1289 = vunpack.c.h.b16 %v993
  %v1290 = vunpack.c.l.b16 %v994
  %v1291 = vunpack.c.h.b16 %v994
  %v1292 = vunpack.c.l.b16 %v995
  %v1293 = vunpack.c.h.b16 %v995
  %v1294 = vunpack.c.l.b16 %v996
  %v1295 = vunpack.c.h.b16 %v996
  %v1296 = vunpack.c.l.b16 %v997
  %v1297 = vunpack.c.h.b16 %v997
  %v1298 = vunpack.c.l.b16 %v998
  %v1299 = vunpack.c.h.b16 %v998
  %v1300 = vunpack.c.l.b16 %v999
  %v1301 = vunpack.c.h.b16 %v999
  %v1302 = vunpack.c.l.b16 %v1000
  %v1303 = vunpack.c.h.b16 %v1000
  %v1304 = vunpack.c.l.b16 %v1001
  %v1305 = vunpack.c.h.b16 %v1001
  %v1306 = vpack.c.b16 %v1244, %v1242
  %v1307 = vpack.c.b16 %v1245, %v1243
  %v1308 = vpack.c.b16 %v1248, %v1246
  %v1309 = vpack.c.b16 %v1249, %v1247
  %v1310 = vpack.c.b16 %v1252, %v1250
  %v1311 = vpack.c.b16 %v1253, %v1251
  %v1312 = vpack.c.b16 %v1256, %v1254
  %v1313 = vpack.c.b16 %v1257, %v1255
  %v1314 = vpack.c.b16 %v1260, %v1258
  %v1315 = vpack.c.b16 %v1261, %v1259
  %v1316 = vpack.c.b16 %v1264, %v1262
  %v1317 = vpack.c.b16 %v1265, %v1263
  %v1318 = vpack.c.b16 %v1268, %v1266
  %v1319 = vpack.c.b16 %v1269, %v1267
  %v1320 = vpack.c.b16 %v1272, %v1270
  %v1321 = vpack.c.b16 %v1273, %v1271
  %v1322 = vpack.c.b16 %v1276, %v1274
  %v1323 = vpack.c.b16 %v1277, %v1275
  %v1324 = vpack.c.b16 %v1280, %v1278
  %v1325 = vpack.c.b16 %v1281, %v1279
  %v1326 = vpack.c.b16 %v1284, %v1282
  %v1327 = vpack.c.b16 %v1285, %v1283
  %v1328 = vpack.c.b16 %v1288, %v1286
  %v1329 = vpack.c.b16 %v1289, %v1287
  %v1330 = vpack.c.b16 %v1292, %v1290
  %v1331 = vpack.c.b16 %v1293, %v1291
  %v1332 = vpack.c.b16 %v1296, %v1294
  %v1333 = vpack.c.b16 %v1297, %v1295
  %v1334 = vpack.c.b16 %v1300, %v1298
  %v1335 = vpack.c.b16 %v1301, %v1299
  %v1336 = vpack.c.b16 %v1304, %v1302
  %v1337 = vpack.c.b16 %v1305, %v1303
  %1370 = vmatprep.subr.bf16.mxu0 0
  %1371 = vmatpush1.bf16.msra.mxu0 %v1002
  %1372 = vmatprep.subr.bf16.mxu0 0
  %1373 = vmatpush1.bf16.msra.mxu0 %v1003
  %1374 = vmatprep.subr.bf16.mxu0 0
  %1375 = vmatpush1.bf16.msra.mxu0 %v1004
  %1376 = vmatprep.subr.bf16.mxu0 0
  %1377 = vmatpush1.bf16.msra.mxu0 %v1005
  %1378 = vmatprep.subr.bf16.mxu0 0
  %1379 = vmatpush1.bf16.msra.mxu0 %v1006
  %1380 = vmatprep.subr.bf16.mxu0 0
  %1381 = vmatpush1.bf16.msra.mxu0 %v1007
  %1382 = vmatprep.subr.bf16.mxu0 0
  %1383 = vmatpush1.bf16.msra.mxu0 %v1008
  %1384 = vmatprep.subr.bf16.mxu0 0
  %1385 = vmatpush1.bf16.msra.mxu0 %v1009
  %1386 = vmatprep.subr.bf16.mxu0 0
  %1387 = vmatpush1.bf16.msra.mxu0 %v1010
  %1388 = vmatprep.subr.bf16.mxu0 0
  %1389 = vmatpush1.bf16.msra.mxu0 %v1011
  %1390 = vmatprep.subr.bf16.mxu0 0
  %1391 = vmatpush1.bf16.msra.mxu0 %v1012
  %1392 = vmatprep.subr.bf16.mxu0 0
  %1393 = vmatpush1.bf16.msra.mxu0 %v1013
  %1394 = vmatprep.subr.bf16.mxu0 0
  %1395 = vmatpush1.bf16.msra.mxu0 %v1014
  %1396 = vmatprep.subr.bf16.mxu0 0
  %1397 = vmatpush1.bf16.msra.mxu0 %v1015
  %1398 = vmatprep.subr.bf16.mxu0 0
  %1399 = vmatpush1.bf16.msra.mxu0 %v1016
  %1400 = vmatprep.subr.bf16.mxu0 0
  %1401 = vmatpush1.bf16.msra.mxu0 %v1017
  %1402 = vmatprep.mubr.bf16.mxu0 %v1307
  %1403 = vmatmul.mubr.bf16.gmra.mrb[0].mxu0 %v1306
  %v1404 = vpop.f32.mrb[0].mxu0
  %v1405 = vadd.f32 %v1053, %v1404
  %v1406 = vpop.f32.mrb[0].mxu0
  %v1407 = vpop.f32.mrb[0].mxu0
  %v1408 = vadd.f32 %v1058, %v1407
  %v1409 = vpop.f32.mrb[0].mxu0
  %1410 = vmatprep.mubr.bf16.mxu0 %v1309
  %1411 = vmatmul.mubr.bf16.gmra.mrb[0].mxu0 %v1308
  %v1412 = vpop.f32.mrb[0].mxu0
  %v1413 = vadd.f32 %v1063, %v1412
  %v1414 = vpop.f32.mrb[0].mxu0
  %v1415 = vpop.f32.mrb[0].mxu0
  %v1416 = vadd.f32 %v1068, %v1415
  %v1417 = vpop.f32.mrb[0].mxu0
  %1418 = vmatprep.mubr.bf16.mxu0 %v1311
  %1419 = vmatmul.mubr.bf16.gmra.mrb[0].mxu0 %v1310
  %v1420 = vpop.f32.mrb[0].mxu0
  %v1421 = vadd.f32 %v1073, %v1420
  %v1422 = vpop.f32.mrb[0].mxu0
  %v1423 = vpop.f32.mrb[0].mxu0
  %v1424 = vadd.f32 %v1078, %v1423
  %v1425 = vpop.f32.mrb[0].mxu0
  %1426 = vmatprep.mubr.bf16.mxu0 %v1313
  %1427 = vmatmul.mubr.bf16.gmra.mrb[0].mxu0 %v1312
  %v1428 = vpop.f32.mrb[0].mxu0
  %v1429 = vadd.f32 %v1083, %v1428
  %v1430 = vpop.f32.mrb[0].mxu0
  %v1431 = vpop.f32.mrb[0].mxu0
  %v1432 = vadd.f32 %v1088, %v1431
  %v1433 = vpop.f32.mrb[0].mxu0
  %1434 = vmatprep.mubr.bf16.mxu0 %v1315
  %1435 = vmatmul.mubr.bf16.gmra.mrb[0].mxu0 %v1314
  %v1436 = vpop.f32.mrb[0].mxu0
  %v1437 = vadd.f32 %v1093, %v1436
  %v1438 = vpop.f32.mrb[0].mxu0
  %v1439 = vpop.f32.mrb[0].mxu0
  %v1440 = vadd.f32 %v1098, %v1439
  %v1441 = vpop.f32.mrb[0].mxu0
  %1442 = vmatprep.mubr.bf16.mxu0 %v1317
  %1443 = vmatmul.mubr.bf16.gmra.mrb[0].mxu0 %v1316
  %v1444 = vpop.f32.mrb[0].mxu0
  %v1445 = vadd.f32 %v1103, %v1444
  %v1446 = vpop.f32.mrb[0].mxu0
  %v1447 = vpop.f32.mrb[0].mxu0
  %v1448 = vadd.f32 %v1108, %v1447
  %v1449 = vpop.f32.mrb[0].mxu0
  %1450 = vmatprep.mubr.bf16.mxu0 %v1319
  %1451 = vmatmul.mubr.bf16.gmra.mrb[0].mxu0 %v1318
  %v1452 = vpop.f32.mrb[0].mxu0
  %v1453 = vadd.f32 %v1113, %v1452
  %v1454 = vpop.f32.mrb[0].mxu0
  %v1455 = vpop.f32.mrb[0].mxu0
  %v1456 = vadd.f32 %v1118, %v1455
  %v1457 = vpop.f32.mrb[0].mxu0
  %1458 = vmatprep.mubr.bf16.mxu0 %v1321
  %1459 = vmatmul.mubr.bf16.gmra.mrb[0].mxu0 %v1320
  %v1460 = vpop.f32.mrb[0].mxu0
  %v1461 = vadd.f32 %v1123, %v1460
  %v1462 = vpop.f32.mrb[0].mxu0
  %v1463 = vpop.f32.mrb[0].mxu0
  %v1464 = vadd.f32 %v1128, %v1463
  %v1465 = vpop.f32.mrb[0].mxu0
  %1466 = vmatprep.mubr.bf16.mxu0 %v1323
  %1467 = vmatmul.mubr.bf16.gmra.mrb[0].mxu0 %v1322
  %v1468 = vpop.f32.mrb[0].mxu0
  %v1469 = vadd.f32 %v1133, %v1468
  %v1470 = vpop.f32.mrb[0].mxu0
  %v1471 = vpop.f32.mrb[0].mxu0
  %v1472 = vadd.f32 %v1138, %v1471
  %v1473 = vpop.f32.mrb[0].mxu0
  %1474 = vmatprep.mubr.bf16.mxu0 %v1325
  %1475 = vmatmul.mubr.bf16.gmra.mrb[0].mxu0 %v1324
  %v1476 = vpop.f32.mrb[0].mxu0
  %v1477 = vadd.f32 %v1143, %v1476
  %v1478 = vpop.f32.mrb[0].mxu0
  %v1479 = vpop.f32.mrb[0].mxu0
  %v1480 = vadd.f32 %v1148, %v1479
  %v1481 = vpop.f32.mrb[0].mxu0
  %1482 = vmatprep.mubr.bf16.mxu0 %v1327
  %1483 = vmatmul.mubr.bf16.gmra.mrb[0].mxu0 %v1326
  %v1484 = vpop.f32.mrb[0].mxu0
  %v1485 = vadd.f32 %v1153, %v1484
  %v1486 = vpop.f32.mrb[0].mxu0
  %v1487 = vpop.f32.mrb[0].mxu0
  %v1488 = vadd.f32 %v1158, %v1487
  %v1489 = vpop.f32.mrb[0].mxu0
  %1490 = vmatprep.mubr.bf16.mxu0 %v1329
  %1491 = vmatmul.mubr.bf16.gmra.mrb[0].mxu0 %v1328
  %v1492 = vpop.f32.mrb[0].mxu0
  %v1493 = vadd.f32 %v1163, %v1492
  %v1494 = vpop.f32.mrb[0].mxu0
  %v1495 = vpop.f32.mrb[0].mxu0
  %v1496 = vadd.f32 %v1168, %v1495
  %v1497 = vpop.f32.mrb[0].mxu0
  %1498 = vmatprep.mubr.bf16.mxu0 %v1331
  %1499 = vmatmul.mubr.bf16.gmra.mrb[0].mxu0 %v1330
  %v1500 = vpop.f32.mrb[0].mxu0
  %v1501 = vadd.f32 %v1173, %v1500
  %v1502 = vpop.f32.mrb[0].mxu0
  %v1503 = vpop.f32.mrb[0].mxu0
  %v1504 = vadd.f32 %v1178, %v1503
  %v1505 = vpop.f32.mrb[0].mxu0
  %1506 = vmatprep.mubr.bf16.mxu0 %v1333
  %1507 = vmatmul.mubr.bf16.gmra.mrb[0].mxu0 %v1332
  %v1508 = vpop.f32.mrb[0].mxu0
  %v1509 = vadd.f32 %v1183, %v1508
  %v1510 = vpop.f32.mrb[0].mxu0
  %v1511 = vpop.f32.mrb[0].mxu0
  %v1512 = vadd.f32 %v1188, %v1511
  %v1513 = vpop.f32.mrb[0].mxu0
  %1514 = vmatprep.mubr.bf16.mxu0 %v1335
  %1515 = vmatmul.mubr.bf16.gmra.mrb[0].mxu0 %v1334
  %v1516 = vpop.f32.mrb[0].mxu0
  %v1517 = vadd.f32 %v1193, %v1516
  %v1518 = vpop.f32.mrb[0].mxu0
  %v1519 = vpop.f32.mrb[0].mxu0
  %v1520 = vadd.f32 %v1198, %v1519
  %v1521 = vpop.f32.mrb[0].mxu0
  %1522 = vmatprep.mubr.bf16.mxu0 %v1337
  %1523 = vmatmul.mubr.bf16.gmra.mrb[0].mxu0 %v1336
  %v1524 = vpop.f32.mrb[0].mxu0
  %v1525 = vadd.f32 %v1203, %v1524
  %v1526 = vpop.f32.mrb[0].mxu0
  %v1527 = vpop.f32.mrb[0].mxu0
  %v1528 = vadd.f32 %v1208, %v1527
  %v1529 = vpop.f32.mrb[0].mxu0
  %1530 = vdwg.mxu0
  %1531 = vst [vmem:[#allocation2] sm:$0xff] %v1405
  %1532 = vst [vmem:[#allocation2 + $0x8] sm:$0xff] %v1408
  %1533 = vst [vmem:[#allocation2 + $0x10] sm:$0xff] %v1413
  %1534 = vst [vmem:[#allocation2 + $0x18] sm:$0xff] %v1416
  %1535 = vst [vmem:[#allocation2 + $0x20] sm:$0xff] %v1421
  %1536 = vst [vmem:[#allocation2 + $0x28] sm:$0xff] %v1424
  %1537 = vst [vmem:[#allocation2 + $0x30] sm:$0xff] %v1429
  %1538 = vst [vmem:[#allocation2 + $0x38] sm:$0xff] %v1432
  %1539 = vst [vmem:[#allocation2 + $0x40] sm:$0xff] %v1437
  %1540 = vst [vmem:[#allocation2 + $0x48] sm:$0xff] %v1440
  %1541 = vst [vmem:[#allocation2 + $0x50] sm:$0xff] %v1445
  %1542 = vst [vmem:[#allocation2 + $0x58] sm:$0xff] %v1448
  %1543 = vst [vmem:[#allocation2 + $0x60] sm:$0xff] %v1453
  %1544 = vst [vmem:[#allocation2 + $0x68] sm:$0xff] %v1456
  %1545 = vst [vmem:[#allocation2 + $0x70] sm:$0xff] %v1461
  %1546 = vst [vmem:[#allocation2 + $0x78] sm:$0xff] %v1464
  %1547 = vst [vmem:[#allocation2 + $0x80] sm:$0xff] %v1469
  %1548 = vst [vmem:[#allocation2 + $0x88] sm:$0xff] %v1472
  %1549 = vst [vmem:[#allocation2 + $0x90] sm:$0xff] %v1477
  %1550 = vst [vmem:[#allocation2 + $0x98] sm:$0xff] %v1480
  %1551 = vst [vmem:[#allocation2 + $0xa0] sm:$0xff] %v1485
  %1552 = vst [vmem:[#allocation2 + $0xa8] sm:$0xff] %v1488
  %1553 = vst [vmem:[#allocation2 + $0xb0] sm:$0xff] %v1493
  %1554 = vst [vmem:[#allocation2 + $0xb8] sm:$0xff] %v1496
  %1555 = vst [vmem:[#allocation2 + $0xc0] sm:$0xff] %v1501
  %1556 = vst [vmem:[#allocation2 + $0xc8] sm:$0xff] %v1504
  %1557 = vst [vmem:[#allocation2 + $0xd0] sm:$0xff] %v1509
  %1558 = vst [vmem:[#allocation2 + $0xd8] sm:$0xff] %v1512
  %1559 = vst [vmem:[#allocation2 + $0xe0] sm:$0xff] %v1517
  %1560 = vst [vmem:[#allocation2 + $0xe8] sm:$0xff] %v1520
  %1561 = vst [vmem:[#allocation2 + $0xf0] sm:$0xff] %v1525
  %1562 = vst [vmem:[#allocation2 + $0xf8] sm:$0xff] %v1528
  %v1563 = vld [vmem:[%s1] sm:$0xff]
  %v1564 = vld [vmem:[%s1 + $0x8] sm:$0xff]
  %v1565 = vld [vmem:[%s1 + $0x10] sm:$0xff]
  %v1566 = vld [vmem:[%s1 + $0x18] sm:$0xff]
  %v1567 = vld [vmem:[%s1 + $0x20] sm:$0xff]
  %v1568 = vld [vmem:[%s1 + $0x28] sm:$0xff]
  %v1569 = vld [vmem:[%s1 + $0x30] sm:$0xff]
  %v1570 = vld [vmem:[%s1 + $0x38] sm:$0xff]
  %v1571 = vld [vmem:[%s8] sm:$0xff]
  %v1572 = vld [vmem:[%s8 + $0x8] sm:$0xff]
  %v1573 = vld [vmem:[%s8 + $0x10] sm:$0xff]
  %v1574 = vld [vmem:[%s8 + $0x18] sm:$0xff]
  %v1575 = vld [vmem:[#allocation2] sm:$0xff]
  %v1576 = vld [vmem:[#allocation2 + $0x8] sm:$0xff]
  %v1577 = vld [vmem:[#allocation2 + $0x10] sm:$0xff]
  %v1578 = vld [vmem:[#allocation2 + $0x18] sm:$0xff]
  %v1579 = vlaneseq
  %v1580 = vshrl.u32 %v1579, 7
  %v1581 = vsub.s32 0, %v1580
  %v1582 = vrot.slane %v1563, %v1581
  %v1583 = vmul.f32 %v1582, %v1575
  %v1584 = vmul.f32 %v1582, %v1576
  %v1585 = vmul.f32 %v1582, %v1577
  %v1586 = vmul.f32 %v1582, %v1578
  %v1587 = vld [vmem:[#allocation2 + $0x20] sm:$0xff]
  %v1588 = vld [vmem:[#allocation2 + $0x28] sm:$0xff]
  %v1589 = vld [vmem:[#allocation2 + $0x30] sm:$0xff]
  %v1590 = vld [vmem:[#allocation2 + $0x38] sm:$0xff]
  %v1591 = vlaneseq
  %v1592 = vshrl.u32 %v1591, 7
  %v1593 = vsub.s32 1, %v1592
  %v1594 = vrot.slane %v1563, %v1593
  %v1595 = vmul.f32 %v1594, %v1587
  %v1596 = vmul.f32 %v1594, %v1588
  %v1597 = vmul.f32 %v1594, %v1589
  %v1598 = vmul.f32 %v1594, %v1590
  %v1599 = vadd.f32 %v1583, %v1595
  %v1600 = vadd.f32 %v1584, %v1596
  %v1601 = vadd.f32 %v1585, %v1597
  %v1602 = vadd.f32 %v1586, %v1598
  %v1603 = vld [vmem:[#allocation2 + $0x40] sm:$0xff]
  %v1604 = vld [vmem:[#allocation2 + $0x48] sm:$0xff]
  %v1605 = vld [vmem:[#allocation2 + $0x50] sm:$0xff]
  %v1606 = vld [vmem:[#allocation2 + $0x58] sm:$0xff]
  %v1607 = vlaneseq
  %v1608 = vshrl.u32 %v1607, 7
  %v1609 = vsub.s32 2, %v1608
  %v1610 = vrot.slane %v1563, %v1609
  %v1611 = vmul.f32 %v1610, %v1603
  %v1612 = vmul.f32 %v1610, %v1604
  %v1613 = vmul.f32 %v1610, %v1605
  %v1614 = vmul.f32 %v1610, %v1606
  %v1615 = vadd.f32 %v1599, %v1611
  %v1616 = vadd.f32 %v1600, %v1612
  %v1617 = vadd.f32 %v1601, %v1613
  %v1618 = vadd.f32 %v1602, %v1614
  %v1619 = vld [vmem:[#allocation2 + $0x60] sm:$0xff]
  %v1620 = vld [vmem:[#allocation2 + $0x68] sm:$0xff]
  %v1621 = vld [vmem:[#allocation2 + $0x70] sm:$0xff]
  %v1622 = vld [vmem:[#allocation2 + $0x78] sm:$0xff]
  %v1623 = vlaneseq
  %v1624 = vshrl.u32 %v1623, 7
  %v1625 = vsub.s32 3, %v1624
  %v1626 = vrot.slane %v1563, %v1625
  %v1627 = vmul.f32 %v1626, %v1619
  %v1628 = vmul.f32 %v1626, %v1620
  %v1629 = vmul.f32 %v1626, %v1621
  %v1630 = vmul.f32 %v1626, %v1622
  %v1631 = vadd.f32 %v1615, %v1627
  %v1632 = vadd.f32 %v1616, %v1628
  %v1633 = vadd.f32 %v1617, %v1629
  %v1634 = vadd.f32 %v1618, %v1630
  %v1635 = vld [vmem:[#allocation2 + $0x80] sm:$0xff]
  %v1636 = vld [vmem:[#allocation2 + $0x88] sm:$0xff]
  %v1637 = vld [vmem:[#allocation2 + $0x90] sm:$0xff]
  %v1638 = vld [vmem:[#allocation2 + $0x98] sm:$0xff]
  %v1639 = vlaneseq
  %v1640 = vshrl.u32 %v1639, 7
  %v1641 = vsub.s32 4, %v1640
  %v1642 = vrot.slane %v1563, %v1641
  %v1643 = vmul.f32 %v1642, %v1635
  %v1644 = vmul.f32 %v1642, %v1636
  %v1645 = vmul.f32 %v1642, %v1637
  %v1646 = vmul.f32 %v1642, %v1638
  %v1647 = vadd.f32 %v1631, %v1643
  %v1648 = vadd.f32 %v1632, %v1644
  %v1649 = vadd.f32 %v1633, %v1645
  %v1650 = vadd.f32 %v1634, %v1646
  %v1651 = vld [vmem:[#allocation2 + $0xa0] sm:$0xff]
  %v1652 = vld [vmem:[#allocation2 + $0xa8] sm:$0xff]
  %v1653 = vld [vmem:[#allocation2 + $0xb0] sm:$0xff]
  %v1654 = vld [vmem:[#allocation2 + $0xb8] sm:$0xff]
  %v1655 = vlaneseq
  %v1656 = vshrl.u32 %v1655, 7
  %v1657 = vsub.s32 5, %v1656
  %v1658 = vrot.slane %v1563, %v1657
  %v1659 = vmul.f32 %v1658, %v1651
  %v1660 = vmul.f32 %v1658, %v1652
  %v1661 = vmul.f32 %v1658, %v1653
  %v1662 = vmul.f32 %v1658, %v1654
  %v1663 = vadd.f32 %v1647, %v1659
  %v1664 = vadd.f32 %v1648, %v1660
  %v1665 = vadd.f32 %v1649, %v1661
  %v1666 = vadd.f32 %v1650, %v1662
  %v1667 = vld [vmem:[#allocation2 + $0xc0] sm:$0xff]
  %v1668 = vld [vmem:[#allocation2 + $0xc8] sm:$0xff]
  %v1669 = vld [vmem:[#allocation2 + $0xd0] sm:$0xff]
  %v1670 = vld [vmem:[#allocation2 + $0xd8] sm:$0xff]
  %v1671 = vlaneseq
  %v1672 = vshrl.u32 %v1671, 7
  %v1673 = vsub.s32 6, %v1672
  %v1674 = vrot.slane %v1563, %v1673
  %v1675 = vmul.f32 %v1674, %v1667
  %v1676 = vmul.f32 %v1674, %v1668
  %v1677 = vmul.f32 %v1674, %v1669
  %v1678 = vmul.f32 %v1674, %v1670
  %v1679 = vadd.f32 %v1663, %v1675
  %v1680 = vadd.f32 %v1664, %v1676
  %v1681 = vadd.f32 %v1665, %v1677
  %v1682 = vadd.f32 %v1666, %v1678
  %v1683 = vld [vmem:[#allocation2 + $0xe0] sm:$0xff]
  %v1684 = vld [vmem:[#allocation2 + $0xe8] sm:$0xff]
  %v1685 = vld [vmem:[#allocation2 + $0xf0] sm:$0xff]
  %v1686 = vld [vmem:[#allocation2 + $0xf8] sm:$0xff]
  %v1687 = vlaneseq
  %v1688 = vshrl.u32 %v1687, 7
  %v1689 = vsub.s32 7, %v1688
  %v1690 = vrot.slane %v1563, %v1689
  %v1691 = vmul.f32 %v1690, %v1683
  %v1692 = vmul.f32 %v1690, %v1684
  %v1693 = vmul.f32 %v1690, %v1685
  %v1694 = vmul.f32 %v1690, %v1686
  %v1695 = vadd.f32 %v1679, %v1691
  %v1696 = vadd.f32 %v1680, %v1692
  %v1697 = vadd.f32 %v1681, %v1693
  %v1698 = vadd.f32 %v1682, %v1694
  %1700 = vset.pattern.permute.xlu0 0
  %1701 = vperm.xlu0 %1700, %v1571
  %v1702 = vpop.permute.xlu0 %1701
  %1705 = vset.pattern.permute.xlu0 0
  %1706 = vperm.xlu0 %1705, %v1572
  %v1707 = vpop.permute.xlu0 %1706
  %1710 = vset.pattern.permute.xlu0 0
  %1711 = vperm.xlu0 %1710, %v1573
  %v1712 = vpop.permute.xlu0 %1711
  %1715 = vset.pattern.permute.xlu0 0
  %1716 = vperm.xlu0 %1715, %v1574
  %v1717 = vpop.permute.xlu0 %1716
  %v1719 = vadd.f32 %v1695, %v1702
  %v1720 = vadd.f32 %v1696, %v1707
  %v1721 = vadd.f32 %v1697, %v1712
  %v1722 = vadd.f32 %v1698, %v1717
  %vm1723 = vcmp.ge.f32.partialorder %v1719, 0.0
  %vm1724 = vcmp.ge.f32.partialorder %v1720, 0.0
  %vm1725 = vcmp.ge.f32.partialorder %v1721, 0.0
  %vm1726 = vcmp.ge.f32.partialorder %v1722, 0.0
  %v1727 = vmul.f32 %v1719, 0.01
  %v1728 = vmul.f32 %v1720, 0.01
  %v1729 = vmul.f32 %v1721, 0.01
  %v1730 = vmul.f32 %v1722, 0.01
  %v1731 = vsel %vm1723, %v1719, %v1727
  %v1732 = vsel %vm1724, %v1720, %v1728
  %v1733 = vsel %vm1725, %v1721, %v1729
  %v1734 = vsel %vm1726, %v1722, %v1730
  %1735 = vst [vmem:[#allocation3] sm:$0xff] %v1731
  %1736 = vst [vmem:[#allocation3 + $0x8] sm:$0xff] %v1732
  %1737 = vst [vmem:[#allocation3 + $0x10] sm:$0xff] %v1733
  %1738 = vst [vmem:[#allocation3 + $0x18] sm:$0xff] %v1734
  %v1739 = vld [vmem:[#allocation2] sm:$0xff]
  %v1740 = vld [vmem:[#allocation2 + $0x8] sm:$0xff]
  %v1741 = vld [vmem:[#allocation2 + $0x10] sm:$0xff]
  %v1742 = vld [vmem:[#allocation2 + $0x18] sm:$0xff]
  %v1743 = vlaneseq
  %v1744 = vshrl.u32 %v1743, 7
  %v1745 = vsub.s32 0, %v1744
  %v1746 = vrot.slane %v1564, %v1745
  %v1747 = vmul.f32 %v1746, %v1739
  %v1748 = vmul.f32 %v1746, %v1740
  %v1749 = vmul.f32 %v1746, %v1741
  %v1750 = vmul.f32 %v1746, %v1742
  %v1751 = vld [vmem:[#allocation2 + $0x20] sm:$0xff]
  %v1752 = vld [vmem:[#allocation2 + $0x28] sm:$0xff]
  %v1753 = vld [vmem:[#allocation2 + $0x30] sm:$0xff]
  %v1754 = vld [vmem:[#allocation2 + $0x38] sm:$0xff]
  %v1755 = vlaneseq
  %v1756 = vshrl.u32 %v1755, 7
  %v1757 = vsub.s32 1, %v1756
  %v1758 = vrot.slane %v1564, %v1757
  %v1759 = vmul.f32 %v1758, %v1751
  %v1760 = vmul.f32 %v1758, %v1752
  %v1761 = vmul.f32 %v1758, %v1753
  %v1762 = vmul.f32 %v1758, %v1754
  %v1763 = vadd.f32 %v1747, %v1759
  %v1764 = vadd.f32 %v1748, %v1760
  %v1765 = vadd.f32 %v1749, %v1761
  %v1766 = vadd.f32 %v1750, %v1762
  %v1767 = vld [vmem:[#allocation2 + $0x40] sm:$0xff]
  %v1768 = vld [vmem:[#allocation2 + $0x48] sm:$0xff]
  %v1769 = vld [vmem:[#allocation2 + $0x50] sm:$0xff]
  %v1770 = vld [vmem:[#allocation2 + $0x58] sm:$0xff]
  %v1771 = vlaneseq
  %v1772 = vshrl.u32 %v1771, 7
  %v1773 = vsub.s32 2, %v1772
  %v1774 = vrot.slane %v1564, %v1773
  %v1775 = vmul.f32 %v1774, %v1767
  %v1776 = vmul.f32 %v1774, %v1768
  %v1777 = vmul.f32 %v1774, %v1769
  %v1778 = vmul.f32 %v1774, %v1770
  %v1779 = vadd.f32 %v1763, %v1775
  %v1780 = vadd.f32 %v1764, %v1776
  %v1781 = vadd.f32 %v1765, %v1777
  %v1782 = vadd.f32 %v1766, %v1778
  %v1783 = vld [vmem:[#allocation2 + $0x60] sm:$0xff]
  %v1784 = vld [vmem:[#allocation2 + $0x68] sm:$0xff]
  %v1785 = vld [vmem:[#allocation2 + $0x70] sm:$0xff]
  %v1786 = vld [vmem:[#allocation2 + $0x78] sm:$0xff]
  %v1787 = vlaneseq
  %v1788 = vshrl.u32 %v1787, 7
  %v1789 = vsub.s32 3, %v1788
  %v1790 = vrot.slane %v1564, %v1789
  %v1791 = vmul.f32 %v1790, %v1783
  %v1792 = vmul.f32 %v1790, %v1784
  %v1793 = vmul.f32 %v1790, %v1785
  %v1794 = vmul.f32 %v1790, %v1786
  %v1795 = vadd.f32 %v1779, %v1791
  %v1796 = vadd.f32 %v1780, %v1792
  %v1797 = vadd.f32 %v1781, %v1793
  %v1798 = vadd.f32 %v1782, %v1794
  %v1799 = vld [vmem:[#allocation2 + $0x80] sm:$0xff]
  %v1800 = vld [vmem:[#allocation2 + $0x88] sm:$0xff]
  %v1801 = vld [vmem:[#allocation2 + $0x90] sm:$0xff]
  %v1802 = vld [vmem:[#allocation2 + $0x98] sm:$0xff]
  %v1803 = vlaneseq
  %v1804 = vshrl.u32 %v1803, 7
  %v1805 = vsub.s32 4, %v1804
  %v1806 = vrot.slane %v1564, %v1805
  %v1807 = vmul.f32 %v1806, %v1799
  %v1808 = vmul.f32 %v1806, %v1800
  %v1809 = vmul.f32 %v1806, %v1801
  %v1810 = vmul.f32 %v1806, %v1802
  %v1811 = vadd.f32 %v1795, %v1807
  %v1812 = vadd.f32 %v1796, %v1808
  %v1813 = vadd.f32 %v1797, %v1809
  %v1814 = vadd.f32 %v1798, %v1810
  %v1815 = vld [vmem:[#allocation2 + $0xa0] sm:$0xff]
  %v1816 = vld [vmem:[#allocation2 + $0xa8] sm:$0xff]
  %v1817 = vld [vmem:[#allocation2 + $0xb0] sm:$0xff]
  %v1818 = vld [vmem:[#allocation2 + $0xb8] sm:$0xff]
  %v1819 = vlaneseq
  %v1820 = vshrl.u32 %v1819, 7
  %v1821 = vsub.s32 5, %v1820
  %v1822 = vrot.slane %v1564, %v1821
  %v1823 = vmul.f32 %v1822, %v1815
  %v1824 = vmul.f32 %v1822, %v1816
  %v1825 = vmul.f32 %v1822, %v1817
  %v1826 = vmul.f32 %v1822, %v1818
  %v1827 = vadd.f32 %v1811, %v1823
  %v1828 = vadd.f32 %v1812, %v1824
  %v1829 = vadd.f32 %v1813, %v1825
  %v1830 = vadd.f32 %v1814, %v1826
  %v1831 = vld [vmem:[#allocation2 + $0xc0] sm:$0xff]
  %v1832 = vld [vmem:[#allocation2 + $0xc8] sm:$0xff]
  %v1833 = vld [vmem:[#allocation2 + $0xd0] sm:$0xff]
  %v1834 = vld [vmem:[#allocation2 + $0xd8] sm:$0xff]
  %v1835 = vlaneseq
  %v1836 = vshrl.u32 %v1835, 7
  %v1837 = vsub.s32 6, %v1836
  %v1838 = vrot.slane %v1564, %v1837
  %v1839 = vmul.f32 %v1838, %v1831
  %v1840 = vmul.f32 %v1838, %v1832
  %v1841 = vmul.f32 %v1838, %v1833
  %v1842 = vmul.f32 %v1838, %v1834
  %v1843 = vadd.f32 %v1827, %v1839
  %v1844 = vadd.f32 %v1828, %v1840
  %v1845 = vadd.f32 %v1829, %v1841
  %v1846 = vadd.f32 %v1830, %v1842
  %v1847 = vld [vmem:[#allocation2 + $0xe0] sm:$0xff]
  %v1848 = vld [vmem:[#allocation2 + $0xe8] sm:$0xff]
  %v1849 = vld [vmem:[#allocation2 + $0xf0] sm:$0xff]
  %v1850 = vld [vmem:[#allocation2 + $0xf8] sm:$0xff]
  %v1851 = vlaneseq
  %v1852 = vshrl.u32 %v1851, 7
  %v1853 = vsub.s32 7, %v1852
  %v1854 = vrot.slane %v1564, %v1853
  %v1855 = vmul.f32 %v1854, %v1847
  %v1856 = vmul.f32 %v1854, %v1848
  %v1857 = vmul.f32 %v1854, %v1849
  %v1858 = vmul.f32 %v1854, %v1850
  %v1859 = vadd.f32 %v1843, %v1855
  %v1860 = vadd.f32 %v1844, %v1856
  %v1861 = vadd.f32 %v1845, %v1857
  %v1862 = vadd.f32 %v1846, %v1858
  %v1863 = vadd.f32 %v1859, %v1702
  %v1864 = vadd.f32 %v1860, %v1707
  %v1865 = vadd.f32 %v1861, %v1712
  %v1866 = vadd.f32 %v1862, %v1717
  %vm1867 = vcmp.ge.f32.partialorder %v1863, 0.0
  %vm1868 = vcmp.ge.f32.partialorder %v1864, 0.0
  %vm1869 = vcmp.ge.f32.partialorder %v1865, 0.0
  %vm1870 = vcmp.ge.f32.partialorder %v1866, 0.0
  %v1871 = vmul.f32 %v1863, 0.01
  %v1872 = vmul.f32 %v1864, 0.01
  %v1873 = vmul.f32 %v1865, 0.01
  %v1874 = vmul.f32 %v1866, 0.01
  %v1875 = vsel %vm1867, %v1863, %v1871
  %v1876 = vsel %vm1868, %v1864, %v1872
  %v1877 = vsel %vm1869, %v1865, %v1873
  %v1878 = vsel %vm1870, %v1866, %v1874
  %1879 = vst [vmem:[#allocation3 + $0x20] sm:$0xff] %v1875
  %1880 = vst [vmem:[#allocation3 + $0x28] sm:$0xff] %v1876
  %1881 = vst [vmem:[#allocation3 + $0x30] sm:$0xff] %v1877
  %1882 = vst [vmem:[#allocation3 + $0x38] sm:$0xff] %v1878
  %v1883 = vld [vmem:[#allocation2] sm:$0xff]
  %v1884 = vld [vmem:[#allocation2 + $0x8] sm:$0xff]
  %v1885 = vld [vmem:[#allocation2 + $0x10] sm:$0xff]
  %v1886 = vld [vmem:[#allocation2 + $0x18] sm:$0xff]
  %v1887 = vlaneseq
  %v1888 = vshrl.u32 %v1887, 7
  %v1889 = vsub.s32 0, %v1888
  %v1890 = vrot.slane %v1565, %v1889
  %v1891 = vmul.f32 %v1890, %v1883
  %v1892 = vmul.f32 %v1890, %v1884
  %v1893 = vmul.f32 %v1890, %v1885
  %v1894 = vmul.f32 %v1890, %v1886
  %v1895 = vld [vmem:[#allocation2 + $0x20] sm:$0xff]
  %v1896 = vld [vmem:[#allocation2 + $0x28] sm:$0xff]
  %v1897 = vld [vmem:[#allocation2 + $0x30] sm:$0xff]
  %v1898 = vld [vmem:[#allocation2 + $0x38] sm:$0xff]
  %v1899 = vlaneseq
  %v1900 = vshrl.u32 %v1899, 7
  %v1901 = vsub.s32 1, %v1900
  %v1902 = vrot.slane %v1565, %v1901
  %v1903 = vmul.f32 %v1902, %v1895
  %v1904 = vmul.f32 %v1902, %v1896
  %v1905 = vmul.f32 %v1902, %v1897
  %v1906 = vmul.f32 %v1902, %v1898
  %v1907 = vadd.f32 %v1891, %v1903
  %v1908 = vadd.f32 %v1892, %v1904
  %v1909 = vadd.f32 %v1893, %v1905
  %v1910 = vadd.f32 %v1894, %v1906
  %v1911 = vld [vmem:[#allocation2 + $0x40] sm:$0xff]
  %v1912 = vld [vmem:[#allocation2 + $0x48] sm:$0xff]
  %v1913 = vld [vmem:[#allocation2 + $0x50] sm:$0xff]
  %v1914 = vld [vmem:[#allocation2 + $0x58] sm:$0xff]
  %v1915 = vlaneseq
  %v1916 = vshrl.u32 %v1915, 7
  %v1917 = vsub.s32 2, %v1916
  %v1918 = vrot.slane %v1565, %v1917
  %v1919 = vmul.f32 %v1918, %v1911
  %v1920 = vmul.f32 %v1918, %v1912
  %v1921 = vmul.f32 %v1918, %v1913
  %v1922 = vmul.f32 %v1918, %v1914
  %v1923 = vadd.f32 %v1907, %v1919
  %v1924 = vadd.f32 %v1908, %v1920
  %v1925 = vadd.f32 %v1909, %v1921
  %v1926 = vadd.f32 %v1910, %v1922
  %v1927 = vld [vmem:[#allocation2 + $0x60] sm:$0xff]
  %v1928 = vld [vmem:[#allocation2 + $0x68] sm:$0xff]
  %v1929 = vld [vmem:[#allocation2 + $0x70] sm:$0xff]
  %v1930 = vld [vmem:[#allocation2 + $0x78] sm:$0xff]
  %v1931 = vlaneseq
  %v1932 = vshrl.u32 %v1931, 7
  %v1933 = vsub.s32 3, %v1932
  %v1934 = vrot.slane %v1565, %v1933
  %v1935 = vmul.f32 %v1934, %v1927
  %v1936 = vmul.f32 %v1934, %v1928
  %v1937 = vmul.f32 %v1934, %v1929
  %v1938 = vmul.f32 %v1934, %v1930
  %v1939 = vadd.f32 %v1923, %v1935
  %v1940 = vadd.f32 %v1924, %v1936
  %v1941 = vadd.f32 %v1925, %v1937
  %v1942 = vadd.f32 %v1926, %v1938
  %v1943 = vld [vmem:[#allocation2 + $0x80] sm:$0xff]
  %v1944 = vld [vmem:[#allocation2 + $0x88] sm:$0xff]
  %v1945 = vld [vmem:[#allocation2 + $0x90] sm:$0xff]
  %v1946 = vld [vmem:[#allocation2 + $0x98] sm:$0xff]
  %v1947 = vlaneseq
  %v1948 = vshrl.u32 %v1947, 7
  %v1949 = vsub.s32 4, %v1948
  %v1950 = vrot.slane %v1565, %v1949
  %v1951 = vmul.f32 %v1950, %v1943
  %v1952 = vmul.f32 %v1950, %v1944
  %v1953 = vmul.f32 %v1950, %v1945
  %v1954 = vmul.f32 %v1950, %v1946
  %v1955 = vadd.f32 %v1939, %v1951
  %v1956 = vadd.f32 %v1940, %v1952
  %v1957 = vadd.f32 %v1941, %v1953
  %v1958 = vadd.f32 %v1942, %v1954
  %v1959 = vld [vmem:[#allocation2 + $0xa0] sm:$0xff]
  %v1960 = vld [vmem:[#allocation2 + $0xa8] sm:$0xff]
  %v1961 = vld [vmem:[#allocation2 + $0xb0] sm:$0xff]
  %v1962 = vld [vmem:[#allocation2 + $0xb8] sm:$0xff]
  %v1963 = vlaneseq
  %v1964 = vshrl.u32 %v1963, 7
  %v1965 = vsub.s32 5, %v1964
  %v1966 = vrot.slane %v1565, %v1965
  %v1967 = vmul.f32 %v1966, %v1959
  %v1968 = vmul.f32 %v1966, %v1960
  %v1969 = vmul.f32 %v1966, %v1961
  %v1970 = vmul.f32 %v1966, %v1962
  %v1971 = vadd.f32 %v1955, %v1967
  %v1972 = vadd.f32 %v1956, %v1968
  %v1973 = vadd.f32 %v1957, %v1969
  %v1974 = vadd.f32 %v1958, %v1970
  %v1975 = vld [vmem:[#allocation2 + $0xc0] sm:$0xff]
  %v1976 = vld [vmem:[#allocation2 + $0xc8] sm:$0xff]
  %v1977 = vld [vmem:[#allocation2 + $0xd0] sm:$0xff]
  %v1978 = vld [vmem:[#allocation2 + $0xd8] sm:$0xff]
  %v1979 = vlaneseq
  %v1980 = vshrl.u32 %v1979, 7
  %v1981 = vsub.s32 6, %v1980
  %v1982 = vrot.slane %v1565, %v1981
  %v1983 = vmul.f32 %v1982, %v1975
  %v1984 = vmul.f32 %v1982, %v1976
  %v1985 = vmul.f32 %v1982, %v1977
  %v1986 = vmul.f32 %v1982, %v1978
  %v1987 = vadd.f32 %v1971, %v1983
  %v1988 = vadd.f32 %v1972, %v1984
  %v1989 = vadd.f32 %v1973, %v1985
  %v1990 = vadd.f32 %v1974, %v1986
  %v1991 = vld [vmem:[#allocation2 + $0xe0] sm:$0xff]
  %v1992 = vld [vmem:[#allocation2 + $0xe8] sm:$0xff]
  %v1993 = vld [vmem:[#allocation2 + $0xf0] sm:$0xff]
  %v1994 = vld [vmem:[#allocation2 + $0xf8] sm:$0xff]
  %v1995 = vlaneseq
  %v1996 = vshrl.u32 %v1995, 7
  %v1997 = vsub.s32 7, %v1996
  %v1998 = vrot.slane %v1565, %v1997
  %v1999 = vmul.f32 %v1998, %v1991
  %v2000 = vmul.f32 %v1998, %v1992
  %v2001 = vmul.f32 %v1998, %v1993
  %v2002 = vmul.f32 %v1998, %v1994
  %v2003 = vadd.f32 %v1987, %v1999
  %v2004 = vadd.f32 %v1988, %v2000
  %v2005 = vadd.f32 %v1989, %v2001
  %v2006 = vadd.f32 %v1990, %v2002
  %v2007 = vadd.f32 %v2003, %v1702
  %v2008 = vadd.f32 %v2004, %v1707
  %v2009 = vadd.f32 %v2005, %v1712
  %v2010 = vadd.f32 %v2006, %v1717
  %vm2011 = vcmp.ge.f32.partialorder %v2007, 0.0
  %vm2012 = vcmp.ge.f32.partialorder %v2008, 0.0
  %vm2013 = vcmp.ge.f32.partialorder %v2009, 0.0
  %vm2014 = vcmp.ge.f32.partialorder %v2010, 0.0
  %v2015 = vmul.f32 %v2007, 0.01
  %v2016 = vmul.f32 %v2008, 0.01
  %v2017 = vmul.f32 %v2009, 0.01
  %v2018 = vmul.f32 %v2010, 0.01
  %v2019 = vsel %vm2011, %v2007, %v2015
  %v2020 = vsel %vm2012, %v2008, %v2016
  %v2021 = vsel %vm2013, %v2009, %v2017
  %v2022 = vsel %vm2014, %v2010, %v2018
  %2023 = vst [vmem:[#allocation3 + $0x40] sm:$0xff] %v2019
  %2024 = vst [vmem:[#allocation3 + $0x48] sm:$0xff] %v2020
  %2025 = vst [vmem:[#allocation3 + $0x50] sm:$0xff] %v2021
  %2026 = vst [vmem:[#allocation3 + $0x58] sm:$0xff] %v2022
  %v2027 = vld [vmem:[#allocation2] sm:$0xff]
  %v2028 = vld [vmem:[#allocation2 + $0x8] sm:$0xff]
  %v2029 = vld [vmem:[#allocation2 + $0x10] sm:$0xff]
  %v2030 = vld [vmem:[#allocation2 + $0x18] sm:$0xff]
  %v2031 = vlaneseq
  %v2032 = vshrl.u32 %v2031, 7
  %v2033 = vsub.s32 0, %v2032
  %v2034 = vrot.slane %v1566, %v2033
  %v2035 = vmul.f32 %v2034, %v2027
  %v2036 = vmul.f32 %v2034, %v2028
  %v2037 = vmul.f32 %v2034, %v2029
  %v2038 = vmul.f32 %v2034, %v2030
  %v2039 = vld [vmem:[#allocation2 + $0x20] sm:$0xff]
  %v2040 = vld [vmem:[#allocation2 + $0x28] sm:$0xff]
  %v2041 = vld [vmem:[#allocation2 + $0x30] sm:$0xff]
  %v2042 = vld [vmem:[#allocation2 + $0x38] sm:$0xff]
  %v2043 = vlaneseq
  %v2044 = vshrl.u32 %v2043, 7
  %v2045 = vsub.s32 1, %v2044
  %v2046 = vrot.slane %v1566, %v2045
  %v2047 = vmul.f32 %v2046, %v2039
  %v2048 = vmul.f32 %v2046, %v2040
  %v2049 = vmul.f32 %v2046, %v2041
  %v2050 = vmul.f32 %v2046, %v2042
  %v2051 = vadd.f32 %v2035, %v2047
  %v2052 = vadd.f32 %v2036, %v2048
  %v2053 = vadd.f32 %v2037, %v2049
  %v2054 = vadd.f32 %v2038, %v2050
  %v2055 = vld [vmem:[#allocation2 + $0x40] sm:$0xff]
  %v2056 = vld [vmem:[#allocation2 + $0x48] sm:$0xff]
  %v2057 = vld [vmem:[#allocation2 + $0x50] sm:$0xff]
  %v2058 = vld [vmem:[#allocation2 + $0x58] sm:$0xff]
  %v2059 = vlaneseq
  %v2060 = vshrl.u32 %v2059, 7
  %v2061 = vsub.s32 2, %v2060
  %v2062 = vrot.slane %v1566, %v2061
  %v2063 = vmul.f32 %v2062, %v2055
  %v2064 = vmul.f32 %v2062, %v2056
  %v2065 = vmul.f32 %v2062, %v2057
  %v2066 = vmul.f32 %v2062, %v2058
  %v2067 = vadd.f32 %v2051, %v2063
  %v2068 = vadd.f32 %v2052, %v2064
  %v2069 = vadd.f32 %v2053, %v2065
  %v2070 = vadd.f32 %v2054, %v2066
  %v2071 = vld [vmem:[#allocation2 + $0x60] sm:$0xff]
  %v2072 = vld [vmem:[#allocation2 + $0x68] sm:$0xff]
  %v2073 = vld [vmem:[#allocation2 + $0x70] sm:$0xff]
  %v2074 = vld [vmem:[#allocation2 + $0x78] sm:$0xff]
  %v2075 = vlaneseq
  %v2076 = vshrl.u32 %v2075, 7
  %v2077 = vsub.s32 3, %v2076
  %v2078 = vrot.slane %v1566, %v2077
  %v2079 = vmul.f32 %v2078, %v2071
  %v2080 = vmul.f32 %v2078, %v2072
  %v2081 = vmul.f32 %v2078, %v2073
  %v2082 = vmul.f32 %v2078, %v2074
  %v2083 = vadd.f32 %v2067, %v2079
  %v2084 = vadd.f32 %v2068, %v2080
  %v2085 = vadd.f32 %v2069, %v2081
  %v2086 = vadd.f32 %v2070, %v2082
  %v2087 = vld [vmem:[#allocation2 + $0x80] sm:$0xff]
  %v2088 = vld [vmem:[#allocation2 + $0x88] sm:$0xff]
  %v2089 = vld [vmem:[#allocation2 + $0x90] sm:$0xff]
  %v2090 = vld [vmem:[#allocation2 + $0x98] sm:$0xff]
  %v2091 = vlaneseq
  %v2092 = vshrl.u32 %v2091, 7
  %v2093 = vsub.s32 4, %v2092
  %v2094 = vrot.slane %v1566, %v2093
  %v2095 = vmul.f32 %v2094, %v2087
  %v2096 = vmul.f32 %v2094, %v2088
  %v2097 = vmul.f32 %v2094, %v2089
  %v2098 = vmul.f32 %v2094, %v2090
  %v2099 = vadd.f32 %v2083, %v2095
  %v2100 = vadd.f32 %v2084, %v2096
  %v2101 = vadd.f32 %v2085, %v2097
  %v2102 = vadd.f32 %v2086, %v2098
  %v2103 = vld [vmem:[#allocation2 + $0xa0] sm:$0xff]
  %v2104 = vld [vmem:[#allocation2 + $0xa8] sm:$0xff]
  %v2105 = vld [vmem:[#allocation2 + $0xb0] sm:$0xff]
  %v2106 = vld [vmem:[#allocation2 + $0xb8] sm:$0xff]
  %v2107 = vlaneseq
  %v2108 = vshrl.u32 %v2107, 7
  %v2109 = vsub.s32 5, %v2108
  %v2110 = vrot.slane %v1566, %v2109
  %v2111 = vmul.f32 %v2110, %v2103
  %v2112 = vmul.f32 %v2110, %v2104
  %v2113 = vmul.f32 %v2110, %v2105
  %v2114 = vmul.f32 %v2110, %v2106
  %v2115 = vadd.f32 %v2099, %v2111
  %v2116 = vadd.f32 %v2100, %v2112
  %v2117 = vadd.f32 %v2101, %v2113
  %v2118 = vadd.f32 %v2102, %v2114
  %v2119 = vld [vmem:[#allocation2 + $0xc0] sm:$0xff]
  %v2120 = vld [vmem:[#allocation2 + $0xc8] sm:$0xff]
  %v2121 = vld [vmem:[#allocation2 + $0xd0] sm:$0xff]
  %v2122 = vld [vmem:[#allocation2 + $0xd8] sm:$0xff]
  %v2123 = vlaneseq
  %v2124 = vshrl.u32 %v2123, 7
  %v2125 = vsub.s32 6, %v2124
  %v2126 = vrot.slane %v1566, %v2125
  %v2127 = vmul.f32 %v2126, %v2119
  %v2128 = vmul.f32 %v2126, %v2120
  %v2129 = vmul.f32 %v2126, %v2121
  %v2130 = vmul.f32 %v2126, %v2122
  %v2131 = vadd.f32 %v2115, %v2127
  %v2132 = vadd.f32 %v2116, %v2128
  %v2133 = vadd.f32 %v2117, %v2129
  %v2134 = vadd.f32 %v2118, %v2130
  %v2135 = vld [vmem:[#allocation2 + $0xe0] sm:$0xff]
  %v2136 = vld [vmem:[#allocation2 + $0xe8] sm:$0xff]
  %v2137 = vld [vmem:[#allocation2 + $0xf0] sm:$0xff]
  %v2138 = vld [vmem:[#allocation2 + $0xf8] sm:$0xff]
  %v2139 = vlaneseq
  %v2140 = vshrl.u32 %v2139, 7
  %v2141 = vsub.s32 7, %v2140
  %v2142 = vrot.slane %v1566, %v2141
  %v2143 = vmul.f32 %v2142, %v2135
  %v2144 = vmul.f32 %v2142, %v2136
  %v2145 = vmul.f32 %v2142, %v2137
  %v2146 = vmul.f32 %v2142, %v2138
  %v2147 = vadd.f32 %v2131, %v2143
  %v2148 = vadd.f32 %v2132, %v2144
  %v2149 = vadd.f32 %v2133, %v2145
  %v2150 = vadd.f32 %v2134, %v2146
  %v2151 = vadd.f32 %v2147, %v1702
  %v2152 = vadd.f32 %v2148, %v1707
  %v2153 = vadd.f32 %v2149, %v1712
  %v2154 = vadd.f32 %v2150, %v1717
  %vm2155 = vcmp.ge.f32.partialorder %v2151, 0.0
  %vm2156 = vcmp.ge.f32.partialorder %v2152, 0.0
  %vm2157 = vcmp.ge.f32.partialorder %v2153, 0.0
  %vm2158 = vcmp.ge.f32.partialorder %v2154, 0.0
  %v2159 = vmul.f32 %v2151, 0.01
  %v2160 = vmul.f32 %v2152, 0.01
  %v2161 = vmul.f32 %v2153, 0.01
  %v2162 = vmul.f32 %v2154, 0.01
  %v2163 = vsel %vm2155, %v2151, %v2159
  %v2164 = vsel %vm2156, %v2152, %v2160
  %v2165 = vsel %vm2157, %v2153, %v2161
  %v2166 = vsel %vm2158, %v2154, %v2162
  %2167 = vst [vmem:[#allocation3 + $0x60] sm:$0xff] %v2163
  %2168 = vst [vmem:[#allocation3 + $0x68] sm:$0xff] %v2164
  %2169 = vst [vmem:[#allocation3 + $0x70] sm:$0xff] %v2165
  %2170 = vst [vmem:[#allocation3 + $0x78] sm:$0xff] %v2166
  %v2171 = vld [vmem:[#allocation2] sm:$0xff]
  %v2172 = vld [vmem:[#allocation2 + $0x8] sm:$0xff]
  %v2173 = vld [vmem:[#allocation2 + $0x10] sm:$0xff]
  %v2174 = vld [vmem:[#allocation2 + $0x18] sm:$0xff]
  %v2175 = vlaneseq
  %v2176 = vshrl.u32 %v2175, 7
  %v2177 = vsub.s32 0, %v2176
  %v2178 = vrot.slane %v1567, %v2177
  %v2179 = vmul.f32 %v2178, %v2171
  %v2180 = vmul.f32 %v2178, %v2172
  %v2181 = vmul.f32 %v2178, %v2173
  %v2182 = vmul.f32 %v2178, %v2174
  %v2183 = vld [vmem:[#allocation2 + $0x20] sm:$0xff]
  %v2184 = vld [vmem:[#allocation2 + $0x28] sm:$0xff]
  %v2185 = vld [vmem:[#allocation2 + $0x30] sm:$0xff]
  %v2186 = vld [vmem:[#allocation2 + $0x38] sm:$0xff]
  %v2187 = vlaneseq
  %v2188 = vshrl.u32 %v2187, 7
  %v2189 = vsub.s32 1, %v2188
  %v2190 = vrot.slane %v1567, %v2189
  %v2191 = vmul.f32 %v2190, %v2183
  %v2192 = vmul.f32 %v2190, %v2184
  %v2193 = vmul.f32 %v2190, %v2185
  %v2194 = vmul.f32 %v2190, %v2186
  %v2195 = vadd.f32 %v2179, %v2191
  %v2196 = vadd.f32 %v2180, %v2192
  %v2197 = vadd.f32 %v2181, %v2193
  %v2198 = vadd.f32 %v2182, %v2194
  %v2199 = vld [vmem:[#allocation2 + $0x40] sm:$0xff]
  %v2200 = vld [vmem:[#allocation2 + $0x48] sm:$0xff]
  %v2201 = vld [vmem:[#allocation2 + $0x50] sm:$0xff]
  %v2202 = vld [vmem:[#allocation2 + $0x58] sm:$0xff]
  %v2203 = vlaneseq
  %v2204 = vshrl.u32 %v2203, 7
  %v2205 = vsub.s32 2, %v2204
  %v2206 = vrot.slane %v1567, %v2205
  %v2207 = vmul.f32 %v2206, %v2199
  %v2208 = vmul.f32 %v2206, %v2200
  %v2209 = vmul.f32 %v2206, %v2201
  %v2210 = vmul.f32 %v2206, %v2202
  %v2211 = vadd.f32 %v2195, %v2207
  %v2212 = vadd.f32 %v2196, %v2208
  %v2213 = vadd.f32 %v2197, %v2209
  %v2214 = vadd.f32 %v2198, %v2210
  %v2215 = vld [vmem:[#allocation2 + $0x60] sm:$0xff]
  %v2216 = vld [vmem:[#allocation2 + $0x68] sm:$0xff]
  %v2217 = vld [vmem:[#allocation2 + $0x70] sm:$0xff]
  %v2218 = vld [vmem:[#allocation2 + $0x78] sm:$0xff]
  %v2219 = vlaneseq
  %v2220 = vshrl.u32 %v2219, 7
  %v2221 = vsub.s32 3, %v2220
  %v2222 = vrot.slane %v1567, %v2221
  %v2223 = vmul.f32 %v2222, %v2215
  %v2224 = vmul.f32 %v2222, %v2216
  %v2225 = vmul.f32 %v2222, %v2217
  %v2226 = vmul.f32 %v2222, %v2218
  %v2227 = vadd.f32 %v2211, %v2223
  %v2228 = vadd.f32 %v2212, %v2224
  %v2229 = vadd.f32 %v2213, %v2225
  %v2230 = vadd.f32 %v2214, %v2226
  %v2231 = vld [vmem:[#allocation2 + $0x80] sm:$0xff]
  %v2232 = vld [vmem:[#allocation2 + $0x88] sm:$0xff]
  %v2233 = vld [vmem:[#allocation2 + $0x90] sm:$0xff]
  %v2234 = vld [vmem:[#allocation2 + $0x98] sm:$0xff]
  %v2235 = vlaneseq
  %v2236 = vshrl.u32 %v2235, 7
  %v2237 = vsub.s32 4, %v2236
  %v2238 = vrot.slane %v1567, %v2237
  %v2239 = vmul.f32 %v2238, %v2231
  %v2240 = vmul.f32 %v2238, %v2232
  %v2241 = vmul.f32 %v2238, %v2233
  %v2242 = vmul.f32 %v2238, %v2234
  %v2243 = vadd.f32 %v2227, %v2239
  %v2244 = vadd.f32 %v2228, %v2240
  %v2245 = vadd.f32 %v2229, %v2241
  %v2246 = vadd.f32 %v2230, %v2242
  %v2247 = vld [vmem:[#allocation2 + $0xa0] sm:$0xff]
  %v2248 = vld [vmem:[#allocation2 + $0xa8] sm:$0xff]
  %v2249 = vld [vmem:[#allocation2 + $0xb0] sm:$0xff]
  %v2250 = vld [vmem:[#allocation2 + $0xb8] sm:$0xff]
  %v2251 = vlaneseq
  %v2252 = vshrl.u32 %v2251, 7
  %v2253 = vsub.s32 5, %v2252
  %v2254 = vrot.slane %v1567, %v2253
  %v2255 = vmul.f32 %v2254, %v2247
  %v2256 = vmul.f32 %v2254, %v2248
  %v2257 = vmul.f32 %v2254, %v2249
  %v2258 = vmul.f32 %v2254, %v2250
  %v2259 = vadd.f32 %v2243, %v2255
  %v2260 = vadd.f32 %v2244, %v2256
  %v2261 = vadd.f32 %v2245, %v2257
  %v2262 = vadd.f32 %v2246, %v2258
  %v2263 = vld [vmem:[#allocation2 + $0xc0] sm:$0xff]
  %v2264 = vld [vmem:[#allocation2 + $0xc8] sm:$0xff]
  %v2265 = vld [vmem:[#allocation2 + $0xd0] sm:$0xff]
  %v2266 = vld [vmem:[#allocation2 + $0xd8] sm:$0xff]
  %v2267 = vlaneseq
  %v2268 = vshrl.u32 %v2267, 7
  %v2269 = vsub.s32 6, %v2268
  %v2270 = vrot.slane %v1567, %v2269
  %v2271 = vmul.f32 %v2270, %v2263
  %v2272 = vmul.f32 %v2270, %v2264
  %v2273 = vmul.f32 %v2270, %v2265
  %v2274 = vmul.f32 %v2270, %v2266
  %v2275 = vadd.f32 %v2259, %v2271
  %v2276 = vadd.f32 %v2260, %v2272
  %v2277 = vadd.f32 %v2261, %v2273
  %v2278 = vadd.f32 %v2262, %v2274
  %v2279 = vld [vmem:[#allocation2 + $0xe0] sm:$0xff]
  %v2280 = vld [vmem:[#allocation2 + $0xe8] sm:$0xff]
  %v2281 = vld [vmem:[#allocation2 + $0xf0] sm:$0xff]
  %v2282 = vld [vmem:[#allocation2 + $0xf8] sm:$0xff]
  %v2283 = vlaneseq
  %v2284 = vshrl.u32 %v2283, 7
  %v2285 = vsub.s32 7, %v2284
  %v2286 = vrot.slane %v1567, %v2285
  %v2287 = vmul.f32 %v2286, %v2279
  %v2288 = vmul.f32 %v2286, %v2280
  %v2289 = vmul.f32 %v2286, %v2281
  %v2290 = vmul.f32 %v2286, %v2282
  %v2291 = vadd.f32 %v2275, %v2287
  %v2292 = vadd.f32 %v2276, %v2288
  %v2293 = vadd.f32 %v2277, %v2289
  %v2294 = vadd.f32 %v2278, %v2290
  %v2295 = vadd.f32 %v2291, %v1702
  %v2296 = vadd.f32 %v2292, %v1707
  %v2297 = vadd.f32 %v2293, %v1712
  %v2298 = vadd.f32 %v2294, %v1717
  %vm2299 = vcmp.ge.f32.partialorder %v2295, 0.0
  %vm2300 = vcmp.ge.f32.partialorder %v2296, 0.0
  %vm2301 = vcmp.ge.f32.partialorder %v2297, 0.0
  %vm2302 = vcmp.ge.f32.partialorder %v2298, 0.0
  %v2303 = vmul.f32 %v2295, 0.01
  %v2304 = vmul.f32 %v2296, 0.01
  %v2305 = vmul.f32 %v2297, 0.01
  %v2306 = vmul.f32 %v2298, 0.01
  %v2307 = vsel %vm2299, %v2295, %v2303
  %v2308 = vsel %vm2300, %v2296, %v2304
  %v2309 = vsel %vm2301, %v2297, %v2305
  %v2310 = vsel %vm2302, %v2298, %v2306
  %2311 = vst [vmem:[#allocation3 + $0x80] sm:$0xff] %v2307
  %2312 = vst [vmem:[#allocation3 + $0x88] sm:$0xff] %v2308
  %2313 = vst [vmem:[#allocation3 + $0x90] sm:$0xff] %v2309
  %2314 = vst [vmem:[#allocation3 + $0x98] sm:$0xff] %v2310
  %v2315 = vld [vmem:[#allocation2] sm:$0xff]
  %v2316 = vld [vmem:[#allocation2 + $0x8] sm:$0xff]
  %v2317 = vld [vmem:[#allocation2 + $0x10] sm:$0xff]
  %v2318 = vld [vmem:[#allocation2 + $0x18] sm:$0xff]
  %v2319 = vlaneseq
  %v2320 = vshrl.u32 %v2319, 7
  %v2321 = vsub.s32 0, %v2320
  %v2322 = vrot.slane %v1568, %v2321
  %v2323 = vmul.f32 %v2322, %v2315
  %v2324 = vmul.f32 %v2322, %v2316
  %v2325 = vmul.f32 %v2322, %v2317
  %v2326 = vmul.f32 %v2322, %v2318
  %v2327 = vld [vmem:[#allocation2 + $0x20] sm:$0xff]
  %v2328 = vld [vmem:[#allocation2 + $0x28] sm:$0xff]
  %v2329 = vld [vmem:[#allocation2 + $0x30] sm:$0xff]
  %v2330 = vld [vmem:[#allocation2 + $0x38] sm:$0xff]
  %v2331 = vlaneseq
  %v2332 = vshrl.u32 %v2331, 7
  %v2333 = vsub.s32 1, %v2332
  %v2334 = vrot.slane %v1568, %v2333
  %v2335 = vmul.f32 %v2334, %v2327
  %v2336 = vmul.f32 %v2334, %v2328
  %v2337 = vmul.f32 %v2334, %v2329
  %v2338 = vmul.f32 %v2334, %v2330
  %v2339 = vadd.f32 %v2323, %v2335
  %v2340 = vadd.f32 %v2324, %v2336
  %v2341 = vadd.f32 %v2325, %v2337
  %v2342 = vadd.f32 %v2326, %v2338
  %v2343 = vld [vmem:[#allocation2 + $0x40] sm:$0xff]
  %v2344 = vld [vmem:[#allocation2 + $0x48] sm:$0xff]
  %v2345 = vld [vmem:[#allocation2 + $0x50] sm:$0xff]
  %v2346 = vld [vmem:[#allocation2 + $0x58] sm:$0xff]
  %v2347 = vlaneseq
  %v2348 = vshrl.u32 %v2347, 7
  %v2349 = vsub.s32 2, %v2348
  %v2350 = vrot.slane %v1568, %v2349
  %v2351 = vmul.f32 %v2350, %v2343
  %v2352 = vmul.f32 %v2350, %v2344
  %v2353 = vmul.f32 %v2350, %v2345
  %v2354 = vmul.f32 %v2350, %v2346
  %v2355 = vadd.f32 %v2339, %v2351
  %v2356 = vadd.f32 %v2340, %v2352
  %v2357 = vadd.f32 %v2341, %v2353
  %v2358 = vadd.f32 %v2342, %v2354
  %v2359 = vld [vmem:[#allocation2 + $0x60] sm:$0xff]
  %v2360 = vld [vmem:[#allocation2 + $0x68] sm:$0xff]
  %v2361 = vld [vmem:[#allocation2 + $0x70] sm:$0xff]
  %v2362 = vld [vmem:[#allocation2 + $0x78] sm:$0xff]
  %v2363 = vlaneseq
  %v2364 = vshrl.u32 %v2363, 7
  %v2365 = vsub.s32 3, %v2364
  %v2366 = vrot.slane %v1568, %v2365
  %v2367 = vmul.f32 %v2366, %v2359
  %v2368 = vmul.f32 %v2366, %v2360
  %v2369 = vmul.f32 %v2366, %v2361
  %v2370 = vmul.f32 %v2366, %v2362
  %v2371 = vadd.f32 %v2355, %v2367
  %v2372 = vadd.f32 %v2356, %v2368
  %v2373 = vadd.f32 %v2357, %v2369
  %v2374 = vadd.f32 %v2358, %v2370
  %v2375 = vld [vmem:[#allocation2 + $0x80] sm:$0xff]
  %v2376 = vld [vmem:[#allocation2 + $0x88] sm:$0xff]
  %v2377 = vld [vmem:[#allocation2 + $0x90] sm:$0xff]
  %v2378 = vld [vmem:[#allocation2 + $0x98] sm:$0xff]
  %v2379 = vlaneseq
  %v2380 = vshrl.u32 %v2379, 7
  %v2381 = vsub.s32 4, %v2380
  %v2382 = vrot.slane %v1568, %v2381
  %v2383 = vmul.f32 %v2382, %v2375
  %v2384 = vmul.f32 %v2382, %v2376
  %v2385 = vmul.f32 %v2382, %v2377
  %v2386 = vmul.f32 %v2382, %v2378
  %v2387 = vadd.f32 %v2371, %v2383
  %v2388 = vadd.f32 %v2372, %v2384
  %v2389 = vadd.f32 %v2373, %v2385
  %v2390 = vadd.f32 %v2374, %v2386
  %v2391 = vld [vmem:[#allocation2 + $0xa0] sm:$0xff]
  %v2392 = vld [vmem:[#allocation2 + $0xa8] sm:$0xff]
  %v2393 = vld [vmem:[#allocation2 + $0xb0] sm:$0xff]
  %v2394 = vld [vmem:[#allocation2 + $0xb8] sm:$0xff]
  %v2395 = vlaneseq
  %v2396 = vshrl.u32 %v2395, 7
  %v2397 = vsub.s32 5, %v2396
  %v2398 = vrot.slane %v1568, %v2397
  %v2399 = vmul.f32 %v2398, %v2391
  %v2400 = vmul.f32 %v2398, %v2392
  %v2401 = vmul.f32 %v2398, %v2393
  %v2402 = vmul.f32 %v2398, %v2394
  %v2403 = vadd.f32 %v2387, %v2399
  %v2404 = vadd.f32 %v2388, %v2400
  %v2405 = vadd.f32 %v2389, %v2401
  %v2406 = vadd.f32 %v2390, %v2402
  %v2407 = vld [vmem:[#allocation2 + $0xc0] sm:$0xff]
  %v2408 = vld [vmem:[#allocation2 + $0xc8] sm:$0xff]
  %v2409 = vld [vmem:[#allocation2 + $0xd0] sm:$0xff]
  %v2410 = vld [vmem:[#allocation2 + $0xd8] sm:$0xff]
  %v2411 = vlaneseq
  %v2412 = vshrl.u32 %v2411, 7
  %v2413 = vsub.s32 6, %v2412
  %v2414 = vrot.slane %v1568, %v2413
  %v2415 = vmul.f32 %v2414, %v2407
  %v2416 = vmul.f32 %v2414, %v2408
  %v2417 = vmul.f32 %v2414, %v2409
  %v2418 = vmul.f32 %v2414, %v2410
  %v2419 = vadd.f32 %v2403, %v2415
  %v2420 = vadd.f32 %v2404, %v2416
  %v2421 = vadd.f32 %v2405, %v2417
  %v2422 = vadd.f32 %v2406, %v2418
  %v2423 = vld [vmem:[#allocation2 + $0xe0] sm:$0xff]
  %v2424 = vld [vmem:[#allocation2 + $0xe8] sm:$0xff]
  %v2425 = vld [vmem:[#allocation2 + $0xf0] sm:$0xff]
  %v2426 = vld [vmem:[#allocation2 + $0xf8] sm:$0xff]
  %v2427 = vlaneseq
  %v2428 = vshrl.u32 %v2427, 7
  %v2429 = vsub.s32 7, %v2428
  %v2430 = vrot.slane %v1568, %v2429
  %v2431 = vmul.f32 %v2430, %v2423
  %v2432 = vmul.f32 %v2430, %v2424
  %v2433 = vmul.f32 %v2430, %v2425
  %v2434 = vmul.f32 %v2430, %v2426
  %v2435 = vadd.f32 %v2419, %v2431
  %v2436 = vadd.f32 %v2420, %v2432
  %v2437 = vadd.f32 %v2421, %v2433
  %v2438 = vadd.f32 %v2422, %v2434
  %v2439 = vadd.f32 %v2435, %v1702
  %v2440 = vadd.f32 %v2436, %v1707
  %v2441 = vadd.f32 %v2437, %v1712
  %v2442 = vadd.f32 %v2438, %v1717
  %vm2443 = vcmp.ge.f32.partialorder %v2439, 0.0
  %vm2444 = vcmp.ge.f32.partialorder %v2440, 0.0
  %vm2445 = vcmp.ge.f32.partialorder %v2441, 0.0
  %vm2446 = vcmp.ge.f32.partialorder %v2442, 0.0
  %v2447 = vmul.f32 %v2439, 0.01
  %v2448 = vmul.f32 %v2440, 0.01
  %v2449 = vmul.f32 %v2441, 0.01
  %v2450 = vmul.f32 %v2442, 0.01
  %v2451 = vsel %vm2443, %v2439, %v2447
  %v2452 = vsel %vm2444, %v2440, %v2448
  %v2453 = vsel %vm2445, %v2441, %v2449
  %v2454 = vsel %vm2446, %v2442, %v2450
  %2455 = vst [vmem:[#allocation3 + $0xa0] sm:$0xff] %v2451
  %2456 = vst [vmem:[#allocation3 + $0xa8] sm:$0xff] %v2452
  %2457 = vst [vmem:[#allocation3 + $0xb0] sm:$0xff] %v2453
  %2458 = vst [vmem:[#allocation3 + $0xb8] sm:$0xff] %v2454
  %v2459 = vld [vmem:[#allocation2] sm:$0xff]
  %v2460 = vld [vmem:[#allocation2 + $0x8] sm:$0xff]
  %v2461 = vld [vmem:[#allocation2 + $0x10] sm:$0xff]
  %v2462 = vld [vmem:[#allocation2 + $0x18] sm:$0xff]
  %v2463 = vlaneseq
  %v2464 = vshrl.u32 %v2463, 7
  %v2465 = vsub.s32 0, %v2464
  %v2466 = vrot.slane %v1569, %v2465
  %v2467 = vmul.f32 %v2466, %v2459
  %v2468 = vmul.f32 %v2466, %v2460
  %v2469 = vmul.f32 %v2466, %v2461
  %v2470 = vmul.f32 %v2466, %v2462
  %v2471 = vld [vmem:[#allocation2 + $0x20] sm:$0xff]
  %v2472 = vld [vmem:[#allocation2 + $0x28] sm:$0xff]
  %v2473 = vld [vmem:[#allocation2 + $0x30] sm:$0xff]
  %v2474 = vld [vmem:[#allocation2 + $0x38] sm:$0xff]
  %v2475 = vlaneseq
  %v2476 = vshrl.u32 %v2475, 7
  %v2477 = vsub.s32 1, %v2476
  %v2478 = vrot.slane %v1569, %v2477
  %v2479 = vmul.f32 %v2478, %v2471
  %v2480 = vmul.f32 %v2478, %v2472
  %v2481 = vmul.f32 %v2478, %v2473
  %v2482 = vmul.f32 %v2478, %v2474
  %v2483 = vadd.f32 %v2467, %v2479
  %v2484 = vadd.f32 %v2468, %v2480
  %v2485 = vadd.f32 %v2469, %v2481
  %v2486 = vadd.f32 %v2470, %v2482
  %v2487 = vld [vmem:[#allocation2 + $0x40] sm:$0xff]
  %v2488 = vld [vmem:[#allocation2 + $0x48] sm:$0xff]
  %v2489 = vld [vmem:[#allocation2 + $0x50] sm:$0xff]
  %v2490 = vld [vmem:[#allocation2 + $0x58] sm:$0xff]
  %v2491 = vlaneseq
  %v2492 = vshrl.u32 %v2491, 7
  %v2493 = vsub.s32 2, %v2492
  %v2494 = vrot.slane %v1569, %v2493
  %v2495 = vmul.f32 %v2494, %v2487
  %v2496 = vmul.f32 %v2494, %v2488
  %v2497 = vmul.f32 %v2494, %v2489
  %v2498 = vmul.f32 %v2494, %v2490
  %v2499 = vadd.f32 %v2483, %v2495
  %v2500 = vadd.f32 %v2484, %v2496
  %v2501 = vadd.f32 %v2485, %v2497
  %v2502 = vadd.f32 %v2486, %v2498
  %v2503 = vld [vmem:[#allocation2 + $0x60] sm:$0xff]
  %v2504 = vld [vmem:[#allocation2 + $0x68] sm:$0xff]
  %v2505 = vld [vmem:[#allocation2 + $0x70] sm:$0xff]
  %v2506 = vld [vmem:[#allocation2 + $0x78] sm:$0xff]
  %v2507 = vlaneseq
  %v2508 = vshrl.u32 %v2507, 7
  %v2509 = vsub.s32 3, %v2508
  %v2510 = vrot.slane %v1569, %v2509
  %v2511 = vmul.f32 %v2510, %v2503
  %v2512 = vmul.f32 %v2510, %v2504
  %v2513 = vmul.f32 %v2510, %v2505
  %v2514 = vmul.f32 %v2510, %v2506
  %v2515 = vadd.f32 %v2499, %v2511
  %v2516 = vadd.f32 %v2500, %v2512
  %v2517 = vadd.f32 %v2501, %v2513
  %v2518 = vadd.f32 %v2502, %v2514
  %v2519 = vld [vmem:[#allocation2 + $0x80] sm:$0xff]
  %v2520 = vld [vmem:[#allocation2 + $0x88] sm:$0xff]
  %v2521 = vld [vmem:[#allocation2 + $0x90] sm:$0xff]
  %v2522 = vld [vmem:[#allocation2 + $0x98] sm:$0xff]
  %v2523 = vlaneseq
  %v2524 = vshrl.u32 %v2523, 7
  %v2525 = vsub.s32 4, %v2524
  %v2526 = vrot.slane %v1569, %v2525
  %v2527 = vmul.f32 %v2526, %v2519
  %v2528 = vmul.f32 %v2526, %v2520
  %v2529 = vmul.f32 %v2526, %v2521
  %v2530 = vmul.f32 %v2526, %v2522
  %v2531 = vadd.f32 %v2515, %v2527
  %v2532 = vadd.f32 %v2516, %v2528
  %v2533 = vadd.f32 %v2517, %v2529
  %v2534 = vadd.f32 %v2518, %v2530
  %v2535 = vld [vmem:[#allocation2 + $0xa0] sm:$0xff]
  %v2536 = vld [vmem:[#allocation2 + $0xa8] sm:$0xff]
  %v2537 = vld [vmem:[#allocation2 + $0xb0] sm:$0xff]
  %v2538 = vld [vmem:[#allocation2 + $0xb8] sm:$0xff]
  %v2539 = vlaneseq
  %v2540 = vshrl.u32 %v2539, 7
  %v2541 = vsub.s32 5, %v2540
  %v2542 = vrot.slane %v1569, %v2541
  %v2543 = vmul.f32 %v2542, %v2535
  %v2544 = vmul.f32 %v2542, %v2536
  %v2545 = vmul.f32 %v2542, %v2537
  %v2546 = vmul.f32 %v2542, %v2538
  %v2547 = vadd.f32 %v2531, %v2543
  %v2548 = vadd.f32 %v2532, %v2544
  %v2549 = vadd.f32 %v2533, %v2545
  %v2550 = vadd.f32 %v2534, %v2546
  %v2551 = vld [vmem:[#allocation2 + $0xc0] sm:$0xff]
  %v2552 = vld [vmem:[#allocation2 + $0xc8] sm:$0xff]
  %v2553 = vld [vmem:[#allocation2 + $0xd0] sm:$0xff]
  %v2554 = vld [vmem:[#allocation2 + $0xd8] sm:$0xff]
  %v2555 = vlaneseq
  %v2556 = vshrl.u32 %v2555, 7
  %v2557 = vsub.s32 6, %v2556
  %v2558 = vrot.slane %v1569, %v2557
  %v2559 = vmul.f32 %v2558, %v2551
  %v2560 = vmul.f32 %v2558, %v2552
  %v2561 = vmul.f32 %v2558, %v2553
  %v2562 = vmul.f32 %v2558, %v2554
  %v2563 = vadd.f32 %v2547, %v2559
  %v2564 = vadd.f32 %v2548, %v2560
  %v2565 = vadd.f32 %v2549, %v2561
  %v2566 = vadd.f32 %v2550, %v2562
  %v2567 = vld [vmem:[#allocation2 + $0xe0] sm:$0xff]
  %v2568 = vld [vmem:[#allocation2 + $0xe8] sm:$0xff]
  %v2569 = vld [vmem:[#allocation2 + $0xf0] sm:$0xff]
  %v2570 = vld [vmem:[#allocation2 + $0xf8] sm:$0xff]
  %v2571 = vlaneseq
  %v2572 = vshrl.u32 %v2571, 7
  %v2573 = vsub.s32 7, %v2572
  %v2574 = vrot.slane %v1569, %v2573
  %v2575 = vmul.f32 %v2574, %v2567
  %v2576 = vmul.f32 %v2574, %v2568
  %v2577 = vmul.f32 %v2574, %v2569
  %v2578 = vmul.f32 %v2574, %v2570
  %v2579 = vadd.f32 %v2563, %v2575
  %v2580 = vadd.f32 %v2564, %v2576
  %v2581 = vadd.f32 %v2565, %v2577
  %v2582 = vadd.f32 %v2566, %v2578
  %v2583 = vadd.f32 %v2579, %v1702
  %v2584 = vadd.f32 %v2580, %v1707
  %v2585 = vadd.f32 %v2581, %v1712
  %v2586 = vadd.f32 %v2582, %v1717
  %vm2587 = vcmp.ge.f32.partialorder %v2583, 0.0
  %vm2588 = vcmp.ge.f32.partialorder %v2584, 0.0
  %vm2589 = vcmp.ge.f32.partialorder %v2585, 0.0
  %vm2590 = vcmp.ge.f32.partialorder %v2586, 0.0
  %v2591 = vmul.f32 %v2583, 0.01
  %v2592 = vmul.f32 %v2584, 0.01
  %v2593 = vmul.f32 %v2585, 0.01
  %v2594 = vmul.f32 %v2586, 0.01
  %v2595 = vsel %vm2587, %v2583, %v2591
  %v2596 = vsel %vm2588, %v2584, %v2592
  %v2597 = vsel %vm2589, %v2585, %v2593
  %v2598 = vsel %vm2590, %v2586, %v2594
  %2599 = vst [vmem:[#allocation3 + $0xc0] sm:$0xff] %v2595
  %2600 = vst [vmem:[#allocation3 + $0xc8] sm:$0xff] %v2596
  %2601 = vst [vmem:[#allocation3 + $0xd0] sm:$0xff] %v2597
  %2602 = vst [vmem:[#allocation3 + $0xd8] sm:$0xff] %v2598
  %v2603 = vld [vmem:[#allocation2] sm:$0xff]
  %v2604 = vld [vmem:[#allocation2 + $0x8] sm:$0xff]
  %v2605 = vld [vmem:[#allocation2 + $0x10] sm:$0xff]
  %v2606 = vld [vmem:[#allocation2 + $0x18] sm:$0xff]
  %v2607 = vlaneseq
  %v2608 = vshrl.u32 %v2607, 7
  %v2609 = vsub.s32 0, %v2608
  %v2610 = vrot.slane %v1570, %v2609
  %v2611 = vmul.f32 %v2610, %v2603
  %v2612 = vmul.f32 %v2610, %v2604
  %v2613 = vmul.f32 %v2610, %v2605
  %v2614 = vmul.f32 %v2610, %v2606
  %v2615 = vld [vmem:[#allocation2 + $0x20] sm:$0xff]
  %v2616 = vld [vmem:[#allocation2 + $0x28] sm:$0xff]
  %v2617 = vld [vmem:[#allocation2 + $0x30] sm:$0xff]
  %v2618 = vld [vmem:[#allocation2 + $0x38] sm:$0xff]
  %v2619 = vlaneseq
  %v2620 = vshrl.u32 %v2619, 7
  %v2621 = vsub.s32 1, %v2620
  %v2622 = vrot.slane %v1570, %v2621
  %v2623 = vmul.f32 %v2622, %v2615
  %v2624 = vmul.f32 %v2622, %v2616
  %v2625 = vmul.f32 %v2622, %v2617
  %v2626 = vmul.f32 %v2622, %v2618
  %v2627 = vadd.f32 %v2611, %v2623
  %v2628 = vadd.f32 %v2612, %v2624
  %v2629 = vadd.f32 %v2613, %v2625
  %v2630 = vadd.f32 %v2614, %v2626
  %v2631 = vld [vmem:[#allocation2 + $0x40] sm:$0xff]
  %v2632 = vld [vmem:[#allocation2 + $0x48] sm:$0xff]
  %v2633 = vld [vmem:[#allocation2 + $0x50] sm:$0xff]
  %v2634 = vld [vmem:[#allocation2 + $0x58] sm:$0xff]
  %v2635 = vlaneseq
  %v2636 = vshrl.u32 %v2635, 7
  %v2637 = vsub.s32 2, %v2636
  %v2638 = vrot.slane %v1570, %v2637
  %v2639 = vmul.f32 %v2638, %v2631
  %v2640 = vmul.f32 %v2638, %v2632
  %v2641 = vmul.f32 %v2638, %v2633
  %v2642 = vmul.f32 %v2638, %v2634
  %v2643 = vadd.f32 %v2627, %v2639
  %v2644 = vadd.f32 %v2628, %v2640
  %v2645 = vadd.f32 %v2629, %v2641
  %v2646 = vadd.f32 %v2630, %v2642
  %v2647 = vld [vmem:[#allocation2 + $0x60] sm:$0xff]
  %v2648 = vld [vmem:[#allocation2 + $0x68] sm:$0xff]
  %v2649 = vld [vmem:[#allocation2 + $0x70] sm:$0xff]
  %v2650 = vld [vmem:[#allocation2 + $0x78] sm:$0xff]
  %v2651 = vlaneseq
  %v2652 = vshrl.u32 %v2651, 7
  %v2653 = vsub.s32 3, %v2652
  %v2654 = vrot.slane %v1570, %v2653
  %v2655 = vmul.f32 %v2654, %v2647
  %v2656 = vmul.f32 %v2654, %v2648
  %v2657 = vmul.f32 %v2654, %v2649
  %v2658 = vmul.f32 %v2654, %v2650
  %v2659 = vadd.f32 %v2643, %v2655
  %v2660 = vadd.f32 %v2644, %v2656
  %v2661 = vadd.f32 %v2645, %v2657
  %v2662 = vadd.f32 %v2646, %v2658
  %v2663 = vld [vmem:[#allocation2 + $0x80] sm:$0xff]
  %v2664 = vld [vmem:[#allocation2 + $0x88] sm:$0xff]
  %v2665 = vld [vmem:[#allocation2 + $0x90] sm:$0xff]
  %v2666 = vld [vmem:[#allocation2 + $0x98] sm:$0xff]
  %v2667 = vlaneseq
  %v2668 = vshrl.u32 %v2667, 7
  %v2669 = vsub.s32 4, %v2668
  %v2670 = vrot.slane %v1570, %v2669
  %v2671 = vmul.f32 %v2670, %v2663
  %v2672 = vmul.f32 %v2670, %v2664
  %v2673 = vmul.f32 %v2670, %v2665
  %v2674 = vmul.f32 %v2670, %v2666
  %v2675 = vadd.f32 %v2659, %v2671
  %v2676 = vadd.f32 %v2660, %v2672
  %v2677 = vadd.f32 %v2661, %v2673
  %v2678 = vadd.f32 %v2662, %v2674
  %v2679 = vld [vmem:[#allocation2 + $0xa0] sm:$0xff]
  %v2680 = vld [vmem:[#allocation2 + $0xa8] sm:$0xff]
  %v2681 = vld [vmem:[#allocation2 + $0xb0] sm:$0xff]
  %v2682 = vld [vmem:[#allocation2 + $0xb8] sm:$0xff]
  %v2683 = vlaneseq
  %v2684 = vshrl.u32 %v2683, 7
  %v2685 = vsub.s32 5, %v2684
  %v2686 = vrot.slane %v1570, %v2685
  %v2687 = vmul.f32 %v2686, %v2679
  %v2688 = vmul.f32 %v2686, %v2680
  %v2689 = vmul.f32 %v2686, %v2681
  %v2690 = vmul.f32 %v2686, %v2682
  %v2691 = vadd.f32 %v2675, %v2687
  %v2692 = vadd.f32 %v2676, %v2688
  %v2693 = vadd.f32 %v2677, %v2689
  %v2694 = vadd.f32 %v2678, %v2690
  %v2695 = vld [vmem:[#allocation2 + $0xc0] sm:$0xff]
  %v2696 = vld [vmem:[#allocation2 + $0xc8] sm:$0xff]
  %v2697 = vld [vmem:[#allocation2 + $0xd0] sm:$0xff]
  %v2698 = vld [vmem:[#allocation2 + $0xd8] sm:$0xff]
  %v2699 = vlaneseq
  %v2700 = vshrl.u32 %v2699, 7
  %v2701 = vsub.s32 6, %v2700
  %v2702 = vrot.slane %v1570, %v2701
  %v2703 = vmul.f32 %v2702, %v2695
  %v2704 = vmul.f32 %v2702, %v2696
  %v2705 = vmul.f32 %v2702, %v2697
  %v2706 = vmul.f32 %v2702, %v2698
  %v2707 = vadd.f32 %v2691, %v2703
  %v2708 = vadd.f32 %v2692, %v2704
  %v2709 = vadd.f32 %v2693, %v2705
  %v2710 = vadd.f32 %v2694, %v2706
  %v2711 = vld [vmem:[#allocation2 + $0xe0] sm:$0xff]
  %v2712 = vld [vmem:[#allocation2 + $0xe8] sm:$0xff]
  %v2713 = vld [vmem:[#allocation2 + $0xf0] sm:$0xff]
  %v2714 = vld [vmem:[#allocation2 + $0xf8] sm:$0xff]
  %v2715 = vlaneseq
  %v2716 = vshrl.u32 %v2715, 7
  %v2717 = vsub.s32 7, %v2716
  %v2718 = vrot.slane %v1570, %v2717
  %v2719 = vmul.f32 %v2718, %v2711
  %v2720 = vmul.f32 %v2718, %v2712
  %v2721 = vmul.f32 %v2718, %v2713
  %v2722 = vmul.f32 %v2718, %v2714
  %v2723 = vadd.f32 %v2707, %v2719
  %v2724 = vadd.f32 %v2708, %v2720
  %v2725 = vadd.f32 %v2709, %v2721
  %v2726 = vadd.f32 %v2710, %v2722
  %v2727 = vadd.f32 %v2723, %v1702
  %v2728 = vadd.f32 %v2724, %v1707
  %v2729 = vadd.f32 %v2725, %v1712
  %v2730 = vadd.f32 %v2726, %v1717
  %vm2731 = vcmp.ge.f32.partialorder %v2727, 0.0
  %vm2732 = vcmp.ge.f32.partialorder %v2728, 0.0
  %vm2733 = vcmp.ge.f32.partialorder %v2729, 0.0
  %vm2734 = vcmp.ge.f32.partialorder %v2730, 0.0
  %v2735 = vmul.f32 %v2727, 0.01
  %v2736 = vmul.f32 %v2728, 0.01
  %v2737 = vmul.f32 %v2729, 0.01
  %v2738 = vmul.f32 %v2730, 0.01
  %v2739 = vsel %vm2731, %v2727, %v2735
  %v2740 = vsel %vm2732, %v2728, %v2736
  %v2741 = vsel %vm2733, %v2729, %v2737
  %v2742 = vsel %vm2734, %v2730, %v2738
  %2743 = vst [vmem:[#allocation3 + $0xe0] sm:$0xff] %v2739
  %2744 = vst [vmem:[#allocation3 + $0xe8] sm:$0xff] %v2740
  %2745 = vst [vmem:[#allocation3 + $0xf0] sm:$0xff] %v2741
  %2746 = vst [vmem:[#allocation3 + $0xf8] sm:$0xff] %v2742
  %v2747 = vld [vmem:[%s9] sm:$0xff]
  %v2748 = vld [vmem:[%s9 + $0x8] sm:$0xff]
  %v2749 = vld [vmem:[%s9 + $0x10] sm:$0xff]
  %v2750 = vld [vmem:[%s9 + $0x18] sm:$0xff]
  %v2751 = vld [vmem:[%s9 + $0x20] sm:$0xff]
  %v2752 = vld [vmem:[%s9 + $0x28] sm:$0xff]
  %v2753 = vld [vmem:[%s9 + $0x30] sm:$0xff]
  %v2754 = vld [vmem:[%s9 + $0x38] sm:$0xff]
  %v2755 = vld [vmem:[%s9 + $0x40] sm:$0xff]
  %v2756 = vld [vmem:[%s9 + $0x48] sm:$0xff]
  %v2757 = vld [vmem:[%s9 + $0x50] sm:$0xff]
  %v2758 = vld [vmem:[%s9 + $0x58] sm:$0xff]
  %v2759 = vld [vmem:[%s9 + $0x60] sm:$0xff]
  %v2760 = vld [vmem:[%s9 + $0x68] sm:$0xff]
  %v2761 = vld [vmem:[%s9 + $0x70] sm:$0xff]
  %v2762 = vld [vmem:[%s9 + $0x78] sm:$0xff]
  %v2763 = vld [vmem:[%s9 + $0x80] sm:$0xff]
  %v2764 = vld [vmem:[%s9 + $0x88] sm:$0xff]
  %v2765 = vld [vmem:[%s9 + $0x90] sm:$0xff]
  %v2766 = vld [vmem:[%s9 + $0x98] sm:$0xff]
  %v2767 = vld [vmem:[%s9 + $0xa0] sm:$0xff]
  %v2768 = vld [vmem:[%s9 + $0xa8] sm:$0xff]
  %v2769 = vld [vmem:[%s9 + $0xb0] sm:$0xff]
  %v2770 = vld [vmem:[%s9 + $0xb8] sm:$0xff]
  %v2771 = vld [vmem:[%s9 + $0xc0] sm:$0xff]
  %v2772 = vld [vmem:[%s9 + $0xc8] sm:$0xff]
  %v2773 = vld [vmem:[%s9 + $0xd0] sm:$0xff]
  %v2774 = vld [vmem:[%s9 + $0xd8] sm:$0xff]
  %v2775 = vld [vmem:[%s9 + $0xe0] sm:$0xff]
  %v2776 = vld [vmem:[%s9 + $0xe8] sm:$0xff]
  %v2777 = vld [vmem:[%s9 + $0xf0] sm:$0xff]
  %v2778 = vld [vmem:[%s9 + $0xf8] sm:$0xff]
  %v2779 = vld [vmem:[#allocation3] sm:$0xff]
  %v2780 = vld [vmem:[#allocation3 + $0x8] sm:$0xff]
  %v2781 = vld [vmem:[#allocation3 + $0x10] sm:$0xff]
  %v2782 = vld [vmem:[#allocation3 + $0x18] sm:$0xff]
  %v2783 = vld [vmem:[#allocation3 + $0x20] sm:$0xff]
  %v2784 = vld [vmem:[#allocation3 + $0x28] sm:$0xff]
  %v2785 = vld [vmem:[#allocation3 + $0x30] sm:$0xff]
  %v2786 = vld [vmem:[#allocation3 + $0x38] sm:$0xff]
  %v2787 = vld [vmem:[#allocation3 + $0x40] sm:$0xff]
  %v2788 = vld [vmem:[#allocation3 + $0x48] sm:$0xff]
  %v2789 = vld [vmem:[#allocation3 + $0x50] sm:$0xff]
  %v2790 = vld [vmem:[#allocation3 + $0x58] sm:$0xff]
  %v2791 = vld [vmem:[#allocation3 + $0x60] sm:$0xff]
  %v2792 = vld [vmem:[#allocation3 + $0x68] sm:$0xff]
  %v2793 = vld [vmem:[#allocation3 + $0x70] sm:$0xff]
  %v2794 = vld [vmem:[#allocation3 + $0x78] sm:$0xff]
  %v2795 = vld [vmem:[#allocation3 + $0x80] sm:$0xff]
  %v2796 = vld [vmem:[#allocation3 + $0x88] sm:$0xff]
  %v2797 = vld [vmem:[#allocation3 + $0x90] sm:$0xff]
  %v2798 = vld [vmem:[#allocation3 + $0x98] sm:$0xff]
  %v2799 = vld [vmem:[#allocation3 + $0xa0] sm:$0xff]
  %v2800 = vld [vmem:[#allocation3 + $0xa8] sm:$0xff]
  %v2801 = vld [vmem:[#allocation3 + $0xb0] sm:$0xff]
  %v2802 = vld [vmem:[#allocation3 + $0xb8] sm:$0xff]
  %v2803 = vld [vmem:[#allocation3 + $0xc0] sm:$0xff]
  %v2804 = vld [vmem:[#allocation3 + $0xc8] sm:$0xff]
  %v2805 = vld [vmem:[#allocation3 + $0xd0] sm:$0xff]
  %v2806 = vld [vmem:[#allocation3 + $0xd8] sm:$0xff]
  %v2807 = vld [vmem:[#allocation3 + $0xe0] sm:$0xff]
  %v2808 = vld [vmem:[#allocation3 + $0xe8] sm:$0xff]
  %v2809 = vld [vmem:[#allocation3 + $0xf0] sm:$0xff]
  %v2810 = vld [vmem:[#allocation3 + $0xf8] sm:$0xff]
  %v2811 = vpack.c.bf16 %v2780, %v2779
  %v2812 = vpack.c.bf16 %v2782, %v2781
  %v2813 = vpack.c.bf16 %v2784, %v2783
  %v2814 = vpack.c.bf16 %v2786, %v2785
  %v2815 = vpack.c.bf16 %v2788, %v2787
  %v2816 = vpack.c.bf16 %v2790, %v2789
  %v2817 = vpack.c.bf16 %v2792, %v2791
  %v2818 = vpack.c.bf16 %v2794, %v2793
  %v2819 = vpack.c.bf16 %v2796, %v2795
  %v2820 = vpack.c.bf16 %v2798, %v2797
  %v2821 = vpack.c.bf16 %v2800, %v2799
  %v2822 = vpack.c.bf16 %v2802, %v2801
  %v2823 = vpack.c.bf16 %v2804, %v2803
  %v2824 = vpack.c.bf16 %v2806, %v2805
  %v2825 = vpack.c.bf16 %v2808, %v2807
  %v2826 = vpack.c.bf16 %v2810, %v2809
  %v2859 = vunpack.c.l.b16 %v2747
  %v2860 = vunpack.c.h.b16 %v2747
  %v2861 = vunpack.c.l.b16 %v2748
  %v2862 = vunpack.c.h.b16 %v2748
  %v2863 = vunpack.c.l.b16 %v2749
  %v2864 = vunpack.c.h.b16 %v2749
  %v2865 = vunpack.c.l.b16 %v2750
  %v2866 = vunpack.c.h.b16 %v2750
  %v2867 = vunpack.c.l.b16 %v2751
  %v2868 = vunpack.c.h.b16 %v2751
  %v2869 = vunpack.c.l.b16 %v2752
  %v2870 = vunpack.c.h.b16 %v2752
  %v2871 = vunpack.c.l.b16 %v2753
  %v2872 = vunpack.c.h.b16 %v2753
  %v2873 = vunpack.c.l.b16 %v2754
  %v2874 = vunpack.c.h.b16 %v2754
  %v2875 = vunpack.c.l.b16 %v2755
  %v2876 = vunpack.c.h.b16 %v2755
  %v2877 = vunpack.c.l.b16 %v2756
  %v2878 = vunpack.c.h.b16 %v2756
  %v2879 = vunpack.c.l.b16 %v2757
  %v2880 = vunpack.c.h.b16 %v2757
  %v2881 = vunpack.c.l.b16 %v2758
  %v2882 = vunpack.c.h.b16 %v2758
  %v2883 = vunpack.c.l.b16 %v2759
  %v2884 = vunpack.c.h.b16 %v2759
  %v2885 = vunpack.c.l.b16 %v2760
  %v2886 = vunpack.c.h.b16 %v2760
  %v2887 = vunpack.c.l.b16 %v2761
  %v2888 = vunpack.c.h.b16 %v2761
  %v2889 = vunpack.c.l.b16 %v2762
  %v2890 = vunpack.c.h.b16 %v2762
  %v2891 = vunpack.c.l.b16 %v2763
  %v2892 = vunpack.c.h.b16 %v2763
  %v2893 = vunpack.c.l.b16 %v2764
  %v2894 = vunpack.c.h.b16 %v2764
  %v2895 = vunpack.c.l.b16 %v2765
  %v2896 = vunpack.c.h.b16 %v2765
  %v2897 = vunpack.c.l.b16 %v2766
  %v2898 = vunpack.c.h.b16 %v2766
  %v2899 = vunpack.c.l.b16 %v2767
  %v2900 = vunpack.c.h.b16 %v2767
  %v2901 = vunpack.c.l.b16 %v2768
  %v2902 = vunpack.c.h.b16 %v2768
  %v2903 = vunpack.c.l.b16 %v2769
  %v2904 = vunpack.c.h.b16 %v2769
  %v2905 = vunpack.c.l.b16 %v2770
  %v2906 = vunpack.c.h.b16 %v2770
  %v2907 = vunpack.c.l.b16 %v2771
  %v2908 = vunpack.c.h.b16 %v2771
  %v2909 = vunpack.c.l.b16 %v2772
  %v2910 = vunpack.c.h.b16 %v2772
  %v2911 = vunpack.c.l.b16 %v2773
  %v2912 = vunpack.c.h.b16 %v2773
  %v2913 = vunpack.c.l.b16 %v2774
  %v2914 = vunpack.c.h.b16 %v2774
  %v2915 = vunpack.c.l.b16 %v2775
  %v2916 = vunpack.c.h.b16 %v2775
  %v2917 = vunpack.c.l.b16 %v2776
  %v2918 = vunpack.c.h.b16 %v2776
  %v2919 = vunpack.c.l.b16 %v2777
  %v2920 = vunpack.c.h.b16 %v2777
  %v2921 = vunpack.c.l.b16 %v2778
  %v2922 = vunpack.c.h.b16 %v2778
  %v2923 = vpack.c.b16 %v2861, %v2859
  %v2924 = vpack.c.b16 %v2862, %v2860
  %v2925 = vpack.c.b16 %v2865, %v2863
  %v2926 = vpack.c.b16 %v2866, %v2864
  %v2927 = vpack.c.b16 %v2869, %v2867
  %v2928 = vpack.c.b16 %v2870, %v2868
  %v2929 = vpack.c.b16 %v2873, %v2871
  %v2930 = vpack.c.b16 %v2874, %v2872
  %v2931 = vpack.c.b16 %v2877, %v2875
  %v2932 = vpack.c.b16 %v2878, %v2876
  %v2933 = vpack.c.b16 %v2881, %v2879
  %v2934 = vpack.c.b16 %v2882, %v2880
  %v2935 = vpack.c.b16 %v2885, %v2883
  %v2936 = vpack.c.b16 %v2886, %v2884
  %v2937 = vpack.c.b16 %v2889, %v2887
  %v2938 = vpack.c.b16 %v2890, %v2888
  %v2939 = vpack.c.b16 %v2893, %v2891
  %v2940 = vpack.c.b16 %v2894, %v2892
  %v2941 = vpack.c.b16 %v2897, %v2895
  %v2942 = vpack.c.b16 %v2898, %v2896
  %v2943 = vpack.c.b16 %v2901, %v2899
  %v2944 = vpack.c.b16 %v2902, %v2900
  %v2945 = vpack.c.b16 %v2905, %v2903
  %v2946 = vpack.c.b16 %v2906, %v2904
  %v2947 = vpack.c.b16 %v2909, %v2907
  %v2948 = vpack.c.b16 %v2910, %v2908
  %v2949 = vpack.c.b16 %v2913, %v2911
  %v2950 = vpack.c.b16 %v2914, %v2912
  %v2951 = vpack.c.b16 %v2917, %v2915
  %v2952 = vpack.c.b16 %v2918, %v2916
  %v2953 = vpack.c.b16 %v2921, %v2919
  %v2954 = vpack.c.b16 %v2922, %v2920
  %2987 = vmatprep.subr.bf16.mxu0 0
  %2988 = vmatpush1.bf16.msra.mxu0 %v2811
  %2989 = vmatprep.subr.bf16.mxu0 0
  %2990 = vmatpush1.bf16.msra.mxu0 %v2812
  %2991 = vmatprep.subr.bf16.mxu0 0
  %2992 = vmatpush1.bf16.msra.mxu0 %v2813
  %2993 = vmatprep.subr.bf16.mxu0 0
  %2994 = vmatpush1.bf16.msra.mxu0 %v2814
  %2995 = vmatprep.subr.bf16.mxu0 0
  %2996 = vmatpush1.bf16.msra.mxu0 %v2815
  %2997 = vmatprep.subr.bf16.mxu0 0
  %2998 = vmatpush1.bf16.msra.mxu0 %v2816
  %2999 = vmatprep.subr.bf16.mxu0 0
  %3000 = vmatpush1.bf16.msra.mxu0 %v2817
  %3001 = vmatprep.subr.bf16.mxu0 0
  %3002 = vmatpush1.bf16.msra.mxu0 %v2818
  %3003 = vmatprep.subr.bf16.mxu0 0
  %3004 = vmatpush1.bf16.msra.mxu0 %v2819
  %3005 = vmatprep.subr.bf16.mxu0 0
  %3006 = vmatpush1.bf16.msra.mxu0 %v2820
  %3007 = vmatprep.subr.bf16.mxu0 0
  %3008 = vmatpush1.bf16.msra.mxu0 %v2821
  %3009 = vmatprep.subr.bf16.mxu0 0
  %3010 = vmatpush1.bf16.msra.mxu0 %v2822
  %3011 = vmatprep.subr.bf16.mxu0 0
  %3012 = vmatpush1.bf16.msra.mxu0 %v2823
  %3013 = vmatprep.subr.bf16.mxu0 0
  %3014 = vmatpush1.bf16.msra.mxu0 %v2824
  %3015 = vmatprep.subr.bf16.mxu0 0
  %3016 = vmatpush1.bf16.msra.mxu0 %v2825
  %3017 = vmatprep.subr.bf16.mxu0 0
  %3018 = vmatpush1.bf16.msra.mxu0 %v2826
  %3019 = vmatprep.mubr.bf16.mxu0 %v2924
  %3020 = vmatmul.mubr.bf16.gmra.mrb[0].mxu0 %v2923
  %v3021 = vpop.f32.mrb[0].mxu0
  %v3022 = vadd.f32 0.0, %v3021
  %v3023 = vpop.f32.mrb[0].mxu0
  %v3024 = vpop.f32.mrb[0].mxu0
  %v3025 = vadd.f32 0.0, %v3024
  %v3026 = vpop.f32.mrb[0].mxu0
  %3027 = vmatprep.mubr.bf16.mxu0 %v2926
  %3028 = vmatmul.mubr.bf16.gmra.mrb[0].mxu0 %v2925
  %v3029 = vpop.f32.mrb[0].mxu0
  %v3030 = vadd.f32 0.0, %v3029
  %v3031 = vpop.f32.mrb[0].mxu0
  %v3032 = vpop.f32.mrb[0].mxu0
  %v3033 = vadd.f32 0.0, %v3032
  %v3034 = vpop.f32.mrb[0].mxu0
  %3035 = vmatprep.mubr.bf16.mxu0 %v2928
  %3036 = vmatmul.mubr.bf16.gmra.mrb[0].mxu0 %v2927
  %v3037 = vpop.f32.mrb[0].mxu0
  %v3038 = vadd.f32 0.0, %v3037
  %v3039 = vpop.f32.mrb[0].mxu0
  %v3040 = vpop.f32.mrb[0].mxu0
  %v3041 = vadd.f32 0.0, %v3040
  %v3042 = vpop.f32.mrb[0].mxu0
  %3043 = vmatprep.mubr.bf16.mxu0 %v2930
  %3044 = vmatmul.mubr.bf16.gmra.mrb[0].mxu0 %v2929
  %v3045 = vpop.f32.mrb[0].mxu0
  %v3046 = vadd.f32 0.0, %v3045
  %v3047 = vpop.f32.mrb[0].mxu0
  %v3048 = vpop.f32.mrb[0].mxu0
  %v3049 = vadd.f32 0.0, %v3048
  %v3050 = vpop.f32.mrb[0].mxu0
  %3051 = vmatprep.mubr.bf16.mxu0 %v2932
  %3052 = vmatmul.mubr.bf16.gmra.mrb[0].mxu0 %v2931
  %v3053 = vpop.f32.mrb[0].mxu0
  %v3054 = vadd.f32 0.0, %v3053
  %v3055 = vpop.f32.mrb[0].mxu0
  %v3056 = vpop.f32.mrb[0].mxu0
  %v3057 = vadd.f32 0.0, %v3056
  %v3058 = vpop.f32.mrb[0].mxu0
  %3059 = vmatprep.mubr.bf16.mxu0 %v2934
  %3060 = vmatmul.mubr.bf16.gmra.mrb[0].mxu0 %v2933
  %v3061 = vpop.f32.mrb[0].mxu0
  %v3062 = vadd.f32 0.0, %v3061
  %v3063 = vpop.f32.mrb[0].mxu0
  %v3064 = vpop.f32.mrb[0].mxu0
  %v3065 = vadd.f32 0.0, %v3064
  %v3066 = vpop.f32.mrb[0].mxu0
  %3067 = vmatprep.mubr.bf16.mxu0 %v2936
  %3068 = vmatmul.mubr.bf16.gmra.mrb[0].mxu0 %v2935
  %v3069 = vpop.f32.mrb[0].mxu0
  %v3070 = vadd.f32 0.0, %v3069
  %v3071 = vpop.f32.mrb[0].mxu0
  %v3072 = vpop.f32.mrb[0].mxu0
  %v3073 = vadd.f32 0.0, %v3072
  %v3074 = vpop.f32.mrb[0].mxu0
  %3075 = vmatprep.mubr.bf16.mxu0 %v2938
  %3076 = vmatmul.mubr.bf16.gmra.mrb[0].mxu0 %v2937
  %v3077 = vpop.f32.mrb[0].mxu0
  %v3078 = vadd.f32 0.0, %v3077
  %v3079 = vpop.f32.mrb[0].mxu0
  %v3080 = vpop.f32.mrb[0].mxu0
  %v3081 = vadd.f32 0.0, %v3080
  %v3082 = vpop.f32.mrb[0].mxu0
  %3083 = vmatprep.mubr.bf16.mxu0 %v2940
  %3084 = vmatmul.mubr.bf16.gmra.mrb[0].mxu0 %v2939
  %v3085 = vpop.f32.mrb[0].mxu0
  %v3086 = vadd.f32 0.0, %v3085
  %v3087 = vpop.f32.mrb[0].mxu0
  %v3088 = vpop.f32.mrb[0].mxu0
  %v3089 = vadd.f32 0.0, %v3088
  %v3090 = vpop.f32.mrb[0].mxu0
  %3091 = vmatprep.mubr.bf16.mxu0 %v2942
  %3092 = vmatmul.mubr.bf16.gmra.mrb[0].mxu0 %v2941
  %v3093 = vpop.f32.mrb[0].mxu0
  %v3094 = vadd.f32 0.0, %v3093
  %v3095 = vpop.f32.mrb[0].mxu0
  %v3096 = vpop.f32.mrb[0].mxu0
  %v3097 = vadd.f32 0.0, %v3096
  %v3098 = vpop.f32.mrb[0].mxu0
  %3099 = vmatprep.mubr.bf16.mxu0 %v2944
  %3100 = vmatmul.mubr.bf16.gmra.mrb[0].mxu0 %v2943
  %v3101 = vpop.f32.mrb[0].mxu0
  %v3102 = vadd.f32 0.0, %v3101
  %v3103 = vpop.f32.mrb[0].mxu0
  %v3104 = vpop.f32.mrb[0].mxu0
  %v3105 = vadd.f32 0.0, %v3104
  %v3106 = vpop.f32.mrb[0].mxu0
  %3107 = vmatprep.mubr.bf16.mxu0 %v2946
  %3108 = vmatmul.mubr.bf16.gmra.mrb[0].mxu0 %v2945
  %v3109 = vpop.f32.mrb[0].mxu0
  %v3110 = vadd.f32 0.0, %v3109
  %v3111 = vpop.f32.mrb[0].mxu0
  %v3112 = vpop.f32.mrb[0].mxu0
  %v3113 = vadd.f32 0.0, %v3112
  %v3114 = vpop.f32.mrb[0].mxu0
  %3115 = vmatprep.mubr.bf16.mxu0 %v2948
  %3116 = vmatmul.mubr.bf16.gmra.mrb[0].mxu0 %v2947
  %v3117 = vpop.f32.mrb[0].mxu0
  %v3118 = vadd.f32 0.0, %v3117
  %v3119 = vpop.f32.mrb[0].mxu0
  %v3120 = vpop.f32.mrb[0].mxu0
  %v3121 = vadd.f32 0.0, %v3120
  %v3122 = vpop.f32.mrb[0].mxu0
  %3123 = vmatprep.mubr.bf16.mxu0 %v2950
  %3124 = vmatmul.mubr.bf16.gmra.mrb[0].mxu0 %v2949
  %v3125 = vpop.f32.mrb[0].mxu0
  %v3126 = vadd.f32 0.0, %v3125
  %v3127 = vpop.f32.mrb[0].mxu0
  %v3128 = vpop.f32.mrb[0].mxu0
  %v3129 = vadd.f32 0.0, %v3128
  %v3130 = vpop.f32.mrb[0].mxu0
  %3131 = vmatprep.mubr.bf16.mxu0 %v2952
  %3132 = vmatmul.mubr.bf16.gmra.mrb[0].mxu0 %v2951
  %v3133 = vpop.f32.mrb[0].mxu0
  %v3134 = vadd.f32 0.0, %v3133
  %v3135 = vpop.f32.mrb[0].mxu0
  %v3136 = vpop.f32.mrb[0].mxu0
  %v3137 = vadd.f32 0.0, %v3136
  %v3138 = vpop.f32.mrb[0].mxu0
  %3139 = vmatprep.mubr.bf16.mxu0 %v2954
  %3140 = vmatmul.mubr.bf16.gmra.mrb[0].mxu0 %v2953
  %v3141 = vpop.f32.mrb[0].mxu0
  %v3142 = vadd.f32 0.0, %v3141
  %v3143 = vpop.f32.mrb[0].mxu0
  %v3144 = vpop.f32.mrb[0].mxu0
  %v3145 = vadd.f32 0.0, %v3144
  %v3146 = vpop.f32.mrb[0].mxu0
  %3147 = vdwg.mxu0
  %3148 = vst [vmem:[#allocation2] sm:$0xff] %v3022
  %3149 = vst [vmem:[#allocation2 + $0x8] sm:$0xff] %v3025
  %3150 = vst [vmem:[#allocation2 + $0x10] sm:$0xff] %v3030
  %3151 = vst [vmem:[#allocation2 + $0x18] sm:$0xff] %v3033
  %3152 = vst [vmem:[#allocation2 + $0x20] sm:$0xff] %v3038
  %3153 = vst [vmem:[#allocation2 + $0x28] sm:$0xff] %v3041
  %3154 = vst [vmem:[#allocation2 + $0x30] sm:$0xff] %v3046
  %3155 = vst [vmem:[#allocation2 + $0x38] sm:$0xff] %v3049
  %3156 = vst [vmem:[#allocation2 + $0x40] sm:$0xff] %v3054
  %3157 = vst [vmem:[#allocation2 + $0x48] sm:$0xff] %v3057
  %3158 = vst [vmem:[#allocation2 + $0x50] sm:$0xff] %v3062
  %3159 = vst [vmem:[#allocation2 + $0x58] sm:$0xff] %v3065
  %3160 = vst [vmem:[#allocation2 + $0x60] sm:$0xff] %v3070
  %3161 = vst [vmem:[#allocation2 + $0x68] sm:$0xff] %v3073
  %3162 = vst [vmem:[#allocation2 + $0x70] sm:$0xff] %v3078
  %3163 = vst [vmem:[#allocation2 + $0x78] sm:$0xff] %v3081
  %3164 = vst [vmem:[#allocation2 + $0x80] sm:$0xff] %v3086
  %3165 = vst [vmem:[#allocation2 + $0x88] sm:$0xff] %v3089
  %3166 = vst [vmem:[#allocation2 + $0x90] sm:$0xff] %v3094
  %3167 = vst [vmem:[#allocation2 + $0x98] sm:$0xff] %v3097
  %3168 = vst [vmem:[#allocation2 + $0xa0] sm:$0xff] %v3102
  %3169 = vst [vmem:[#allocation2 + $0xa8] sm:$0xff] %v3105
  %3170 = vst [vmem:[#allocation2 + $0xb0] sm:$0xff] %v3110
  %3171 = vst [vmem:[#allocation2 + $0xb8] sm:$0xff] %v3113
  %3172 = vst [vmem:[#allocation2 + $0xc0] sm:$0xff] %v3118
  %3173 = vst [vmem:[#allocation2 + $0xc8] sm:$0xff] %v3121
  %3174 = vst [vmem:[#allocation2 + $0xd0] sm:$0xff] %v3126
  %3175 = vst [vmem:[#allocation2 + $0xd8] sm:$0xff] %v3129
  %3176 = vst [vmem:[#allocation2 + $0xe0] sm:$0xff] %v3134
  %3177 = vst [vmem:[#allocation2 + $0xe8] sm:$0xff] %v3137
  %3178 = vst [vmem:[#allocation2 + $0xf0] sm:$0xff] %v3142
  %3179 = vst [vmem:[#allocation2 + $0xf8] sm:$0xff] %v3145
  %v3180 = vld [vmem:[%s10] sm:$0xff]
  %v3181 = vld [vmem:[%s10 + $0x8] sm:$0xff]
  %v3182 = vld [vmem:[%s10 + $0x10] sm:$0xff]
  %v3183 = vld [vmem:[%s10 + $0x18] sm:$0xff]
  %v3184 = vld [vmem:[#allocation2] sm:$0xff]
  %v3185 = vld [vmem:[#allocation2 + $0x8] sm:$0xff]
  %v3186 = vld [vmem:[#allocation2 + $0x10] sm:$0xff]
  %v3187 = vld [vmem:[#allocation2 + $0x18] sm:$0xff]
  %v3188 = vmul.f32 %v1582, %v3184
  %v3189 = vmul.f32 %v1582, %v3185
  %v3190 = vmul.f32 %v1582, %v3186
  %v3191 = vmul.f32 %v1582, %v3187
  %v3192 = vld [vmem:[#allocation2 + $0x20] sm:$0xff]
  %v3193 = vld [vmem:[#allocation2 + $0x28] sm:$0xff]
  %v3194 = vld [vmem:[#allocation2 + $0x30] sm:$0xff]
  %v3195 = vld [vmem:[#allocation2 + $0x38] sm:$0xff]
  %v3196 = vmul.f32 %v1594, %v3192
  %v3197 = vmul.f32 %v1594, %v3193
  %v3198 = vmul.f32 %v1594, %v3194
  %v3199 = vmul.f32 %v1594, %v3195
  %v3200 = vadd.f32 %v3188, %v3196
  %v3201 = vadd.f32 %v3189, %v3197
  %v3202 = vadd.f32 %v3190, %v3198
  %v3203 = vadd.f32 %v3191, %v3199
  %v3204 = vld [vmem:[#allocation2 + $0x40] sm:$0xff]
  %v3205 = vld [vmem:[#allocation2 + $0x48] sm:$0xff]
  %v3206 = vld [vmem:[#allocation2 + $0x50] sm:$0xff]
  %v3207 = vld [vmem:[#allocation2 + $0x58] sm:$0xff]
  %v3208 = vmul.f32 %v1610, %v3204
  %v3209 = vmul.f32 %v1610, %v3205
  %v3210 = vmul.f32 %v1610, %v3206
  %v3211 = vmul.f32 %v1610, %v3207
  %v3212 = vadd.f32 %v3200, %v3208
  %v3213 = vadd.f32 %v3201, %v3209
  %v3214 = vadd.f32 %v3202, %v3210
  %v3215 = vadd.f32 %v3203, %v3211
  %v3216 = vld [vmem:[#allocation2 + $0x60] sm:$0xff]
  %v3217 = vld [vmem:[#allocation2 + $0x68] sm:$0xff]
  %v3218 = vld [vmem:[#allocation2 + $0x70] sm:$0xff]
  %v3219 = vld [vmem:[#allocation2 + $0x78] sm:$0xff]
  %v3220 = vmul.f32 %v1626, %v3216
  %v3221 = vmul.f32 %v1626, %v3217
  %v3222 = vmul.f32 %v1626, %v3218
  %v3223 = vmul.f32 %v1626, %v3219
  %v3224 = vadd.f32 %v3212, %v3220
  %v3225 = vadd.f32 %v3213, %v3221
  %v3226 = vadd.f32 %v3214, %v3222
  %v3227 = vadd.f32 %v3215, %v3223
  %v3228 = vld [vmem:[#allocation2 + $0x80] sm:$0xff]
  %v3229 = vld [vmem:[#allocation2 + $0x88] sm:$0xff]
  %v3230 = vld [vmem:[#allocation2 + $0x90] sm:$0xff]
  %v3231 = vld [vmem:[#allocation2 + $0x98] sm:$0xff]
  %v3232 = vmul.f32 %v1642, %v3228
  %v3233 = vmul.f32 %v1642, %v3229
  %v3234 = vmul.f32 %v1642, %v3230
  %v3235 = vmul.f32 %v1642, %v3231
  %v3236 = vadd.f32 %v3224, %v3232
  %v3237 = vadd.f32 %v3225, %v3233
  %v3238 = vadd.f32 %v3226, %v3234
  %v3239 = vadd.f32 %v3227, %v3235
  %v3240 = vld [vmem:[#allocation2 + $0xa0] sm:$0xff]
  %v3241 = vld [vmem:[#allocation2 + $0xa8] sm:$0xff]
  %v3242 = vld [vmem:[#allocation2 + $0xb0] sm:$0xff]
  %v3243 = vld [vmem:[#allocation2 + $0xb8] sm:$0xff]
  %v3244 = vmul.f32 %v1658, %v3240
  %v3245 = vmul.f32 %v1658, %v3241
  %v3246 = vmul.f32 %v1658, %v3242
  %v3247 = vmul.f32 %v1658, %v3243
  %v3248 = vadd.f32 %v3236, %v3244
  %v3249 = vadd.f32 %v3237, %v3245
  %v3250 = vadd.f32 %v3238, %v3246
  %v3251 = vadd.f32 %v3239, %v3247
  %v3252 = vld [vmem:[#allocation2 + $0xc0] sm:$0xff]
  %v3253 = vld [vmem:[#allocation2 + $0xc8] sm:$0xff]
  %v3254 = vld [vmem:[#allocation2 + $0xd0] sm:$0xff]
  %v3255 = vld [vmem:[#allocation2 + $0xd8] sm:$0xff]
  %v3256 = vmul.f32 %v1674, %v3252
  %v3257 = vmul.f32 %v1674, %v3253
  %v3258 = vmul.f32 %v1674, %v3254
  %v3259 = vmul.f32 %v1674, %v3255
  %v3260 = vadd.f32 %v3248, %v3256
  %v3261 = vadd.f32 %v3249, %v3257
  %v3262 = vadd.f32 %v3250, %v3258
  %v3263 = vadd.f32 %v3251, %v3259
  %v3264 = vld [vmem:[#allocation2 + $0xe0] sm:$0xff]
  %v3265 = vld [vmem:[#allocation2 + $0xe8] sm:$0xff]
  %v3266 = vld [vmem:[#allocation2 + $0xf0] sm:$0xff]
  %v3267 = vld [vmem:[#allocation2 + $0xf8] sm:$0xff]
  %v3268 = vmul.f32 %v1690, %v3264
  %v3269 = vmul.f32 %v1690, %v3265
  %v3270 = vmul.f32 %v1690, %v3266
  %v3271 = vmul.f32 %v1690, %v3267
  %v3272 = vadd.f32 %v3260, %v3268
  %v3273 = vadd.f32 %v3261, %v3269
  %v3274 = vadd.f32 %v3262, %v3270
  %v3275 = vadd.f32 %v3263, %v3271
  %3277 = vset.pattern.permute.xlu0 0
  %3278 = vperm.xlu0 %3277, %v3180
  %v3279 = vpop.permute.xlu0 %3278
  %3282 = vset.pattern.permute.xlu0 0
  %3283 = vperm.xlu0 %3282, %v3181
  %v3284 = vpop.permute.xlu0 %3283
  %3287 = vset.pattern.permute.xlu0 0
  %3288 = vperm.xlu0 %3287, %v3182
  %v3289 = vpop.permute.xlu0 %3288
  %3292 = vset.pattern.permute.xlu0 0
  %3293 = vperm.xlu0 %3292, %v3183
  %v3294 = vpop.permute.xlu0 %3293
  %v3296 = vadd.f32 %v3272, %v3279
  %v3297 = vadd.f32 %v3273, %v3284
  %v3298 = vadd.f32 %v3274, %v3289
  %v3299 = vadd.f32 %v3275, %v3294
  %vm3300 = vcmp.ge.f32.partialorder %v3296, 0.0
  %vm3301 = vcmp.ge.f32.partialorder %v3297, 0.0
  %vm3302 = vcmp.ge.f32.partialorder %v3298, 0.0
  %vm3303 = vcmp.ge.f32.partialorder %v3299, 0.0
  %v3304 = vmul.f32 %v3296, 0.01
  %v3305 = vmul.f32 %v3297, 0.01
  %v3306 = vmul.f32 %v3298, 0.01
  %v3307 = vmul.f32 %v3299, 0.01
  %v3308 = vsel %vm3300, %v3296, %v3304
  %v3309 = vsel %vm3301, %v3297, %v3305
  %v3310 = vsel %vm3302, %v3298, %v3306
  %v3311 = vsel %vm3303, %v3299, %v3307
  %3312 = vst [vmem:[#allocation3] sm:$0xff] %v3308
  %3313 = vst [vmem:[#allocation3 + $0x8] sm:$0xff] %v3309
  %3314 = vst [vmem:[#allocation3 + $0x10] sm:$0xff] %v3310
  %3315 = vst [vmem:[#allocation3 + $0x18] sm:$0xff] %v3311
  %v3316 = vld [vmem:[#allocation2] sm:$0xff]
  %v3317 = vld [vmem:[#allocation2 + $0x8] sm:$0xff]
  %v3318 = vld [vmem:[#allocation2 + $0x10] sm:$0xff]
  %v3319 = vld [vmem:[#allocation2 + $0x18] sm:$0xff]
  %v3320 = vmul.f32 %v1746, %v3316
  %v3321 = vmul.f32 %v1746, %v3317
  %v3322 = vmul.f32 %v1746, %v3318
  %v3323 = vmul.f32 %v1746, %v3319
  %v3324 = vld [vmem:[#allocation2 + $0x20] sm:$0xff]
  %v3325 = vld [vmem:[#allocation2 + $0x28] sm:$0xff]
  %v3326 = vld [vmem:[#allocation2 + $0x30] sm:$0xff]
  %v3327 = vld [vmem:[#allocation2 + $0x38] sm:$0xff]
  %v3328 = vmul.f32 %v1758, %v3324
  %v3329 = vmul.f32 %v1758, %v3325
  %v3330 = vmul.f32 %v1758, %v3326
  %v3331 = vmul.f32 %v1758, %v3327
  %v3332 = vadd.f32 %v3320, %v3328
  %v3333 = vadd.f32 %v3321, %v3329
  %v3334 = vadd.f32 %v3322, %v3330
  %v3335 = vadd.f32 %v3323, %v3331
  %v3336 = vld [vmem:[#allocation2 + $0x40] sm:$0xff]
  %v3337 = vld [vmem:[#allocation2 + $0x48] sm:$0xff]
  %v3338 = vld [vmem:[#allocation2 + $0x50] sm:$0xff]
  %v3339 = vld [vmem:[#allocation2 + $0x58] sm:$0xff]
  %v3340 = vmul.f32 %v1774, %v3336
  %v3341 = vmul.f32 %v1774, %v3337
  %v3342 = vmul.f32 %v1774, %v3338
  %v3343 = vmul.f32 %v1774, %v3339
  %v3344 = vadd.f32 %v3332, %v3340
  %v3345 = vadd.f32 %v3333, %v3341
  %v3346 = vadd.f32 %v3334, %v3342
  %v3347 = vadd.f32 %v3335, %v3343
  %v3348 = vld [vmem:[#allocation2 + $0x60] sm:$0xff]
  %v3349 = vld [vmem:[#allocation2 + $0x68] sm:$0xff]
  %v3350 = vld [vmem:[#allocation2 + $0x70] sm:$0xff]
  %v3351 = vld [vmem:[#allocation2 + $0x78] sm:$0xff]
  %v3352 = vmul.f32 %v1790, %v3348
  %v3353 = vmul.f32 %v1790, %v3349
  %v3354 = vmul.f32 %v1790, %v3350
  %v3355 = vmul.f32 %v1790, %v3351
  %v3356 = vadd.f32 %v3344, %v3352
  %v3357 = vadd.f32 %v3345, %v3353
  %v3358 = vadd.f32 %v3346, %v3354
  %v3359 = vadd.f32 %v3347, %v3355
  %v3360 = vld [vmem:[#allocation2 + $0x80] sm:$0xff]
  %v3361 = vld [vmem:[#allocation2 + $0x88] sm:$0xff]
  %v3362 = vld [vmem:[#allocation2 + $0x90] sm:$0xff]
  %v3363 = vld [vmem:[#allocation2 + $0x98] sm:$0xff]
  %v3364 = vmul.f32 %v1806, %v3360
  %v3365 = vmul.f32 %v1806, %v3361
  %v3366 = vmul.f32 %v1806, %v3362
  %v3367 = vmul.f32 %v1806, %v3363
  %v3368 = vadd.f32 %v3356, %v3364
  %v3369 = vadd.f32 %v3357, %v3365
  %v3370 = vadd.f32 %v3358, %v3366
  %v3371 = vadd.f32 %v3359, %v3367
  %v3372 = vld [vmem:[#allocation2 + $0xa0] sm:$0xff]
  %v3373 = vld [vmem:[#allocation2 + $0xa8] sm:$0xff]
  %v3374 = vld [vmem:[#allocation2 + $0xb0] sm:$0xff]
  %v3375 = vld [vmem:[#allocation2 + $0xb8] sm:$0xff]
  %v3376 = vmul.f32 %v1822, %v3372
  %v3377 = vmul.f32 %v1822, %v3373
  %v3378 = vmul.f32 %v1822, %v3374
  %v3379 = vmul.f32 %v1822, %v3375
  %v3380 = vadd.f32 %v3368, %v3376
  %v3381 = vadd.f32 %v3369, %v3377
  %v3382 = vadd.f32 %v3370, %v3378
  %v3383 = vadd.f32 %v3371, %v3379
  %v3384 = vld [vmem:[#allocation2 + $0xc0] sm:$0xff]
  %v3385 = vld [vmem:[#allocation2 + $0xc8] sm:$0xff]
  %v3386 = vld [vmem:[#allocation2 + $0xd0] sm:$0xff]
  %v3387 = vld [vmem:[#allocation2 + $0xd8] sm:$0xff]
  %v3388 = vmul.f32 %v1838, %v3384
  %v3389 = vmul.f32 %v1838, %v3385
  %v3390 = vmul.f32 %v1838, %v3386
  %v3391 = vmul.f32 %v1838, %v3387
  %v3392 = vadd.f32 %v3380, %v3388
  %v3393 = vadd.f32 %v3381, %v3389
  %v3394 = vadd.f32 %v3382, %v3390
  %v3395 = vadd.f32 %v3383, %v3391
  %v3396 = vld [vmem:[#allocation2 + $0xe0] sm:$0xff]
  %v3397 = vld [vmem:[#allocation2 + $0xe8] sm:$0xff]
  %v3398 = vld [vmem:[#allocation2 + $0xf0] sm:$0xff]
  %v3399 = vld [vmem:[#allocation2 + $0xf8] sm:$0xff]
  %v3400 = vmul.f32 %v1854, %v3396
  %v3401 = vmul.f32 %v1854, %v3397
  %v3402 = vmul.f32 %v1854, %v3398
  %v3403 = vmul.f32 %v1854, %v3399
  %v3404 = vadd.f32 %v3392, %v3400
  %v3405 = vadd.f32 %v3393, %v3401
  %v3406 = vadd.f32 %v3394, %v3402
  %v3407 = vadd.f32 %v3395, %v3403
  %v3408 = vadd.f32 %v3404, %v3279
  %v3409 = vadd.f32 %v3405, %v3284
  %v3410 = vadd.f32 %v3406, %v3289
  %v3411 = vadd.f32 %v3407, %v3294
  %vm3412 = vcmp.ge.f32.partialorder %v3408, 0.0
  %vm3413 = vcmp.ge.f32.partialorder %v3409, 0.0
  %vm3414 = vcmp.ge.f32.partialorder %v3410, 0.0
  %vm3415 = vcmp.ge.f32.partialorder %v3411, 0.0
  %v3416 = vmul.f32 %v3408, 0.01
  %v3417 = vmul.f32 %v3409, 0.01
  %v3418 = vmul.f32 %v3410, 0.01
  %v3419 = vmul.f32 %v3411, 0.01
  %v3420 = vsel %vm3412, %v3408, %v3416
  %v3421 = vsel %vm3413, %v3409, %v3417
  %v3422 = vsel %vm3414, %v3410, %v3418
  %v3423 = vsel %vm3415, %v3411, %v3419
  %3424 = vst [vmem:[#allocation3 + $0x20] sm:$0xff] %v3420
  %3425 = vst [vmem:[#allocation3 + $0x28] sm:$0xff] %v3421
  %3426 = vst [vmem:[#allocation3 + $0x30] sm:$0xff] %v3422
  %3427 = vst [vmem:[#allocation3 + $0x38] sm:$0xff] %v3423
  %v3428 = vld [vmem:[#allocation2] sm:$0xff]
  %v3429 = vld [vmem:[#allocation2 + $0x8] sm:$0xff]
  %v3430 = vld [vmem:[#allocation2 + $0x10] sm:$0xff]
  %v3431 = vld [vmem:[#allocation2 + $0x18] sm:$0xff]
  %v3432 = vmul.f32 %v1890, %v3428
  %v3433 = vmul.f32 %v1890, %v3429
  %v3434 = vmul.f32 %v1890, %v3430
  %v3435 = vmul.f32 %v1890, %v3431
  %v3436 = vld [vmem:[#allocation2 + $0x20] sm:$0xff]
  %v3437 = vld [vmem:[#allocation2 + $0x28] sm:$0xff]
  %v3438 = vld [vmem:[#allocation2 + $0x30] sm:$0xff]
  %v3439 = vld [vmem:[#allocation2 + $0x38] sm:$0xff]
  %v3440 = vmul.f32 %v1902, %v3436
  %v3441 = vmul.f32 %v1902, %v3437
  %v3442 = vmul.f32 %v1902, %v3438
  %v3443 = vmul.f32 %v1902, %v3439
  %v3444 = vadd.f32 %v3432, %v3440
  %v3445 = vadd.f32 %v3433, %v3441
  %v3446 = vadd.f32 %v3434, %v3442
  %v3447 = vadd.f32 %v3435, %v3443
  %v3448 = vld [vmem:[#allocation2 + $0x40] sm:$0xff]
  %v3449 = vld [vmem:[#allocation2 + $0x48] sm:$0xff]
  %v3450 = vld [vmem:[#allocation2 + $0x50] sm:$0xff]
  %v3451 = vld [vmem:[#allocation2 + $0x58] sm:$0xff]
  %v3452 = vmul.f32 %v1918, %v3448
  %v3453 = vmul.f32 %v1918, %v3449
  %v3454 = vmul.f32 %v1918, %v3450
  %v3455 = vmul.f32 %v1918, %v3451
  %v3456 = vadd.f32 %v3444, %v3452
  %v3457 = vadd.f32 %v3445, %v3453
  %v3458 = vadd.f32 %v3446, %v3454
  %v3459 = vadd.f32 %v3447, %v3455
  %v3460 = vld [vmem:[#allocation2 + $0x60] sm:$0xff]
  %v3461 = vld [vmem:[#allocation2 + $0x68] sm:$0xff]
  %v3462 = vld [vmem:[#allocation2 + $0x70] sm:$0xff]
  %v3463 = vld [vmem:[#allocation2 + $0x78] sm:$0xff]
  %v3464 = vmul.f32 %v1934, %v3460
  %v3465 = vmul.f32 %v1934, %v3461
  %v3466 = vmul.f32 %v1934, %v3462
  %v3467 = vmul.f32 %v1934, %v3463
  %v3468 = vadd.f32 %v3456, %v3464
  %v3469 = vadd.f32 %v3457, %v3465
  %v3470 = vadd.f32 %v3458, %v3466
  %v3471 = vadd.f32 %v3459, %v3467
  %v3472 = vld [vmem:[#allocation2 + $0x80] sm:$0xff]
  %v3473 = vld [vmem:[#allocation2 + $0x88] sm:$0xff]
  %v3474 = vld [vmem:[#allocation2 + $0x90] sm:$0xff]
  %v3475 = vld [vmem:[#allocation2 + $0x98] sm:$0xff]
  %v3476 = vmul.f32 %v1950, %v3472
  %v3477 = vmul.f32 %v1950, %v3473
  %v3478 = vmul.f32 %v1950, %v3474
  %v3479 = vmul.f32 %v1950, %v3475
  %v3480 = vadd.f32 %v3468, %v3476
  %v3481 = vadd.f32 %v3469, %v3477
  %v3482 = vadd.f32 %v3470, %v3478
  %v3483 = vadd.f32 %v3471, %v3479
  %v3484 = vld [vmem:[#allocation2 + $0xa0] sm:$0xff]
  %v3485 = vld [vmem:[#allocation2 + $0xa8] sm:$0xff]
  %v3486 = vld [vmem:[#allocation2 + $0xb0] sm:$0xff]
  %v3487 = vld [vmem:[#allocation2 + $0xb8] sm:$0xff]
  %v3488 = vmul.f32 %v1966, %v3484
  %v3489 = vmul.f32 %v1966, %v3485
  %v3490 = vmul.f32 %v1966, %v3486
  %v3491 = vmul.f32 %v1966, %v3487
  %v3492 = vadd.f32 %v3480, %v3488
  %v3493 = vadd.f32 %v3481, %v3489
  %v3494 = vadd.f32 %v3482, %v3490
  %v3495 = vadd.f32 %v3483, %v3491
  %v3496 = vld [vmem:[#allocation2 + $0xc0] sm:$0xff]
  %v3497 = vld [vmem:[#allocation2 + $0xc8] sm:$0xff]
  %v3498 = vld [vmem:[#allocation2 + $0xd0] sm:$0xff]
  %v3499 = vld [vmem:[#allocation2 + $0xd8] sm:$0xff]
  %v3500 = vmul.f32 %v1982, %v3496
  %v3501 = vmul.f32 %v1982, %v3497
  %v3502 = vmul.f32 %v1982, %v3498
  %v3503 = vmul.f32 %v1982, %v3499
  %v3504 = vadd.f32 %v3492, %v3500
  %v3505 = vadd.f32 %v3493, %v3501
  %v3506 = vadd.f32 %v3494, %v3502
  %v3507 = vadd.f32 %v3495, %v3503
  %v3508 = vld [vmem:[#allocation2 + $0xe0] sm:$0xff]
  %v3509 = vld [vmem:[#allocation2 + $0xe8] sm:$0xff]
  %v3510 = vld [vmem:[#allocation2 + $0xf0] sm:$0xff]
  %v3511 = vld [vmem:[#allocation2 + $0xf8] sm:$0xff]
  %v3512 = vmul.f32 %v1998, %v3508
  %v3513 = vmul.f32 %v1998, %v3509
  %v3514 = vmul.f32 %v1998, %v3510
  %v3515 = vmul.f32 %v1998, %v3511
  %v3516 = vadd.f32 %v3504, %v3512
  %v3517 = vadd.f32 %v3505, %v3513
  %v3518 = vadd.f32 %v3506, %v3514
  %v3519 = vadd.f32 %v3507, %v3515
  %v3520 = vadd.f32 %v3516, %v3279
  %v3521 = vadd.f32 %v3517, %v3284
  %v3522 = vadd.f32 %v3518, %v3289
  %v3523 = vadd.f32 %v3519, %v3294
  %vm3524 = vcmp.ge.f32.partialorder %v3520, 0.0
  %vm3525 = vcmp.ge.f32.partialorder %v3521, 0.0
  %vm3526 = vcmp.ge.f32.partialorder %v3522, 0.0
  %vm3527 = vcmp.ge.f32.partialorder %v3523, 0.0
  %v3528 = vmul.f32 %v3520, 0.01
  %v3529 = vmul.f32 %v3521, 0.01
  %v3530 = vmul.f32 %v3522, 0.01
  %v3531 = vmul.f32 %v3523, 0.01
  %v3532 = vsel %vm3524, %v3520, %v3528
  %v3533 = vsel %vm3525, %v3521, %v3529
  %v3534 = vsel %vm3526, %v3522, %v3530
  %v3535 = vsel %vm3527, %v3523, %v3531
  %3536 = vst [vmem:[#allocation3 + $0x40] sm:$0xff] %v3532
  %3537 = vst [vmem:[#allocation3 + $0x48] sm:$0xff] %v3533
  %3538 = vst [vmem:[#allocation3 + $0x50] sm:$0xff] %v3534
  %3539 = vst [vmem:[#allocation3 + $0x58] sm:$0xff] %v3535
  %v3540 = vld [vmem:[#allocation2] sm:$0xff]
  %v3541 = vld [vmem:[#allocation2 + $0x8] sm:$0xff]
  %v3542 = vld [vmem:[#allocation2 + $0x10] sm:$0xff]
  %v3543 = vld [vmem:[#allocation2 + $0x18] sm:$0xff]
  %v3544 = vmul.f32 %v2034, %v3540
  %v3545 = vmul.f32 %v2034, %v3541
  %v3546 = vmul.f32 %v2034, %v3542
  %v3547 = vmul.f32 %v2034, %v3543
  %v3548 = vld [vmem:[#allocation2 + $0x20] sm:$0xff]
  %v3549 = vld [vmem:[#allocation2 + $0x28] sm:$0xff]
  %v3550 = vld [vmem:[#allocation2 + $0x30] sm:$0xff]
  %v3551 = vld [vmem:[#allocation2 + $0x38] sm:$0xff]
  %v3552 = vmul.f32 %v2046, %v3548
  %v3553 = vmul.f32 %v2046, %v3549
  %v3554 = vmul.f32 %v2046, %v3550
  %v3555 = vmul.f32 %v2046, %v3551
  %v3556 = vadd.f32 %v3544, %v3552
  %v3557 = vadd.f32 %v3545, %v3553
  %v3558 = vadd.f32 %v3546, %v3554
  %v3559 = vadd.f32 %v3547, %v3555
  %v3560 = vld [vmem:[#allocation2 + $0x40] sm:$0xff]
  %v3561 = vld [vmem:[#allocation2 + $0x48] sm:$0xff]
  %v3562 = vld [vmem:[#allocation2 + $0x50] sm:$0xff]
  %v3563 = vld [vmem:[#allocation2 + $0x58] sm:$0xff]
  %v3564 = vmul.f32 %v2062, %v3560
  %v3565 = vmul.f32 %v2062, %v3561
  %v3566 = vmul.f32 %v2062, %v3562
  %v3567 = vmul.f32 %v2062, %v3563
  %v3568 = vadd.f32 %v3556, %v3564
  %v3569 = vadd.f32 %v3557, %v3565
  %v3570 = vadd.f32 %v3558, %v3566
  %v3571 = vadd.f32 %v3559, %v3567
  %v3572 = vld [vmem:[#allocation2 + $0x60] sm:$0xff]
  %v3573 = vld [vmem:[#allocation2 + $0x68] sm:$0xff]
  %v3574 = vld [vmem:[#allocation2 + $0x70] sm:$0xff]
  %v3575 = vld [vmem:[#allocation2 + $0x78] sm:$0xff]
  %v3576 = vmul.f32 %v2078, %v3572
  %v3577 = vmul.f32 %v2078, %v3573
  %v3578 = vmul.f32 %v2078, %v3574
  %v3579 = vmul.f32 %v2078, %v3575
  %v3580 = vadd.f32 %v3568, %v3576
  %v3581 = vadd.f32 %v3569, %v3577
  %v3582 = vadd.f32 %v3570, %v3578
  %v3583 = vadd.f32 %v3571, %v3579
  %v3584 = vld [vmem:[#allocation2 + $0x80] sm:$0xff]
  %v3585 = vld [vmem:[#allocation2 + $0x88] sm:$0xff]
  %v3586 = vld [vmem:[#allocation2 + $0x90] sm:$0xff]
  %v3587 = vld [vmem:[#allocation2 + $0x98] sm:$0xff]
  %v3588 = vmul.f32 %v2094, %v3584
  %v3589 = vmul.f32 %v2094, %v3585
  %v3590 = vmul.f32 %v2094, %v3586
  %v3591 = vmul.f32 %v2094, %v3587
  %v3592 = vadd.f32 %v3580, %v3588
  %v3593 = vadd.f32 %v3581, %v3589
  %v3594 = vadd.f32 %v3582, %v3590
  %v3595 = vadd.f32 %v3583, %v3591
  %v3596 = vld [vmem:[#allocation2 + $0xa0] sm:$0xff]
  %v3597 = vld [vmem:[#allocation2 + $0xa8] sm:$0xff]
  %v3598 = vld [vmem:[#allocation2 + $0xb0] sm:$0xff]
  %v3599 = vld [vmem:[#allocation2 + $0xb8] sm:$0xff]
  %v3600 = vmul.f32 %v2110, %v3596
  %v3601 = vmul.f32 %v2110, %v3597
  %v3602 = vmul.f32 %v2110, %v3598
  %v3603 = vmul.f32 %v2110, %v3599
  %v3604 = vadd.f32 %v3592, %v3600
  %v3605 = vadd.f32 %v3593, %v3601
  %v3606 = vadd.f32 %v3594, %v3602
  %v3607 = vadd.f32 %v3595, %v3603
  %v3608 = vld [vmem:[#allocation2 + $0xc0] sm:$0xff]
  %v3609 = vld [vmem:[#allocation2 + $0xc8] sm:$0xff]
  %v3610 = vld [vmem:[#allocation2 + $0xd0] sm:$0xff]
  %v3611 = vld [vmem:[#allocation2 + $0xd8] sm:$0xff]
  %v3612 = vmul.f32 %v2126, %v3608
  %v3613 = vmul.f32 %v2126, %v3609
  %v3614 = vmul.f32 %v2126, %v3610
  %v3615 = vmul.f32 %v2126, %v3611
  %v3616 = vadd.f32 %v3604, %v3612
  %v3617 = vadd.f32 %v3605, %v3613
  %v3618 = vadd.f32 %v3606, %v3614
  %v3619 = vadd.f32 %v3607, %v3615
  %v3620 = vld [vmem:[#allocation2 + $0xe0] sm:$0xff]
  %v3621 = vld [vmem:[#allocation2 + $0xe8] sm:$0xff]
  %v3622 = vld [vmem:[#allocation2 + $0xf0] sm:$0xff]
  %v3623 = vld [vmem:[#allocation2 + $0xf8] sm:$0xff]
  %v3624 = vmul.f32 %v2142, %v3620
  %v3625 = vmul.f32 %v2142, %v3621
  %v3626 = vmul.f32 %v2142, %v3622
  %v3627 = vmul.f32 %v2142, %v3623
  %v3628 = vadd.f32 %v3616, %v3624
  %v3629 = vadd.f32 %v3617, %v3625
  %v3630 = vadd.f32 %v3618, %v3626
  %v3631 = vadd.f32 %v3619, %v3627
  %v3632 = vadd.f32 %v3628, %v3279
  %v3633 = vadd.f32 %v3629, %v3284
  %v3634 = vadd.f32 %v3630, %v3289
  %v3635 = vadd.f32 %v3631, %v3294
  %vm3636 = vcmp.ge.f32.partialorder %v3632, 0.0
  %vm3637 = vcmp.ge.f32.partialorder %v3633, 0.0
  %vm3638 = vcmp.ge.f32.partialorder %v3634, 0.0
  %vm3639 = vcmp.ge.f32.partialorder %v3635, 0.0
  %v3640 = vmul.f32 %v3632, 0.01
  %v3641 = vmul.f32 %v3633, 0.01
  %v3642 = vmul.f32 %v3634, 0.01
  %v3643 = vmul.f32 %v3635, 0.01
  %v3644 = vsel %vm3636, %v3632, %v3640
  %v3645 = vsel %vm3637, %v3633, %v3641
  %v3646 = vsel %vm3638, %v3634, %v3642
  %v3647 = vsel %vm3639, %v3635, %v3643
  %3648 = vst [vmem:[#allocation3 + $0x60] sm:$0xff] %v3644
  %3649 = vst [vmem:[#allocation3 + $0x68] sm:$0xff] %v3645
  %3650 = vst [vmem:[#allocation3 + $0x70] sm:$0xff] %v3646
  %3651 = vst [vmem:[#allocation3 + $0x78] sm:$0xff] %v3647
  %v3652 = vld [vmem:[#allocation2] sm:$0xff]
  %v3653 = vld [vmem:[#allocation2 + $0x8] sm:$0xff]
  %v3654 = vld [vmem:[#allocation2 + $0x10] sm:$0xff]
  %v3655 = vld [vmem:[#allocation2 + $0x18] sm:$0xff]
  %v3656 = vmul.f32 %v2178, %v3652
  %v3657 = vmul.f32 %v2178, %v3653
  %v3658 = vmul.f32 %v2178, %v3654
  %v3659 = vmul.f32 %v2178, %v3655
  %v3660 = vld [vmem:[#allocation2 + $0x20] sm:$0xff]
  %v3661 = vld [vmem:[#allocation2 + $0x28] sm:$0xff]
  %v3662 = vld [vmem:[#allocation2 + $0x30] sm:$0xff]
  %v3663 = vld [vmem:[#allocation2 + $0x38] sm:$0xff]
  %v3664 = vmul.f32 %v2190, %v3660
  %v3665 = vmul.f32 %v2190, %v3661
  %v3666 = vmul.f32 %v2190, %v3662
  %v3667 = vmul.f32 %v2190, %v3663
  %v3668 = vadd.f32 %v3656, %v3664
  %v3669 = vadd.f32 %v3657, %v3665
  %v3670 = vadd.f32 %v3658, %v3666
  %v3671 = vadd.f32 %v3659, %v3667
  %v3672 = vld [vmem:[#allocation2 + $0x40] sm:$0xff]
  %v3673 = vld [vmem:[#allocation2 + $0x48] sm:$0xff]
  %v3674 = vld [vmem:[#allocation2 + $0x50] sm:$0xff]
  %v3675 = vld [vmem:[#allocation2 + $0x58] sm:$0xff]
  %v3676 = vmul.f32 %v2206, %v3672
  %v3677 = vmul.f32 %v2206, %v3673
  %v3678 = vmul.f32 %v2206, %v3674
  %v3679 = vmul.f32 %v2206, %v3675
  %v3680 = vadd.f32 %v3668, %v3676
  %v3681 = vadd.f32 %v3669, %v3677
  %v3682 = vadd.f32 %v3670, %v3678
  %v3683 = vadd.f32 %v3671, %v3679
  %v3684 = vld [vmem:[#allocation2 + $0x60] sm:$0xff]
  %v3685 = vld [vmem:[#allocation2 + $0x68] sm:$0xff]
  %v3686 = vld [vmem:[#allocation2 + $0x70] sm:$0xff]
  %v3687 = vld [vmem:[#allocation2 + $0x78] sm:$0xff]
  %v3688 = vmul.f32 %v2222, %v3684
  %v3689 = vmul.f32 %v2222, %v3685
  %v3690 = vmul.f32 %v2222, %v3686
  %v3691 = vmul.f32 %v2222, %v3687
  %v3692 = vadd.f32 %v3680, %v3688
  %v3693 = vadd.f32 %v3681, %v3689
  %v3694 = vadd.f32 %v3682, %v3690
  %v3695 = vadd.f32 %v3683, %v3691
  %v3696 = vld [vmem:[#allocation2 + $0x80] sm:$0xff]
  %v3697 = vld [vmem:[#allocation2 + $0x88] sm:$0xff]
  %v3698 = vld [vmem:[#allocation2 + $0x90] sm:$0xff]
  %v3699 = vld [vmem:[#allocation2 + $0x98] sm:$0xff]
  %v3700 = vmul.f32 %v2238, %v3696
  %v3701 = vmul.f32 %v2238, %v3697
  %v3702 = vmul.f32 %v2238, %v3698
  %v3703 = vmul.f32 %v2238, %v3699
  %v3704 = vadd.f32 %v3692, %v3700
  %v3705 = vadd.f32 %v3693, %v3701
  %v3706 = vadd.f32 %v3694, %v3702
  %v3707 = vadd.f32 %v3695, %v3703
  %v3708 = vld [vmem:[#allocation2 + $0xa0] sm:$0xff]
  %v3709 = vld [vmem:[#allocation2 + $0xa8] sm:$0xff]
  %v3710 = vld [vmem:[#allocation2 + $0xb0] sm:$0xff]
  %v3711 = vld [vmem:[#allocation2 + $0xb8] sm:$0xff]
  %v3712 = vmul.f32 %v2254, %v3708
  %v3713 = vmul.f32 %v2254, %v3709
  %v3714 = vmul.f32 %v2254, %v3710
  %v3715 = vmul.f32 %v2254, %v3711
  %v3716 = vadd.f32 %v3704, %v3712
  %v3717 = vadd.f32 %v3705, %v3713
  %v3718 = vadd.f32 %v3706, %v3714
  %v3719 = vadd.f32 %v3707, %v3715
  %v3720 = vld [vmem:[#allocation2 + $0xc0] sm:$0xff]
  %v3721 = vld [vmem:[#allocation2 + $0xc8] sm:$0xff]
  %v3722 = vld [vmem:[#allocation2 + $0xd0] sm:$0xff]
  %v3723 = vld [vmem:[#allocation2 + $0xd8] sm:$0xff]
  %v3724 = vmul.f32 %v2270, %v3720
  %v3725 = vmul.f32 %v2270, %v3721
  %v3726 = vmul.f32 %v2270, %v3722
  %v3727 = vmul.f32 %v2270, %v3723
  %v3728 = vadd.f32 %v3716, %v3724
  %v3729 = vadd.f32 %v3717, %v3725
  %v3730 = vadd.f32 %v3718, %v3726
  %v3731 = vadd.f32 %v3719, %v3727
  %v3732 = vld [vmem:[#allocation2 + $0xe0] sm:$0xff]
  %v3733 = vld [vmem:[#allocation2 + $0xe8] sm:$0xff]
  %v3734 = vld [vmem:[#allocation2 + $0xf0] sm:$0xff]
  %v3735 = vld [vmem:[#allocation2 + $0xf8] sm:$0xff]
  %v3736 = vmul.f32 %v2286, %v3732
  %v3737 = vmul.f32 %v2286, %v3733
  %v3738 = vmul.f32 %v2286, %v3734
  %v3739 = vmul.f32 %v2286, %v3735
  %v3740 = vadd.f32 %v3728, %v3736
  %v3741 = vadd.f32 %v3729, %v3737
  %v3742 = vadd.f32 %v3730, %v3738
  %v3743 = vadd.f32 %v3731, %v3739
  %v3744 = vadd.f32 %v3740, %v3279
  %v3745 = vadd.f32 %v3741, %v3284
  %v3746 = vadd.f32 %v3742, %v3289
  %v3747 = vadd.f32 %v3743, %v3294
  %vm3748 = vcmp.ge.f32.partialorder %v3744, 0.0
  %vm3749 = vcmp.ge.f32.partialorder %v3745, 0.0
  %vm3750 = vcmp.ge.f32.partialorder %v3746, 0.0
  %vm3751 = vcmp.ge.f32.partialorder %v3747, 0.0
  %v3752 = vmul.f32 %v3744, 0.01
  %v3753 = vmul.f32 %v3745, 0.01
  %v3754 = vmul.f32 %v3746, 0.01
  %v3755 = vmul.f32 %v3747, 0.01
  %v3756 = vsel %vm3748, %v3744, %v3752
  %v3757 = vsel %vm3749, %v3745, %v3753
  %v3758 = vsel %vm3750, %v3746, %v3754
  %v3759 = vsel %vm3751, %v3747, %v3755
  %3760 = vst [vmem:[#allocation3 + $0x80] sm:$0xff] %v3756
  %3761 = vst [vmem:[#allocation3 + $0x88] sm:$0xff] %v3757
  %3762 = vst [vmem:[#allocation3 + $0x90] sm:$0xff] %v3758
  %3763 = vst [vmem:[#allocation3 + $0x98] sm:$0xff] %v3759
  %v3764 = vld [vmem:[#allocation2] sm:$0xff]
  %v3765 = vld [vmem:[#allocation2 + $0x8] sm:$0xff]
  %v3766 = vld [vmem:[#allocation2 + $0x10] sm:$0xff]
  %v3767 = vld [vmem:[#allocation2 + $0x18] sm:$0xff]
  %v3768 = vmul.f32 %v2322, %v3764
  %v3769 = vmul.f32 %v2322, %v3765
  %v3770 = vmul.f32 %v2322, %v3766
  %v3771 = vmul.f32 %v2322, %v3767
  %v3772 = vld [vmem:[#allocation2 + $0x20] sm:$0xff]
  %v3773 = vld [vmem:[#allocation2 + $0x28] sm:$0xff]
  %v3774 = vld [vmem:[#allocation2 + $0x30] sm:$0xff]
  %v3775 = vld [vmem:[#allocation2 + $0x38] sm:$0xff]
  %v3776 = vmul.f32 %v2334, %v3772
  %v3777 = vmul.f32 %v2334, %v3773
  %v3778 = vmul.f32 %v2334, %v3774
  %v3779 = vmul.f32 %v2334, %v3775
  %v3780 = vadd.f32 %v3768, %v3776
  %v3781 = vadd.f32 %v3769, %v3777
  %v3782 = vadd.f32 %v3770, %v3778
  %v3783 = vadd.f32 %v3771, %v3779
  %v3784 = vld [vmem:[#allocation2 + $0x40] sm:$0xff]
  %v3785 = vld [vmem:[#allocation2 + $0x48] sm:$0xff]
  %v3786 = vld [vmem:[#allocation2 + $0x50] sm:$0xff]
  %v3787 = vld [vmem:[#allocation2 + $0x58] sm:$0xff]
  %v3788 = vmul.f32 %v2350, %v3784
  %v3789 = vmul.f32 %v2350, %v3785
  %v3790 = vmul.f32 %v2350, %v3786
  %v3791 = vmul.f32 %v2350, %v3787
  %v3792 = vadd.f32 %v3780, %v3788
  %v3793 = vadd.f32 %v3781, %v3789
  %v3794 = vadd.f32 %v3782, %v3790
  %v3795 = vadd.f32 %v3783, %v3791
  %v3796 = vld [vmem:[#allocation2 + $0x60] sm:$0xff]
  %v3797 = vld [vmem:[#allocation2 + $0x68] sm:$0xff]
  %v3798 = vld [vmem:[#allocation2 + $0x70] sm:$0xff]
  %v3799 = vld [vmem:[#allocation2 + $0x78] sm:$0xff]
  %v3800 = vmul.f32 %v2366, %v3796
  %v3801 = vmul.f32 %v2366, %v3797
  %v3802 = vmul.f32 %v2366, %v3798
  %v3803 = vmul.f32 %v2366, %v3799
  %v3804 = vadd.f32 %v3792, %v3800
  %v3805 = vadd.f32 %v3793, %v3801
  %v3806 = vadd.f32 %v3794, %v3802
  %v3807 = vadd.f32 %v3795, %v3803
  %v3808 = vld [vmem:[#allocation2 + $0x80] sm:$0xff]
  %v3809 = vld [vmem:[#allocation2 + $0x88] sm:$0xff]
  %v3810 = vld [vmem:[#allocation2 + $0x90] sm:$0xff]
  %v3811 = vld [vmem:[#allocation2 + $0x98] sm:$0xff]
  %v3812 = vmul.f32 %v2382, %v3808
  %v3813 = vmul.f32 %v2382, %v3809
  %v3814 = vmul.f32 %v2382, %v3810
  %v3815 = vmul.f32 %v2382, %v3811
  %v3816 = vadd.f32 %v3804, %v3812
  %v3817 = vadd.f32 %v3805, %v3813
  %v3818 = vadd.f32 %v3806, %v3814
  %v3819 = vadd.f32 %v3807, %v3815
  %v3820 = vld [vmem:[#allocation2 + $0xa0] sm:$0xff]
  %v3821 = vld [vmem:[#allocation2 + $0xa8] sm:$0xff]
  %v3822 = vld [vmem:[#allocation2 + $0xb0] sm:$0xff]
  %v3823 = vld [vmem:[#allocation2 + $0xb8] sm:$0xff]
  %v3824 = vmul.f32 %v2398, %v3820
  %v3825 = vmul.f32 %v2398, %v3821
  %v3826 = vmul.f32 %v2398, %v3822
  %v3827 = vmul.f32 %v2398, %v3823
  %v3828 = vadd.f32 %v3816, %v3824
  %v3829 = vadd.f32 %v3817, %v3825
  %v3830 = vadd.f32 %v3818, %v3826
  %v3831 = vadd.f32 %v3819, %v3827
  %v3832 = vld [vmem:[#allocation2 + $0xc0] sm:$0xff]
  %v3833 = vld [vmem:[#allocation2 + $0xc8] sm:$0xff]
  %v3834 = vld [vmem:[#allocation2 + $0xd0] sm:$0xff]
  %v3835 = vld [vmem:[#allocation2 + $0xd8] sm:$0xff]
  %v3836 = vmul.f32 %v2414, %v3832
  %v3837 = vmul.f32 %v2414, %v3833
  %v3838 = vmul.f32 %v2414, %v3834
  %v3839 = vmul.f32 %v2414, %v3835
  %v3840 = vadd.f32 %v3828, %v3836
  %v3841 = vadd.f32 %v3829, %v3837
  %v3842 = vadd.f32 %v3830, %v3838
  %v3843 = vadd.f32 %v3831, %v3839
  %v3844 = vld [vmem:[#allocation2 + $0xe0] sm:$0xff]
  %v3845 = vld [vmem:[#allocation2 + $0xe8] sm:$0xff]
  %v3846 = vld [vmem:[#allocation2 + $0xf0] sm:$0xff]
  %v3847 = vld [vmem:[#allocation2 + $0xf8] sm:$0xff]
  %v3848 = vmul.f32 %v2430, %v3844
  %v3849 = vmul.f32 %v2430, %v3845
  %v3850 = vmul.f32 %v2430, %v3846
  %v3851 = vmul.f32 %v2430, %v3847
  %v3852 = vadd.f32 %v3840, %v3848
  %v3853 = vadd.f32 %v3841, %v3849
  %v3854 = vadd.f32 %v3842, %v3850
  %v3855 = vadd.f32 %v3843, %v3851
  %v3856 = vadd.f32 %v3852, %v3279
  %v3857 = vadd.f32 %v3853, %v3284
  %v3858 = vadd.f32 %v3854, %v3289
  %v3859 = vadd.f32 %v3855, %v3294
  %vm3860 = vcmp.ge.f32.partialorder %v3856, 0.0
  %vm3861 = vcmp.ge.f32.partialorder %v3857, 0.0
  %vm3862 = vcmp.ge.f32.partialorder %v3858, 0.0
  %vm3863 = vcmp.ge.f32.partialorder %v3859, 0.0
  %v3864 = vmul.f32 %v3856, 0.01
  %v3865 = vmul.f32 %v3857, 0.01
  %v3866 = vmul.f32 %v3858, 0.01
  %v3867 = vmul.f32 %v3859, 0.01
  %v3868 = vsel %vm3860, %v3856, %v3864
  %v3869 = vsel %vm3861, %v3857, %v3865
  %v3870 = vsel %vm3862, %v3858, %v3866
  %v3871 = vsel %vm3863, %v3859, %v3867
  %3872 = vst [vmem:[#allocation3 + $0xa0] sm:$0xff] %v3868
  %3873 = vst [vmem:[#allocation3 + $0xa8] sm:$0xff] %v3869
  %3874 = vst [vmem:[#allocation3 + $0xb0] sm:$0xff] %v3870
  %3875 = vst [vmem:[#allocation3 + $0xb8] sm:$0xff] %v3871
  %v3876 = vld [vmem:[#allocation2] sm:$0xff]
  %v3877 = vld [vmem:[#allocation2 + $0x8] sm:$0xff]
  %v3878 = vld [vmem:[#allocation2 + $0x10] sm:$0xff]
  %v3879 = vld [vmem:[#allocation2 + $0x18] sm:$0xff]
  %v3880 = vmul.f32 %v2466, %v3876
  %v3881 = vmul.f32 %v2466, %v3877
  %v3882 = vmul.f32 %v2466, %v3878
  %v3883 = vmul.f32 %v2466, %v3879
  %v3884 = vld [vmem:[#allocation2 + $0x20] sm:$0xff]
  %v3885 = vld [vmem:[#allocation2 + $0x28] sm:$0xff]
  %v3886 = vld [vmem:[#allocation2 + $0x30] sm:$0xff]
  %v3887 = vld [vmem:[#allocation2 + $0x38] sm:$0xff]
  %v3888 = vmul.f32 %v2478, %v3884
  %v3889 = vmul.f32 %v2478, %v3885
  %v3890 = vmul.f32 %v2478, %v3886
  %v3891 = vmul.f32 %v2478, %v3887
  %v3892 = vadd.f32 %v3880, %v3888
  %v3893 = vadd.f32 %v3881, %v3889
  %v3894 = vadd.f32 %v3882, %v3890
  %v3895 = vadd.f32 %v3883, %v3891
  %v3896 = vld [vmem:[#allocation2 + $0x40] sm:$0xff]
  %v3897 = vld [vmem:[#allocation2 + $0x48] sm:$0xff]
  %v3898 = vld [vmem:[#allocation2 + $0x50] sm:$0xff]
  %v3899 = vld [vmem:[#allocation2 + $0x58] sm:$0xff]
  %v3900 = vmul.f32 %v2494, %v3896
  %v3901 = vmul.f32 %v2494, %v3897
  %v3902 = vmul.f32 %v2494, %v3898
  %v3903 = vmul.f32 %v2494, %v3899
  %v3904 = vadd.f32 %v3892, %v3900
  %v3905 = vadd.f32 %v3893, %v3901
  %v3906 = vadd.f32 %v3894, %v3902
  %v3907 = vadd.f32 %v3895, %v3903
  %v3908 = vld [vmem:[#allocation2 + $0x60] sm:$0xff]
  %v3909 = vld [vmem:[#allocation2 + $0x68] sm:$0xff]
  %v3910 = vld [vmem:[#allocation2 + $0x70] sm:$0xff]
  %v3911 = vld [vmem:[#allocation2 + $0x78] sm:$0xff]
  %v3912 = vmul.f32 %v2510, %v3908
  %v3913 = vmul.f32 %v2510, %v3909
  %v3914 = vmul.f32 %v2510, %v3910
  %v3915 = vmul.f32 %v2510, %v3911
  %v3916 = vadd.f32 %v3904, %v3912
  %v3917 = vadd.f32 %v3905, %v3913
  %v3918 = vadd.f32 %v3906, %v3914
  %v3919 = vadd.f32 %v3907, %v3915
  %v3920 = vld [vmem:[#allocation2 + $0x80] sm:$0xff]
  %v3921 = vld [vmem:[#allocation2 + $0x88] sm:$0xff]
  %v3922 = vld [vmem:[#allocation2 + $0x90] sm:$0xff]
  %v3923 = vld [vmem:[#allocation2 + $0x98] sm:$0xff]
  %v3924 = vmul.f32 %v2526, %v3920
  %v3925 = vmul.f32 %v2526, %v3921
  %v3926 = vmul.f32 %v2526, %v3922
  %v3927 = vmul.f32 %v2526, %v3923
  %v3928 = vadd.f32 %v3916, %v3924
  %v3929 = vadd.f32 %v3917, %v3925
  %v3930 = vadd.f32 %v3918, %v3926
  %v3931 = vadd.f32 %v3919, %v3927
  %v3932 = vld [vmem:[#allocation2 + $0xa0] sm:$0xff]
  %v3933 = vld [vmem:[#allocation2 + $0xa8] sm:$0xff]
  %v3934 = vld [vmem:[#allocation2 + $0xb0] sm:$0xff]
  %v3935 = vld [vmem:[#allocation2 + $0xb8] sm:$0xff]
  %v3936 = vmul.f32 %v2542, %v3932
  %v3937 = vmul.f32 %v2542, %v3933
  %v3938 = vmul.f32 %v2542, %v3934
  %v3939 = vmul.f32 %v2542, %v3935
  %v3940 = vadd.f32 %v3928, %v3936
  %v3941 = vadd.f32 %v3929, %v3937
  %v3942 = vadd.f32 %v3930, %v3938
  %v3943 = vadd.f32 %v3931, %v3939
  %v3944 = vld [vmem:[#allocation2 + $0xc0] sm:$0xff]
  %v3945 = vld [vmem:[#allocation2 + $0xc8] sm:$0xff]
  %v3946 = vld [vmem:[#allocation2 + $0xd0] sm:$0xff]
  %v3947 = vld [vmem:[#allocation2 + $0xd8] sm:$0xff]
  %v3948 = vmul.f32 %v2558, %v3944
  %v3949 = vmul.f32 %v2558, %v3945
  %v3950 = vmul.f32 %v2558, %v3946
  %v3951 = vmul.f32 %v2558, %v3947
  %v3952 = vadd.f32 %v3940, %v3948
  %v3953 = vadd.f32 %v3941, %v3949
  %v3954 = vadd.f32 %v3942, %v3950
  %v3955 = vadd.f32 %v3943, %v3951
  %v3956 = vld [vmem:[#allocation2 + $0xe0] sm:$0xff]
  %v3957 = vld [vmem:[#allocation2 + $0xe8] sm:$0xff]
  %v3958 = vld [vmem:[#allocation2 + $0xf0] sm:$0xff]
  %v3959 = vld [vmem:[#allocation2 + $0xf8] sm:$0xff]
  %v3960 = vmul.f32 %v2574, %v3956
  %v3961 = vmul.f32 %v2574, %v3957
  %v3962 = vmul.f32 %v2574, %v3958
  %v3963 = vmul.f32 %v2574, %v3959
  %v3964 = vadd.f32 %v3952, %v3960
  %v3965 = vadd.f32 %v3953, %v3961
  %v3966 = vadd.f32 %v3954, %v3962
  %v3967 = vadd.f32 %v3955, %v3963
  %v3968 = vadd.f32 %v3964, %v3279
  %v3969 = vadd.f32 %v3965, %v3284
  %v3970 = vadd.f32 %v3966, %v3289
  %v3971 = vadd.f32 %v3967, %v3294
  %vm3972 = vcmp.ge.f32.partialorder %v3968, 0.0
  %vm3973 = vcmp.ge.f32.partialorder %v3969, 0.0
  %vm3974 = vcmp.ge.f32.partialorder %v3970, 0.0
  %vm3975 = vcmp.ge.f32.partialorder %v3971, 0.0
  %v3976 = vmul.f32 %v3968, 0.01
  %v3977 = vmul.f32 %v3969, 0.01
  %v3978 = vmul.f32 %v3970, 0.01
  %v3979 = vmul.f32 %v3971, 0.01
  %v3980 = vsel %vm3972, %v3968, %v3976
  %v3981 = vsel %vm3973, %v3969, %v3977
  %v3982 = vsel %vm3974, %v3970, %v3978
  %v3983 = vsel %vm3975, %v3971, %v3979
  %3984 = vst [vmem:[#allocation3 + $0xc0] sm:$0xff] %v3980
  %3985 = vst [vmem:[#allocation3 + $0xc8] sm:$0xff] %v3981
  %3986 = vst [vmem:[#allocation3 + $0xd0] sm:$0xff] %v3982
  %3987 = vst [vmem:[#allocation3 + $0xd8] sm:$0xff] %v3983
  %v3988 = vld [vmem:[#allocation2] sm:$0xff]
  %v3989 = vld [vmem:[#allocation2 + $0x8] sm:$0xff]
  %v3990 = vld [vmem:[#allocation2 + $0x10] sm:$0xff]
  %v3991 = vld [vmem:[#allocation2 + $0x18] sm:$0xff]
  %v3992 = vmul.f32 %v2610, %v3988
  %v3993 = vmul.f32 %v2610, %v3989
  %v3994 = vmul.f32 %v2610, %v3990
  %v3995 = vmul.f32 %v2610, %v3991
  %v3996 = vld [vmem:[#allocation2 + $0x20] sm:$0xff]
  %v3997 = vld [vmem:[#allocation2 + $0x28] sm:$0xff]
  %v3998 = vld [vmem:[#allocation2 + $0x30] sm:$0xff]
  %v3999 = vld [vmem:[#allocation2 + $0x38] sm:$0xff]
  %v4000 = vmul.f32 %v2622, %v3996
  %v4001 = vmul.f32 %v2622, %v3997
  %v4002 = vmul.f32 %v2622, %v3998
  %v4003 = vmul.f32 %v2622, %v3999
  %v4004 = vadd.f32 %v3992, %v4000
  %v4005 = vadd.f32 %v3993, %v4001
  %v4006 = vadd.f32 %v3994, %v4002
  %v4007 = vadd.f32 %v3995, %v4003
  %v4008 = vld [vmem:[#allocation2 + $0x40] sm:$0xff]
  %v4009 = vld [vmem:[#allocation2 + $0x48] sm:$0xff]
  %v4010 = vld [vmem:[#allocation2 + $0x50] sm:$0xff]
  %v4011 = vld [vmem:[#allocation2 + $0x58] sm:$0xff]
  %v4012 = vmul.f32 %v2638, %v4008
  %v4013 = vmul.f32 %v2638, %v4009
  %v4014 = vmul.f32 %v2638, %v4010
  %v4015 = vmul.f32 %v2638, %v4011
  %v4016 = vadd.f32 %v4004, %v4012
  %v4017 = vadd.f32 %v4005, %v4013
  %v4018 = vadd.f32 %v4006, %v4014
  %v4019 = vadd.f32 %v4007, %v4015
  %v4020 = vld [vmem:[#allocation2 + $0x60] sm:$0xff]
  %v4021 = vld [vmem:[#allocation2 + $0x68] sm:$0xff]
  %v4022 = vld [vmem:[#allocation2 + $0x70] sm:$0xff]
  %v4023 = vld [vmem:[#allocation2 + $0x78] sm:$0xff]
  %v4024 = vmul.f32 %v2654, %v4020
  %v4025 = vmul.f32 %v2654, %v4021
  %v4026 = vmul.f32 %v2654, %v4022
  %v4027 = vmul.f32 %v2654, %v4023
  %v4028 = vadd.f32 %v4016, %v4024
  %v4029 = vadd.f32 %v4017, %v4025
  %v4030 = vadd.f32 %v4018, %v4026
  %v4031 = vadd.f32 %v4019, %v4027
  %v4032 = vld [vmem:[#allocation2 + $0x80] sm:$0xff]
  %v4033 = vld [vmem:[#allocation2 + $0x88] sm:$0xff]
  %v4034 = vld [vmem:[#allocation2 + $0x90] sm:$0xff]
  %v4035 = vld [vmem:[#allocation2 + $0x98] sm:$0xff]
  %v4036 = vmul.f32 %v2670, %v4032
  %v4037 = vmul.f32 %v2670, %v4033
  %v4038 = vmul.f32 %v2670, %v4034
  %v4039 = vmul.f32 %v2670, %v4035
  %v4040 = vadd.f32 %v4028, %v4036
  %v4041 = vadd.f32 %v4029, %v4037
  %v4042 = vadd.f32 %v4030, %v4038
  %v4043 = vadd.f32 %v4031, %v4039
  %v4044 = vld [vmem:[#allocation2 + $0xa0] sm:$0xff]
  %v4045 = vld [vmem:[#allocation2 + $0xa8] sm:$0xff]
  %v4046 = vld [vmem:[#allocation2 + $0xb0] sm:$0xff]
  %v4047 = vld [vmem:[#allocation2 + $0xb8] sm:$0xff]
  %v4048 = vmul.f32 %v2686, %v4044
  %v4049 = vmul.f32 %v2686, %v4045
  %v4050 = vmul.f32 %v2686, %v4046
  %v4051 = vmul.f32 %v2686, %v4047
  %v4052 = vadd.f32 %v4040, %v4048
  %v4053 = vadd.f32 %v4041, %v4049
  %v4054 = vadd.f32 %v4042, %v4050
  %v4055 = vadd.f32 %v4043, %v4051
  %v4056 = vld [vmem:[#allocation2 + $0xc0] sm:$0xff]
  %v4057 = vld [vmem:[#allocation2 + $0xc8] sm:$0xff]
  %v4058 = vld [vmem:[#allocation2 + $0xd0] sm:$0xff]
  %v4059 = vld [vmem:[#allocation2 + $0xd8] sm:$0xff]
  %v4060 = vmul.f32 %v2702, %v4056
  %v4061 = vmul.f32 %v2702, %v4057
  %v4062 = vmul.f32 %v2702, %v4058
  %v4063 = vmul.f32 %v2702, %v4059
  %v4064 = vadd.f32 %v4052, %v4060
  %v4065 = vadd.f32 %v4053, %v4061
  %v4066 = vadd.f32 %v4054, %v4062
  %v4067 = vadd.f32 %v4055, %v4063
  %v4068 = vld [vmem:[#allocation2 + $0xe0] sm:$0xff]
  %v4069 = vld [vmem:[#allocation2 + $0xe8] sm:$0xff]
  %v4070 = vld [vmem:[#allocation2 + $0xf0] sm:$0xff]
  %v4071 = vld [vmem:[#allocation2 + $0xf8] sm:$0xff]
  %v4072 = vmul.f32 %v2718, %v4068
  %v4073 = vmul.f32 %v2718, %v4069
  %v4074 = vmul.f32 %v2718, %v4070
  %v4075 = vmul.f32 %v2718, %v4071
  %v4076 = vadd.f32 %v4064, %v4072
  %v4077 = vadd.f32 %v4065, %v4073
  %v4078 = vadd.f32 %v4066, %v4074
  %v4079 = vadd.f32 %v4067, %v4075
  %v4080 = vadd.f32 %v4076, %v3279
  %v4081 = vadd.f32 %v4077, %v3284
  %v4082 = vadd.f32 %v4078, %v3289
  %v4083 = vadd.f32 %v4079, %v3294
  %vm4084 = vcmp.ge.f32.partialorder %v4080, 0.0
  %vm4085 = vcmp.ge.f32.partialorder %v4081, 0.0
  %vm4086 = vcmp.ge.f32.partialorder %v4082, 0.0
  %vm4087 = vcmp.ge.f32.partialorder %v4083, 0.0
  %v4088 = vmul.f32 %v4080, 0.01
  %v4089 = vmul.f32 %v4081, 0.01
  %v4090 = vmul.f32 %v4082, 0.01
  %v4091 = vmul.f32 %v4083, 0.01
  %v4092 = vsel %vm4084, %v4080, %v4088
  %v4093 = vsel %vm4085, %v4081, %v4089
  %v4094 = vsel %vm4086, %v4082, %v4090
  %v4095 = vsel %vm4087, %v4083, %v4091
  %4096 = vst [vmem:[#allocation3 + $0xe0] sm:$0xff] %v4092
  %4097 = vst [vmem:[#allocation3 + $0xe8] sm:$0xff] %v4093
  %4098 = vst [vmem:[#allocation3 + $0xf0] sm:$0xff] %v4094
  %4099 = vst [vmem:[#allocation3 + $0xf8] sm:$0xff] %v4095
  %v4100 = vld [vmem:[#allocation3] sm:$0xff]
  %v4101 = vld [vmem:[#allocation3 + $0x8] sm:$0xff]
  %v4102 = vld [vmem:[#allocation3 + $0x10] sm:$0xff]
  %v4103 = vld [vmem:[#allocation3 + $0x18] sm:$0xff]
  %v4104 = vld [vmem:[#allocation3 + $0x20] sm:$0xff]
  %v4105 = vld [vmem:[#allocation3 + $0x28] sm:$0xff]
  %v4106 = vld [vmem:[#allocation3 + $0x30] sm:$0xff]
  %v4107 = vld [vmem:[#allocation3 + $0x38] sm:$0xff]
  %v4108 = vadd.f32 %v4100, %v4104
  %v4109 = vadd.f32 %v4101, %v4105
  %v4110 = vadd.f32 %v4102, %v4106
  %v4111 = vadd.f32 %v4103, %v4107
  %v4112 = vld [vmem:[#allocation3 + $0x40] sm:$0xff]
  %v4113 = vld [vmem:[#allocation3 + $0x48] sm:$0xff]
  %v4114 = vld [vmem:[#allocation3 + $0x50] sm:$0xff]
  %v4115 = vld [vmem:[#allocation3 + $0x58] sm:$0xff]
  %v4116 = vadd.f32 %v4108, %v4112
  %v4117 = vadd.f32 %v4109, %v4113
  %v4118 = vadd.f32 %v4110, %v4114
  %v4119 = vadd.f32 %v4111, %v4115
  %v4120 = vld [vmem:[#allocation3 + $0x60] sm:$0xff]
  %v4121 = vld [vmem:[#allocation3 + $0x68] sm:$0xff]
  %v4122 = vld [vmem:[#allocation3 + $0x70] sm:$0xff]
  %v4123 = vld [vmem:[#allocation3 + $0x78] sm:$0xff]
  %v4124 = vadd.f32 %v4116, %v4120
  %v4125 = vadd.f32 %v4117, %v4121
  %v4126 = vadd.f32 %v4118, %v4122
  %v4127 = vadd.f32 %v4119, %v4123
  %v4128 = vld [vmem:[#allocation3 + $0x80] sm:$0xff]
  %v4129 = vld [vmem:[#allocation3 + $0x88] sm:$0xff]
  %v4130 = vld [vmem:[#allocation3 + $0x90] sm:$0xff]
  %v4131 = vld [vmem:[#allocation3 + $0x98] sm:$0xff]
  %v4132 = vadd.f32 %v4124, %v4128
  %v4133 = vadd.f32 %v4125, %v4129
  %v4134 = vadd.f32 %v4126, %v4130
  %v4135 = vadd.f32 %v4127, %v4131
  %v4136 = vld [vmem:[#allocation3 + $0xa0] sm:$0xff]
  %v4137 = vld [vmem:[#allocation3 + $0xa8] sm:$0xff]
  %v4138 = vld [vmem:[#allocation3 + $0xb0] sm:$0xff]
  %v4139 = vld [vmem:[#allocation3 + $0xb8] sm:$0xff]
  %v4140 = vadd.f32 %v4132, %v4136
  %v4141 = vadd.f32 %v4133, %v4137
  %v4142 = vadd.f32 %v4134, %v4138
  %v4143 = vadd.f32 %v4135, %v4139
  %v4144 = vld [vmem:[#allocation3 + $0xc0] sm:$0xff]
  %v4145 = vld [vmem:[#allocation3 + $0xc8] sm:$0xff]
  %v4146 = vld [vmem:[#allocation3 + $0xd0] sm:$0xff]
  %v4147 = vld [vmem:[#allocation3 + $0xd8] sm:$0xff]
  %v4148 = vadd.f32 %v4140, %v4144
  %v4149 = vadd.f32 %v4141, %v4145
  %v4150 = vadd.f32 %v4142, %v4146
  %v4151 = vadd.f32 %v4143, %v4147
  %v4152 = vld [vmem:[#allocation3 + $0xe0] sm:$0xff]
  %v4153 = vld [vmem:[#allocation3 + $0xe8] sm:$0xff]
  %v4154 = vld [vmem:[#allocation3 + $0xf0] sm:$0xff]
  %v4155 = vld [vmem:[#allocation3 + $0xf8] sm:$0xff]
  %v4156 = vadd.f32 %v4148, %v4152
  %v4157 = vadd.f32 %v4149, %v4153
  %v4158 = vadd.f32 %v4150, %v4154
  %v4159 = vadd.f32 %v4151, %v4155
  %v4160 = vmul.f32 %v4156, 0.125
  %v4161 = vmul.f32 %v4157, 0.125
  %v4162 = vmul.f32 %v4158, 0.125
  %v4163 = vmul.f32 %v4159, 0.125
  %v4164 = vld [vmem:[%s11] sm:$0xff]
  %v4165 = vld [vmem:[%s11 + $0x8] sm:$0xff]
  %v4166 = vld [vmem:[%s12] sm:$0xff]
  %v4167 = vld [vmem:[%s12 + $0x8] sm:$0xff]
  %4169 = vset.pattern.permute.xlu0 0
  %4170 = vperm.xlu0 %4169, %v4166
  %v4171 = vpop.permute.xlu0 %4170
  %4174 = vset.pattern.permute.xlu0 0
  %4175 = vperm.xlu0 %4174, %v4167
  %v4176 = vpop.permute.xlu0 %4175
  %vm4178 = vcmask 261120
  %v4180 = vsel %vm4178, %v4164, 0
  %v4183 = vsel %vm4178, %v4165, 0
  %4185 = vmatprep.subr.mxu0 0.0
  %4186 = vmatpush1.msra.mxu0 %v4160
  %4187 = vmatprep.subr.mxu0 0.0
  %4188 = vmatpush1.msra.mxu0 %v4161
  %4189 = vmatprep.subr.mxu0 0.0
  %4190 = vmatpush1.msra.mxu0 %v4162
  %4191 = vmatprep.subr.mxu0 0.0
  %4192 = vmatpush1.msra.mxu0 %v4163
  %4193 = vmatprep.subr.mxu0 0.0
  %4194 = vmatpush1.msra.mxu0 0.0
  %4195 = vmatprep.subr.mxu0 0.0
  %4196 = vmatpush1.msra.mxu0 0.0
  %4197 = vmatprep.subr.mxu0 0.0
  %4198 = vmatpush1.msra.mxu0 0.0
  %4199 = vmatprep.subr.mxu0 0.0
  %4200 = vmatpush1.msra.mxu0 0.0
  %4201 = vmatprep.subr.mxu0 0.0
  %4202 = vmatpush1.msra.mxu0 0.0
  %4203 = vmatprep.subr.mxu0 0.0
  %4204 = vmatpush1.msra.mxu0 0.0
  %4205 = vmatprep.subr.mxu0 0.0
  %4206 = vmatpush1.msra.mxu0 0.0
  %4207 = vmatprep.subr.mxu0 0.0
  %4208 = vmatpush1.msra.mxu0 0.0
  %4209 = vmatprep.subr.mxu0 0.0
  %4210 = vmatpush1.msra.mxu0 0.0
  %4211 = vmatprep.subr.mxu0 0.0
  %4212 = vmatpush1.msra.mxu0 0.0
  %4213 = vmatprep.subr.mxu0 0.0
  %4214 = vmatpush1.msra.mxu0 0.0
  %4215 = vmatprep.subr.mxu0 0.0
  %4216 = vmatpush1.msra.mxu0 0.0
  %4217 = vmatprep.subr.mxu0 0.0
  %4218 = vmatpush1.msra.mxu0 0.0
  %4219 = vmatprep.subr.mxu0 0.0
  %4220 = vmatpush1.msra.mxu0 0.0
  %4221 = vmatprep.subr.mxu0 0.0
  %4222 = vmatpush1.msra.mxu0 0.0
  %4223 = vmatprep.subr.mxu0 0.0
  %4224 = vmatpush1.msra.mxu0 0.0
  %4225 = vmatprep.subr.mxu0 0.0
  %4226 = vmatpush1.msra.mxu0 0.0
  %4227 = vmatprep.subr.mxu0 0.0
  %4228 = vmatpush1.msra.mxu0 0.0
  %4229 = vmatprep.subr.mxu0 0.0
  %4230 = vmatpush1.msra.mxu0 0.0
  %4231 = vmatprep.subr.mxu0 0.0
  %4232 = vmatpush1.msra.mxu0 0.0
  %4233 = vmatprep.subr.mxu0 0.0
  %4234 = vmatpush1.msra.mxu0 0.0
  %4235 = vmatprep.subr.mxu0 0.0
  %4236 = vmatpush1.msra.mxu0 0.0
  %4237 = vmatprep.subr.mxu0 0.0
  %4238 = vmatpush1.msra.mxu0 0.0
  %4239 = vmatprep.subr.mxu0 0.0
  %4240 = vmatpush1.msra.mxu0 0.0
  %4241 = vmatprep.subr.mxu0 0.0
  %4242 = vmatpush1.msra.mxu0 0.0
  %4243 = vmatprep.subr.mxu0 0.0
  %4244 = vmatpush1.msra.mxu0 0.0
  %4245 = vmatprep.subr.mxu0 0.0
  %4246 = vmatpush1.msra.mxu0 0.0
  %4247 = vmatprep.subr.mxu0 0.0
  %4248 = vmatpush1.msra.mxu0 0.0
  %4249 = vmatprep.mubr.f32.mxu0 0.0
  %4250 = vmatmul.mubr.f32.gmra.mrb[0].mxu0 %v4180
  %v4251 = vpop.f32.mrb[0].mxu0
  %v4252 = vadd.f32 %v4171, %v4251
  %v4253 = vpop.f32.mrb[0].mxu0
  %4254 = vmatprep.mubr.f32.mxu0 0.0
  %4255 = vmatmul.mubr.f32.gmra.mrb[0].mxu0 %v4183
  %v4256 = vpop.f32.mrb[0].mxu0
  %v4257 = vadd.f32 %v4176, %v4256
  %v4258 = vpop.f32.mrb[0].mxu0
  %4259 = vdwg.mxu0
  %vm4260 = vcmp.ge.f32.partialorder %v4252, 0.0
  %vm4261 = vcmp.ge.f32.partialorder %v4257, 0.0
  %v4262 = vmul.f32 %v4252, 0.01
  %v4263 = vmul.f32 %v4257, 0.01
  %v4264 = vsel %vm4260, %v4252, %v4262
  %v4265 = vsel %vm4261, %v4257, %v4263
  %v4266 = vld [vmem:[%s13] sm:$0xff]
  %v4267 = vld [vmem:[%s13 + $0x8] sm:$0xff]
  %v4268 = vld [vmem:[%s13 + $0x10] sm:$0xff]
  %v4269 = vld [vmem:[%s13 + $0x18] sm:$0xff]
  %v4270 = vld [vmem:[%s14] sm:$0xff]
  %v4271 = vld [vmem:[%s14 + $0x8] sm:$0xff]
  %v4272 = vld [vmem:[%s14 + $0x10] sm:$0xff]
  %v4273 = vld [vmem:[%s14 + $0x18] sm:$0xff]
  %4275 = vset.pattern.permute.xlu0 0
  %4276 = vperm.xlu0 %4275, %v4270
  %v4277 = vpop.permute.xlu0 %4276
  %4280 = vset.pattern.permute.xlu0 0
  %4281 = vperm.xlu0 %4280, %v4271
  %v4282 = vpop.permute.xlu0 %4281
  %4285 = vset.pattern.permute.xlu0 0
  %4286 = vperm.xlu0 %4285, %v4272
  %v4287 = vpop.permute.xlu0 %4286
  %4290 = vset.pattern.permute.xlu0 0
  %4291 = vperm.xlu0 %4290, %v4273
  %v4292 = vpop.permute.xlu0 %4291
  %vm4294 = vcmask 130048
  %v4296 = vsel %vm4294, %v4266, 0
  %v4299 = vsel %vm4294, %v4267, 0
  %v4302 = vsel %vm4294, %v4268, 0
  %v4305 = vsel %vm4294, %v4269, 0
  %4307 = vmatprep.subr.mxu0 0.0
  %4308 = vmatpush1.msra.mxu0 %v4264
  %4309 = vmatprep.subr.mxu0 0.0
  %4310 = vmatpush1.msra.mxu0 %v4265
  %4311 = vmatprep.subr.mxu0 0.0
  %4312 = vmatpush1.msra.mxu0 0.0
  %4313 = vmatprep.subr.mxu0 0.0
  %4314 = vmatpush1.msra.mxu0 0.0
  %4315 = vmatprep.subr.mxu0 0.0
  %4316 = vmatpush1.msra.mxu0 0.0
  %4317 = vmatprep.subr.mxu0 0.0
  %4318 = vmatpush1.msra.mxu0 0.0
  %4319 = vmatprep.subr.mxu0 0.0
  %4320 = vmatpush1.msra.mxu0 0.0
  %4321 = vmatprep.subr.mxu0 0.0
  %4322 = vmatpush1.msra.mxu0 0.0
  %4323 = vmatprep.subr.mxu0 0.0
  %4324 = vmatpush1.msra.mxu0 0.0
  %4325 = vmatprep.subr.mxu0 0.0
  %4326 = vmatpush1.msra.mxu0 0.0
  %4327 = vmatprep.subr.mxu0 0.0
  %4328 = vmatpush1.msra.mxu0 0.0
  %4329 = vmatprep.subr.mxu0 0.0
  %4330 = vmatpush1.msra.mxu0 0.0
  %4331 = vmatprep.subr.mxu0 0.0
  %4332 = vmatpush1.msra.mxu0 0.0
  %4333 = vmatprep.subr.mxu0 0.0
  %4334 = vmatpush1.msra.mxu0 0.0
  %4335 = vmatprep.subr.mxu0 0.0
  %4336 = vmatpush1.msra.mxu0 0.0
  %4337 = vmatprep.subr.mxu0 0.0
  %4338 = vmatpush1.msra.mxu0 0.0
  %4339 = vmatprep.subr.mxu0 0.0
  %4340 = vmatpush1.msra.mxu0 0.0
  %4341 = vmatprep.subr.mxu0 0.0
  %4342 = vmatpush1.msra.mxu0 0.0
  %4343 = vmatprep.subr.mxu0 0.0
  %4344 = vmatpush1.msra.mxu0 0.0
  %4345 = vmatprep.subr.mxu0 0.0
  %4346 = vmatpush1.msra.mxu0 0.0
  %4347 = vmatprep.subr.mxu0 0.0
  %4348 = vmatpush1.msra.mxu0 0.0
  %4349 = vmatprep.subr.mxu0 0.0
  %4350 = vmatpush1.msra.mxu0 0.0
  %4351 = vmatprep.subr.mxu0 0.0
  %4352 = vmatpush1.msra.mxu0 0.0
  %4353 = vmatprep.subr.mxu0 0.0
  %4354 = vmatpush1.msra.mxu0 0.0
  %4355 = vmatprep.subr.mxu0 0.0
  %4356 = vmatpush1.msra.mxu0 0.0
  %4357 = vmatprep.subr.mxu0 0.0
  %4358 = vmatpush1.msra.mxu0 0.0
  %4359 = vmatprep.subr.mxu0 0.0
  %4360 = vmatpush1.msra.mxu0 0.0
  %4361 = vmatprep.subr.mxu0 0.0
  %4362 = vmatpush1.msra.mxu0 0.0
  %4363 = vmatprep.subr.mxu0 0.0
  %4364 = vmatpush1.msra.mxu0 0.0
  %4365 = vmatprep.subr.mxu0 0.0
  %4366 = vmatpush1.msra.mxu0 0.0
  %4367 = vmatprep.subr.mxu0 0.0
  %4368 = vmatpush1.msra.mxu0 0.0
  %4369 = vmatprep.subr.mxu0 0.0
  %4370 = vmatpush1.msra.mxu0 0.0
  %4371 = vmatprep.mubr.f32.mxu0 0.0
  %4372 = vmatmul.mubr.f32.gmra.mrb[0].mxu0 %v4296
  %v4373 = vpop.f32.mrb[0].mxu0
  %v4374 = vadd.f32 %v4277, %v4373
  %v4375 = vpop.f32.mrb[0].mxu0
  %4376 = vmatprep.mubr.f32.mxu0 0.0
  %4377 = vmatmul.mubr.f32.gmra.mrb[0].mxu0 %v4299
  %v4378 = vpop.f32.mrb[0].mxu0
  %v4379 = vadd.f32 %v4282, %v4378
  %v4380 = vpop.f32.mrb[0].mxu0
  %4381 = vmatprep.mubr.f32.mxu0 0.0
  %4382 = vmatmul.mubr.f32.gmra.mrb[0].mxu0 %v4302
  %v4383 = vpop.f32.mrb[0].mxu0
  %v4384 = vadd.f32 %v4287, %v4383
  %v4385 = vpop.f32.mrb[0].mxu0
  %4386 = vmatprep.mubr.f32.mxu0 0.0
  %4387 = vmatmul.mubr.f32.gmra.mrb[0].mxu0 %v4305
  %v4388 = vpop.f32.mrb[0].mxu0
  %v4389 = vadd.f32 %v4292, %v4388
  %v4390 = vpop.f32.mrb[0].mxu0
  %4391 = vdwg.mxu0
  %v4392 = vxor.u32 %v4374, 2147483648
  %v4393 = vxor.u32 %v4379, 2147483648
  %v4394 = vxor.u32 %v4384, 2147483648
  %v4395 = vxor.u32 %v4389, 2147483648
  %v4396 = vmul.f32 %v4392, 1.442695
  %v4397 = vpow.pop %v4396
  %v4398 = vmul.f32 %v4393, 1.442695
  %v4399 = vpow.pop %v4398
  %v4400 = vmul.f32 %v4394, 1.442695
  %v4401 = vpow.pop %v4400
  %v4402 = vmul.f32 %v4395, 1.442695
  %v4403 = vpow.pop %v4402
  %v4404 = vadd.f32 %v4397, 1.0
  %v4405 = vadd.f32 %v4399, 1.0
  %v4406 = vadd.f32 %v4401, 1.0
  %v4407 = vadd.f32 %v4403, 1.0
  %v4408 = vrcp.pop %v4404
  %v4409 = vmul.f32 1.0, %v4408
  %v4410 = vrcp.pop %v4405
  %v4411 = vmul.f32 1.0, %v4410
  %v4412 = vrcp.pop %v4406
  %v4413 = vmul.f32 1.0, %v4412
  %v4414 = vrcp.pop %v4407
  %v4415 = vmul.f32 1.0, %v4414
  %4416 = vst [vmem:[%s15] sm:$0xff] %v4409
  %4417 = vst [vmem:[%s15 + $0x8] sm:$0xff] %v4411
  %4418 = vst [vmem:[%s15 + $0x10] sm:$0xff] %v4413
  %4419 = vst [vmem:[%s15 + $0x18] sm:$0xff] %v4415
  // Predicated region
  $region62: #{gnn_hypernetwork_forward.1} parent=0 // pred_check
    _
  $region63: #{gnn_hypernetwork_forward.1} parent=0 // pred_check_branch
    %4421 = sbr.rel (0) target = $region65
  $region64: #{gnn_hypernetwork_forward.1} parent=0 // pred_region
    _
  $region65: #{gnn_hypernetwork_forward.1} parent=0 // pred_fallthru
    _
  // Predicated region
  $region66: #{gnn_hypernetwork_forward.1} parent=0 // pred_check
    _
  $region67: #{gnn_hypernetwork_forward.1} parent=0 // pred_check_branch
    %4423 = sbr.rel (0) target = $region69
  $region68: #{gnn_hypernetwork_forward.1} parent=0 // pred_region
    _
  $region69: #{gnn_hypernetwork_forward.1} parent=0 // pred_fallthru
    _

</llo_original>
